<compile_context>
chip_gen: v7x
topology: tpu7x:2x2x1
jax: 0.10.0
libtpu: 0.0.40
codegen_flags: <defaults>
</compile_context>

<pallas_src>
import math
import functools

import jax
import jax.numpy as jnp
from jax.experimental import pallas as pl
from jax.experimental.pallas import tpu as pltpu


# ----------------------------------------------------------------------------
# Per-generation tile / VMEM selection
# ----------------------------------------------------------------------------
_HW_CFG = None


def _hw():
    """Tile targets + scoped-VMEM limit chosen from the TPU generation."""
    global _HW_CFG
    if _HW_CFG is None:
        vmem_cap = 64 * 1024 * 1024          # conservative default (v7x-like)
        try:
            info = pltpu.get_tpu_info()
            cap = getattr(info, "vmem_capacity_bytes", None)
            if cap:
                vmem_cap = int(cap)
        except Exception:
            pass
        if vmem_cap >= 128 * 1024 * 1024:    # v5e / v6e: 128 MiB VMEM -> big tiles
            _HW_CFG = dict(tm=512, tn=512, tk=1024, tq=512, tkv=512,
                           vmem=64 * 1024 * 1024)
        else:                                # v7x: 64 MiB VMEM, 2 TCs -> smaller tiles
            _HW_CFG = dict(tm=256, tn=256, tk=512, tq=256, tkv=128,
                           vmem=48 * 1024 * 1024)
    return _HW_CFG


def _pick_tile(dim, target, align):
    """Largest divisor of `dim` that is <= target and a multiple of `align`;
    falls back to the full dim (always a legal block shape)."""
    if dim <= target:
        return dim
    for cand in range(target, 0, -1):
        if dim % cand == 0 and cand % align == 0:
            return cand
    return dim


# ----------------------------------------------------------------------------
# Kernel 1: fused LayerNorm -> (stacked) Linear (-> optional exact GELU)
# ----------------------------------------------------------------------------
def _ln_linear_kernel(x_ref, g_ref, bln_ref, w_ref, b_ref, o_ref, xn_ref, *,
                      eps, activation):
    """o[s] = act(LN(x) @ w[s] + b[s]).
    x:(tm,K) f32   g,bln:(1,K)   w:(1,K,tn) bf16   b:(1,1,tn)   o:(1,tm,tn) bf16
    xn scratch:(tm,K) bf16 -- normalized activation, computed once per row tile."""
    s = pl.program_id(1)
    j = pl.program_id(2)

    @pl.when((s == 0) & (j == 0))
    def _():
        x = x_ref[...].astype(jnp.float32)
        mean = jnp.mean(x, axis=-1, keepdims=True)
        var = jnp.mean(jnp.square(x - mean), axis=-1, keepdims=True)
        xn = (x - mean) * jax.lax.rsqrt(var + eps)
        xn_ref[...] = (xn * g_ref[...] + bln_ref[...]).astype(xn_ref.dtype)

    acc = jnp.dot(xn_ref[...], w_ref[0], preferred_element_type=jnp.float32)
    acc = acc + b_ref[0].astype(jnp.float32)
    if activation == "gelu":
        # exact GELU (PyTorch nn.GELU default, approximate='none')
        acc = 0.5 * acc * (1.0 + jax.lax.erf(acc * (1.0 / math.sqrt(2.0))))
    o_ref[0] = acc.astype(o_ref.dtype)


def ln_linear(x, g, bln, w, b, *, eps=1e-6, activation=None):
    """x:(M,K) f32   g,bln:(1,K)   w:(G,K,Nc) bf16   b:(G,1,Nc)  ->  (G,M,Nc) bf16."""
    M, K = x.shape
    G, _, Nc = w.shape
    cfg = _hw()
    tm = _pick_tile(M, cfg["tm"], 8)
    tn = _pick_tile(Nc, cfg["tn"], 128)
    kernel = functools.partial(_ln_linear_kernel, eps=eps, activation=activation)
    cost = pl.CostEstimate(
        flops=2 * M * G * Nc * K + 10 * M * K,
        transcendentals=(M * G * Nc if activation == "gelu" else 0) + M,
        bytes_accessed=(4 * M * K                     # x resident across (s, j)
                        + 2 * K * G * Nc * (M // tm)  # bf16 weights streamed per row tile
                        + 4 * G * Nc                  # bias
                        + 2 * G * M * Nc),            # bf16 output
    )
    return pl.pallas_call(
        kernel,
        out_shape=jax.ShapeDtypeStruct((G, M, Nc), jnp.bfloat16),
        grid=(M // tm, G, Nc // tn),
        in_specs=[
            pl.BlockSpec((tm, K), lambda i, s, j: (i, 0)),
            pl.BlockSpec((1, K), lambda i, s, j: (0, 0)),
            pl.BlockSpec((1, K), lambda i, s, j: (0, 0)),
            pl.BlockSpec((1, K, tn), lambda i, s, j: (s, 0, j)),
            pl.BlockSpec((1, 1, tn), lambda i, s, j: (s, 0, j)),
        ],
        out_specs=pl.BlockSpec((1, tm, tn), lambda i, s, j: (s, i, j)),
        scratch_shapes=[pltpu.VMEM((tm, K), jnp.bfloat16)],
        compiler_params=pltpu.CompilerParams(
            # s/j must be "arbitrary": the xn scratch is initialized at (s==0, j==0)
            # and reused across the whole (s, j) sweep of a row tile.
            dimension_semantics=("parallel", "arbitrary", "arbitrary"),
            vmem_limit_bytes=cfg["vmem"],
        ),
        cost_estimate=cost,
    )(x, g, bln, w, b)


# ----------------------------------------------------------------------------
# Kernel 2: K-tiled Linear, accumulating into the f32 output, bias+residual fused
# ----------------------------------------------------------------------------
def _linear_res_kernel(x_ref, w_ref, b_ref, r_ref, o_ref):
    """o = x @ w + b + residual.  x,w bf16; b,r,o f32; accumulate directly in o (f32)."""
    k = pl.program_id(2)

    @pl.when(k == 0)
    def _():
        o_ref[...] = jnp.zeros_like(o_ref)

    o_ref[...] += jnp.dot(x_ref[...], w_ref[...], preferred_element_type=jnp.float32)

    @pl.when(k == pl.num_programs(2) - 1)
    def _():
        o_ref[...] += b_ref[...].astype(jnp.float32) + r_ref[...].astype(jnp.float32)


def linear_residual(x, w, b, res):
    """x:(M,K) bf16   w:(K,N) bf16   b:(1,N) f32   res:(M,N) f32  ->  (M,N) f32."""
    M, K = x.shape
    N = w.shape[1]
    cfg = _hw()
    tm = _pick_tile(M, cfg["tm"], 8)
    tn = _pick_tile(N, cfg["tn"], 128)
    tk = _pick_tile(K, cfg["tk"], 128)
    cost = pl.CostEstimate(
        flops=2 * M * N * K + 2 * M * N,
        transcendentals=0,
        bytes_accessed=(2 * M * K * (N // tn)      # bf16 x streamed per col tile
                        + 2 * K * N * (M // tm)    # bf16 w streamed per row tile
                        + 4 * M * N + 4 * M * N    # f32 residual in + f32 out
                        + 4 * N),
    )
    return pl.pallas_call(
        _linear_res_kernel,
        out_shape=jax.ShapeDtypeStruct((M, N), jnp.float32),
        grid=(M // tm, N // tn, K // tk),
        in_specs=[
            pl.BlockSpec((tm, tk), lambda i, j, k: (i, k)),
            pl.BlockSpec((tk, tn), lambda i, j, k: (k, j)),
            pl.BlockSpec((1, tn), lambda i, j, k: (0, j)),
            pl.BlockSpec((tm, tn), lambda i, j, k: (i, j)),
        ],
        out_specs=pl.BlockSpec((tm, tn), lambda i, j, k: (i, j)),
        compiler_params=pltpu.CompilerParams(
            dimension_semantics=("parallel", "parallel", "arbitrary"),
            vmem_limit_bytes=cfg["vmem"],
        ),
        cost_estimate=cost,
    )(x, w, b, res)


# ----------------------------------------------------------------------------
# Kernel 3: flash-style multi-head attention over the grouped (3, B, N, W) qkv
# ----------------------------------------------------------------------------
def _flash_attn_kernel(q_ref, k_ref, v_ref, qg_ref, qb_ref, kg_ref, kb_ref, o_ref,
                       qln_ref, m_ref, l_ref, acc_ref, *, heads, head_dim, eps):
    """q_ref:(1,1,tq,W)  k_ref/v_ref:(1,1,tkv,W)  qg/qb/kg/kb:(1,D)  o_ref:(1,tq,W).
    Columns of W are head-major: head h owns [h*D, (h+1)*D)."""
    j = pl.program_id(2)
    H, D = heads, head_dim
    scale = 1.0 / math.sqrt(D)
    dnums = (((1,), (1,)), ((), ()))   # contract last dims -> no kn.T transpose

    def _norm(x, g, b):
        mean = jnp.mean(x, axis=-1, keepdims=True)
        var = jnp.mean(jnp.square(x - mean), axis=-1, keepdims=True)
        return (x - mean) * jax.lax.rsqrt(var + eps) * g + b

    @pl.when(j == 0)
    def _():
        m_ref[...] = jnp.full_like(m_ref, -jnp.inf)
        l_ref[...] = jnp.zeros_like(l_ref)
        acc_ref[...] = jnp.zeros_like(acc_ref)
        for h in range(H):
            qh = q_ref[0, 0, :, h * D:(h + 1) * D].astype(jnp.float32)
            qn = _norm(qh, qg_ref[...], qb_ref[...]) * scale
            qln_ref[h] = qn.astype(qln_ref.dtype)   # bf16, pre-scaled

    # TODO(synk): move heads onto a grid axis when head_dim == 128 to avoid the H-way unroll.
    for h in range(H):
        kh = k_ref[0, 0, :, h * D:(h + 1) * D].astype(jnp.float32)
        vh = v_ref[0, 0, :, h * D:(h + 1) * D]                     # stays bf16
        kn = _norm(kh, kg_ref[...], kb_ref[...]).astype(jnp.bfloat16)
        s = jax.lax.dot_general(qln_ref[h], kn, dnums,
                                preferred_element_type=jnp.float32)   # (tq, tkv)
        m_prev = m_ref[h]
        m_new = jnp.maximum(m_prev, jnp.max(s, axis=-1, keepdims=True))
        alpha = jnp.exp(m_prev - m_new)
        p = jnp.exp(s - m_new)
        # TODO(synk): ones-column trick could fold this lane-reduction into the PV matmul.
        l_ref[h] = alpha * l_ref[h] + jnp.sum(p, axis=-1, keepdims=True)
        acc_ref[h] = alpha * acc_ref[h] + jnp.dot(
            p.astype(jnp.bfloat16), vh, preferred_element_type=jnp.float32)
        m_ref[h] = m_new

    @pl.when(j == pl.num_programs(2) - 1)
    def _():
        outs = []
        for h in range(H):
            inv_l = pl.reciprocal(l_ref[h], approx=True)
            outs.append((acc_ref[h] * inv_l).astype(o_ref.dtype))
        # single lane-dense store of all heads: (tq, W)
        o_ref[0] = jnp.concatenate(outs, axis=-1)


def flash_attention(qkv3, qg, qb, kg, kb, heads):
    """qkv3:(3,B,N,W) bf16 grouped [Q|K|V], head-major columns  ->  (B,N,W) bf16."""
    _, B, N, W = qkv3.shape
    D = W // heads
    cfg = _hw()
    tq = _pick_tile(N, cfg["tq"], 8)
    tkv = _pick_tile(N, cfg["tkv"], 8)
    kernel = functools.partial(_flash_attn_kernel, heads=heads, head_dim=D, eps=1e-6)
    q_spec = pl.BlockSpec((1, 1, tq, W), lambda b, i, j: (0, b, i, 0))
    k_spec = pl.BlockSpec((1, 1, tkv, W), lambda b, i, j: (1, b, j, 0))
    v_spec = pl.BlockSpec((1, 1, tkv, W), lambda b, i, j: (2, b, j, 0))
    par_spec = pl.BlockSpec((1, D), lambda b, i, j: (0, 0))
    cost = pl.CostEstimate(
        flops=4 * B * heads * N * N * D,
        transcendentals=B * heads * N * N,
        bytes_accessed=(2 * B * N * W                        # q, read once
                        + 2 * 2 * B * (N // tq) * N * W      # k + v, re-streamed per q tile
                        + 2 * B * N * W),                    # output
    )
    return pl.pallas_call(
        kernel,
        out_shape=jax.ShapeDtypeStruct((B, N, W), jnp.bfloat16),
        grid=(B, N // tq, N // tkv),
        in_specs=[q_spec, k_spec, v_spec, par_spec, par_spec, par_spec, par_spec],
        out_specs=pl.BlockSpec((1, tq, W), lambda b, i, j: (b, i, 0)),
        scratch_shapes=[
            pltpu.VMEM((heads, tq, D), jnp.bfloat16),   # normalized, pre-scaled q (bf16)
            pltpu.VMEM((heads, tq, 1), jnp.float32),    # running max
            pltpu.VMEM((heads, tq, 1), jnp.float32),    # running sum
            pltpu.VMEM((heads, tq, D), jnp.float32),    # output accumulator
        ],
        compiler_params=pltpu.CompilerParams(
            dimension_semantics=("parallel", "parallel", "arbitrary"),
            vmem_limit_bytes=cfg["vmem"],
        ),
        cost_estimate=cost,
    )(qkv3, qkv3, qkv3, qg, qb, kg, kb)


# ----------------------------------------------------------------------------
# Parameters (PyTorch layout) and kernel-layout preparation
# ----------------------------------------------------------------------------
def init_block_params(key, width, heads, expand_ratio=4):
    d = width // heads
    ks = jax.random.split(key, 4)
    scale = 0.02
    f32 = jnp.float32
    return dict(
        ln1_g=jnp.ones((1, width), f32), ln1_b=jnp.zeros((1, width), f32),
        ln2_g=jnp.ones((1, width), f32), ln2_b=jnp.zeros((1, width), f32),
        # c_qkv: width -> 3*width, bias=False.  PyTorch column layout: per head h
        # the 3*d-wide chunk is [q_h | k_h | v_h].
        w_qkv=scale * jax.random.normal(ks[0], (width, 3 * width), f32),
        # attention q/k LayerNorms (over head_dim, eps=1e-6)
        qn_g=jnp.ones((1, d), f32), qn_b=jnp.zeros((1, d), f32),
        kn_g=jnp.ones((1, d), f32), kn_b=jnp.zeros((1, d), f32),
        # attention out-projection (with bias)
        w_ao=scale * jax.random.normal(ks[1], (width, width), f32),
        b_ao=jnp.zeros((1, width), f32),
        # MLP
        w_fc=scale * jax.random.normal(ks[2], (width, expand_ratio * width), f32),
        b_fc=jnp.zeros((1, expand_ratio * width), f32),
        w_pr=scale * jax.random.normal(ks[3], (expand_ratio * width, width), f32),
        b_pr=jnp.zeros((1, width), f32),
    )


def prepare_params(p, heads):
    """PyTorch-layout params -> kernel layout: qkv weight regrouped to
    [Q_allheads | K_allheads | V_allheads] stacked as (3, W, W); weights cast to bf16."""
    W = p["w_ao"].shape[0]
    D = W // heads
    bf16 = jnp.bfloat16
    w_qkv3 = (p["w_qkv"].reshape(W, heads, 3, D)
              .transpose(2, 0, 1, 3)
              .reshape(3, W, W)
              .astype(bf16))
    return dict(
        ln1_g=p["ln1_g"], ln1_b=p["ln1_b"], ln2_g=p["ln2_g"], ln2_b=p["ln2_b"],
        qn_g=p["qn_g"], qn_b=p["qn_b"], kn_g=p["kn_g"], kn_b=p["kn_b"],
        w_qkv3=w_qkv3, b_qkv3=jnp.zeros((3, 1, W), jnp.float32),   # c_qkv has no bias
        w_ao=p["w_ao"].astype(bf16), b_ao=p["b_ao"],
        w_fc1=p["w_fc"].astype(bf16)[None], b_fc1=p["b_fc"][None],
        w_pr=p["w_pr"].astype(bf16), b_pr=p["b_pr"],
    )


# ----------------------------------------------------------------------------
# Model glue (reshapes between calls are metadata-only, no HBM copies)
# ----------------------------------------------------------------------------
def residual_attention_block(x, kp, heads):
    B, N, W = x.shape
    x2 = x.reshape(B * N, W)

    # attention branch: ln_1 fused into c_qkv (stacked Q|K|V output), flash attention,
    # residual add fused into the out-projection epilogue.
    qkv = ln_linear(x2, kp["ln1_g"], kp["ln1_b"], kp["w_qkv3"], kp["b_qkv3"])   # (3,M,W) bf16
    attn = flash_attention(qkv.reshape(3, B, N, W),
                           kp["qn_g"], kp["qn_b"], kp["kn_g"], kp["kn_b"], heads)
    x2 = linear_residual(attn.reshape(B * N, W), kp["w_ao"], kp["b_ao"], x2)

    # MLP branch: ln_2 + c_fc + GELU fused; residual add fused into c_proj.
    h = ln_linear(x2, kp["ln2_g"], kp["ln2_b"], kp["w_fc1"], kp["b_fc1"],
                  activation="gelu")                                            # (1,M,4W) bf16
    x2 = linear_residual(h.reshape(B * N, h.shape[-1]), kp["w_pr"], kp["b_pr"], x2)

    return x2.reshape(B, N, W)


def transformer(x, kernel_params, heads):
    for kp in kernel_params:
        x = residual_attention_block(x, kp, heads)
    return x


# ----------------------------------------------------------------------------
# Pure-JAX f32 reference (PyTorch semantics, PyTorch weight layout)
# ----------------------------------------------------------------------------
def _reference_forward(x, params, heads):
    hi = jax.lax.Precision.HIGHEST

    def ln(v, g, b, eps=1e-6):
        m = jnp.mean(v, -1, keepdims=True)
        var = jnp.mean(jnp.square(v - m), -1, keepdims=True)
        return (v - m) * jax.lax.rsqrt(var + eps) * g + b

    B, N, W = x.shape
    D = W // heads
    for p in params:
        h = ln(x, p["ln1_g"][0], p["ln1_b"][0])
        qkv = jnp.matmul(h, p["w_qkv"], precision=hi).reshape(B, N, heads, 3 * D)
        q, k, v = qkv[..., :D], qkv[..., D:2 * D], qkv[..., 2 * D:]
        q = ln(q, p["qn_g"][0], p["qn_b"][0])
        k = ln(k, p["kn_g"][0], p["kn_b"][0])
        s = jnp.einsum("bnhd,bmhd->bhnm", q, k, precision=hi) / math.sqrt(D)
        a = jax.nn.softmax(s, axis=-1)
        o = jnp.einsum("bhnm,bmhd->bnhd", a, v, precision=hi).reshape(B, N, W)
        x = x + jnp.matmul(o, p["w_ao"], precision=hi) + p["b_ao"][0]
        h = ln(x, p["ln2_g"][0], p["ln2_b"][0])
        h = jnp.matmul(h, p["w_fc"], precision=hi) + p["b_fc"][0]
        h = 0.5 * h * (1.0 + jax.lax.erf(h / math.sqrt(2.0)))
        x = x + jnp.matmul(h, p["w_pr"], precision=hi) + p["b_pr"][0]
    return x


# ----------------------------------------------------------------------------
if __name__ == "__main__":
    # Small shapes consistent with the module: n_ctx=8, width=32, heads=4, layers=2.
    B, N_CTX, WIDTH, HEADS, LAYERS = 2, 8, 32, 4, 2

    key = jax.random.PRNGKey(0)
    kx, *kls = jax.random.split(key, LAYERS + 1)
    params = [init_block_params(kls[i], WIDTH, HEADS) for i in range(LAYERS)]
    kernel_params = [prepare_params(p, HEADS) for p in params]
    x = jax.random.normal(kx, (B, N_CTX, WIDTH), jnp.float32)

    fwd = jax.jit(functools.partial(transformer, heads=HEADS))
    out = jax.block_until_ready(fwd(x, kernel_params))

    assert out.shape == (B, N_CTX, WIDTH), out.shape
    assert bool(jnp.isfinite(out).all())

    # bf16 matmul operands (per perf review) put parity with the f32 reference at the
    # ~1e-3 level; check against a correspondingly relaxed tolerance.
    ref = _reference_forward(x, params, HEADS)
    assert jnp.allclose(out, ref, atol=1e-2, rtol=1e-2), float(jnp.max(jnp.abs(out - ref)))

    print("KERNEL_OK")
</pallas_src>

<mosaic_0001>
module attributes {stable_mosaic.version = 11 : i64} {
  func.func @_linear_res_kernel(%arg0: i32, %arg1: i32, %arg2: i32, %arg3: memref<16x32xbf16, #tpu.memory_space<vmem>>, %arg4: memref<32x32xbf16, #tpu.memory_space<vmem>>, %arg5: memref<1x32xf32, #tpu.memory_space<vmem>>, %arg6: memref<16x32xf32, #tpu.memory_space<vmem>>, %arg7: memref<16x32xf32, #tpu.memory_space<vmem>>) attributes {dimension_semantics = [#tpu.dimension_semantics<parallel>, #tpu.dimension_semantics<parallel>, #tpu.dimension_semantics<arbitrary>], iteration_bounds = array<i64: 1, 1, 1>, scalar_prefetch = 0 : i64, scratch_operands = 0 : i64, tpu.core_type = #tpu.core_type<tc>, window_params = [{transform_indices = @transform_0, window_bounds = array<i64: 16, 32>}, {transform_indices = @transform_1, window_bounds = array<i64: 32, 32>}, {transform_indices = @transform_2, window_bounds = array<i64: 1, 32>}, {transform_indices = @transform_3, window_bounds = array<i64: 16, 32>}, {transform_indices = @transform_4, window_bounds = array<i64: 16, 32>}]} {
    %c0_i32 = arith.constant 0 : i32
    %0 = arith.cmpi eq, %arg2, %c0_i32 : i32
    %1 = arith.extui %0 : i1 to i32
    %c0_i32_0 = arith.constant 0 : i32
    %2 = arith.cmpi ne, %1, %c0_i32_0 : i32
    scf.if %2 {
      %cst_10 = arith.constant 0.000000e+00 : f32
      %12 = vector.broadcast %cst_10 : f32 to vector<16x32xf32>
      %c0_11 = arith.constant 0 : index
      %c0_12 = arith.constant 0 : index
      %13 = vector.load %arg7[%c0_11, %c0_12] : memref<16x32xf32, #tpu.memory_space<vmem>>, vector<16x32xf32>
      tpu.vector_store %arg7[%c0_11, %c0_12], %12 {strides = array<i32>} : memref<16x32xf32, #tpu.memory_space<vmem>>, vector<16x32xf32>,
    } else {
    }
    %c0 = arith.constant 0 : index
    %c0_1 = arith.constant 0 : index
    %3 = vector.load %arg7[%c0, %c0_1] : memref<16x32xf32, #tpu.memory_space<vmem>>, vector<16x32xf32>
    %c0_2 = arith.constant 0 : index
    %c0_3 = arith.constant 0 : index
    %4 = vector.load %arg3[%c0_2, %c0_3] : memref<16x32xbf16, #tpu.memory_space<vmem>>, vector<16x32xbf16>
    %c0_4 = arith.constant 0 : index
    %c0_5 = arith.constant 0 : index
    %5 = vector.load %arg4[%c0_4, %c0_5] : memref<32x32xbf16, #tpu.memory_space<vmem>>, vector<32x32xbf16>
    %cst = arith.constant dense<0.000000e+00> : vector<16x32xf32>
    %6 = tpu.matmul %4, %5, %cst {dimension_numbers = #tpu.dot_dimension_numbers<[1], [0], [0], [1], [0, 0, 1, 1], [], []>} : vector<16x32xbf16>, vector<32x32xbf16>, vector<16x32xf32> -> vector<16x32xf32>
    %7 = arith.addf %3, %6 : vector<16x32xf32>
    %c0_6 = arith.constant 0 : index
    %c0_7 = arith.constant 0 : index
    %8 = vector.load %arg7[%c0_6, %c0_7] : memref<16x32xf32, #tpu.memory_space<vmem>>, vector<16x32xf32>
    tpu.vector_store %arg7[%c0_6, %c0_7], %7 {strides = array<i32>} : memref<16x32xf32, #tpu.memory_space<vmem>>, vector<16x32xf32>,
    %c0_i32_8 = arith.constant 0 : i32
    %9 = arith.cmpi eq, %arg2, %c0_i32_8 : i32
    %10 = arith.extui %9 : i1 to i32
    %c0_i32_9 = arith.constant 0 : i32
    %11 = arith.cmpi ne, %10, %c0_i32_9 : i32
    scf.if %11 {
      %c0_10 = arith.constant 0 : index
      %c0_11 = arith.constant 0 : index
      %12 = vector.load %arg7[%c0_10, %c0_11] : memref<16x32xf32, #tpu.memory_space<vmem>>, vector<16x32xf32>
      %c0_12 = arith.constant 0 : index
      %c0_13 = arith.constant 0 : index
      %13 = vector.load %arg5[%c0_12, %c0_13] : memref<1x32xf32, #tpu.memory_space<vmem>>, vector<1x32xf32>
      %c0_14 = arith.constant 0 : index
      %c0_15 = arith.constant 0 : index
      %14 = vector.load %arg6[%c0_14, %c0_15] : memref<16x32xf32, #tpu.memory_space<vmem>>, vector<16x32xf32>
      %15 = vector.broadcast %13 : vector<1x32xf32> to vector<16x32xf32>
      %16 = arith.addf %15, %14 : vector<16x32xf32>
      %17 = arith.addf %12, %16 : vector<16x32xf32>
      %c0_16 = arith.constant 0 : index
      %c0_17 = arith.constant 0 : index
      %18 = vector.load %arg7[%c0_16, %c0_17] : memref<16x32xf32, #tpu.memory_space<vmem>>, vector<16x32xf32>
      tpu.vector_store %arg7[%c0_16, %c0_17], %17 {strides = array<i32>} : memref<16x32xf32, #tpu.memory_space<vmem>>, vector<16x32xf32>,
    } else {
    }
    return
  }
  func.func @transform_0(%arg0: i32, %arg1: i32, %arg2: i32) -> (i32, i32) {
    %c0_i32 = arith.constant 0 : i32
    return %arg0, %arg2 : i32, i32
  }
  func.func @transform_1(%arg0: i32, %arg1: i32, %arg2: i32) -> (i32, i32) {
    %c0_i32 = arith.constant 0 : i32
    return %arg2, %arg1 : i32, i32
  }
  func.func @transform_2(%arg0: i32, %arg1: i32, %arg2: i32) -> (i32, i32) {
    %c0_i32 = arith.constant 0 : i32
    %c0_i32_0 = arith.constant 0 : i32
    return %c0_i32, %arg1 : i32, i32
  }
  func.func @transform_3(%arg0: i32, %arg1: i32, %arg2: i32) -> (i32, i32) {
    %c0_i32 = arith.constant 0 : i32
    return %arg0, %arg1 : i32, i32
  }
  func.func @transform_4(%arg0: i32, %arg1: i32, %arg2: i32) -> (i32, i32) {
    %c0_i32 = arith.constant 0 : i32
    return %arg0, %arg1 : i32, i32
  }
}

module attributes {stable_mosaic.version = 11 : i64} {
  func.func @_ln_linear_kernel(%arg0: i32, %arg1: i32, %arg2: i32, %arg3: memref<16x32xf32, #tpu.memory_space<vmem>>, %arg4: memref<1x32xf32, #tpu.memory_space<vmem>>, %arg5: memref<1x32xf32, #tpu.memory_space<vmem>>, %arg6: memref<1x32x128xbf16, #tpu.memory_space<vmem>>, %arg7: memref<1x1x128xf32, #tpu.memory_space<vmem>>, %arg8: memref<1x16x128xbf16, #tpu.memory_space<vmem>>, %arg9: memref<16x32xbf16, #tpu.memory_space<vmem>>) attributes {dimension_semantics = [#tpu.dimension_semantics<parallel>, #tpu.dimension_semantics<arbitrary>, #tpu.dimension_semantics<arbitrary>], iteration_bounds = array<i64: 1, 1, 1>, scalar_prefetch = 0 : i64, scratch_operands = 1 : i64, tpu.core_type = #tpu.core_type<tc>, window_params = [{transform_indices = @transform_0, window_bounds = array<i64: 16, 32>}, {pipeline_mode = #tpu.pipeline_mode<synchronous>, transform_indices = @transform_1, window_bounds = array<i64: 1, 32>}, {pipeline_mode = #tpu.pipeline_mode<synchronous>, transform_indices = @transform_2, window_bounds = array<i64: 1, 32>}, {transform_indices = @transform_3, window_bounds = array<i64: 1, 32, 128>}, {transform_indices = @transform_4, window_bounds = array<i64: 1, 1, 128>}, {transform_indices = @transform_5, window_bounds = array<i64: 1, 16, 128>}]} {
    %c0_i32 = arith.constant 0 : i32
    %0 = arith.cmpi eq, %arg1, %c0_i32 : i32
    %c0_i32_0 = arith.constant 0 : i32
    %1 = arith.cmpi eq, %arg2, %c0_i32_0 : i32
    %2 = arith.andi %0, %1 : i1
    %3 = arith.extui %2 : i1 to i32
    %c0_i32_1 = arith.constant 0 : i32
    %4 = arith.cmpi ne, %3, %c0_i32_1 : i32
    scf.if %4 {
      %c0_15 = arith.constant 0 : index
      %c0_16 = arith.constant 0 : index
      %25 = vector.load %arg3[%c0_15, %c0_16] : memref<16x32xf32, #tpu.memory_space<vmem>>, vector<16x32xf32>
      %cst_17 = arith.constant dense<0.000000e+00> : vector<16xf32>
      %26 = vector.multi_reduction <add>, %25, %cst_17 [1] : vector<16x32xf32> to vector<16xf32>
      %27 = vector.shape_cast %26 : vector<16xf32> to vector<16x1xf32>
      %cst_18 = arith.constant 3.200000e+01 : f32
      %28 = vector.broadcast %cst_18 : f32 to vector<16x1xf32>
      %29 = arith.divf %27, %28 : vector<16x1xf32>
      %30 = vector.broadcast %29 : vector<16x1xf32> to vector<16x32xf32>
      %31 = arith.subf %25, %30 : vector<16x32xf32>
      %32 = arith.mulf %31, %31 : vector<16x32xf32>
      %cst_19 = arith.constant dense<0.000000e+00> : vector<16xf32>
      %33 = vector.multi_reduction <add>, %32, %cst_19 [1] : vector<16x32xf32> to vector<16xf32>
      %34 = vector.shape_cast %33 : vector<16xf32> to vector<16x1xf32>
      %cst_20 = arith.constant 3.200000e+01 : f32
      %35 = vector.broadcast %cst_20 : f32 to vector<16x1xf32>
      %36 = arith.divf %34, %35 : vector<16x1xf32>
      %37 = vector.broadcast %29 : vector<16x1xf32> to vector<16x32xf32>
      %38 = arith.subf %25, %37 : vector<16x32xf32>
      %cst_21 = arith.constant 9.99999997E-7 : f32
      %39 = vector.broadcast %cst_21 : f32 to vector<16x1xf32>
      %40 = arith.addf %36, %39 : vector<16x1xf32>
      %41 = math.rsqrt %40 : vector<16x1xf32>
      %42 = vector.broadcast %41 : vector<16x1xf32> to vector<16x32xf32>
      %43 = arith.mulf %38, %42 : vector<16x32xf32>
      %c0_22 = arith.constant 0 : index
      %c0_23 = arith.constant 0 : index
      %44 = vector.load %arg4[%c0_22, %c0_23] : memref<1x32xf32, #tpu.memory_space<vmem>>, vector<1x32xf32>
      %45 = vector.broadcast %44 : vector<1x32xf32> to vector<16x32xf32>
      %46 = arith.mulf %43, %45 : vector<16x32xf32>
      %c0_24 = arith.constant 0 : index
      %c0_25 = arith.constant 0 : index
      %47 = vector.load %arg5[%c0_24, %c0_25] : memref<1x32xf32, #tpu.memory_space<vmem>>, vector<1x32xf32>
      %48 = vector.broadcast %47 : vector<1x32xf32> to vector<16x32xf32>
      %49 = arith.addf %46, %48 : vector<16x32xf32>
      %50 = arith.truncf %49 : vector<16x32xf32> to vector<16x32xbf16>
      %c0_26 = arith.constant 0 : index
      %c0_27 = arith.constant 0 : index
      %51 = vector.load %arg9[%c0_26, %c0_27] : memref<16x32xbf16, #tpu.memory_space<vmem>>, vector<16x32xbf16>
      tpu.vector_store %arg9[%c0_26, %c0_27], %50 {strides = array<i32>} : memref<16x32xbf16, #tpu.memory_space<vmem>>, vector<16x32xbf16>,
    } else {
    }
    %c0 = arith.constant 0 : index
    %c0_2 = arith.constant 0 : index
    %5 = vector.load %arg9[%c0, %c0_2] : memref<16x32xbf16, #tpu.memory_space<vmem>>, vector<16x32xbf16>
    %c0_3 = arith.constant 0 : index
    %c0_4 = arith.constant 0 : index
    %c0_5 = arith.constant 0 : index
    %6 = vector.load %arg6[%c0_3, %c0_4, %c0_5] : memref<1x32x128xbf16, #tpu.memory_space<vmem>>, vector<1x32x128xbf16>
    %7 = vector.shape_cast %6 : vector<1x32x128xbf16> to vector<32x128xbf16>
    %cst = arith.constant dense<0.000000e+00> : vector<16x128xf32>
    %8 = tpu.matmul %5, %7, %cst {dimension_numbers = #tpu.dot_dimension_numbers<[1], [0], [0], [1], [0, 0, 1, 1], [], []>} : vector<16x32xbf16>, vector<32x128xbf16>, vector<16x128xf32> -> vector<16x128xf32>
    %c0_6 = arith.constant 0 : index
    %c0_7 = arith.constant 0 : index
    %c0_8 = arith.constant 0 : index
    %9 = vector.load %arg7[%c0_6, %c0_7, %c0_8] : memref<1x1x128xf32, #tpu.memory_space<vmem>>, vector<1x1x128xf32>
    %10 = vector.shape_cast %9 : vector<1x1x128xf32> to vector<1x128xf32>
    %11 = vector.broadcast %10 : vector<1x128xf32> to vector<16x128xf32>
    %12 = arith.addf %8, %11 : vector<16x128xf32>
    %cst_9 = arith.constant 5.000000e-01 : f32
    %13 = vector.broadcast %cst_9 : f32 to vector<16x128xf32>
    %14 = arith.mulf %13, %12 : vector<16x128xf32>
    %cst_10 = arith.constant 0.707106769 : f32
    %15 = vector.broadcast %cst_10 : f32 to vector<16x128xf32>
    %16 = arith.mulf %12, %15 : vector<16x128xf32>
    %17 = math.erf %16 : vector<16x128xf32>
    %cst_11 = arith.constant 1.000000e+00 : f32
    %18 = vector.broadcast %cst_11 : f32 to vector<16x128xf32>
    %19 = arith.addf %18, %17 : vector<16x128xf32>
    %20 = arith.mulf %14, %19 : vector<16x128xf32>
    %21 = arith.truncf %20 : vector<16x128xf32> to vector<16x128xbf16>
    %c0_12 = arith.constant 0 : index
    %c0_13 = arith.constant 0 : index
    %c0_14 = arith.constant 0 : index
    %22 = vector.load %arg8[%c0_12, %c0_13, %c0_14] : memref<1x16x128xbf16, #tpu.memory_space<vmem>>, vector<1x16x128xbf16>
    %23 = vector.shape_cast %22 : vector<1x16x128xbf16> to vector<16x128xbf16>
    %24 = vector.shape_cast %21 : vector<16x128xbf16> to vector<1x16x128xbf16>
    tpu.vector_store %arg8[%c0_12, %c0_13, %c0_14], %24 {strides = array<i32>} : memref<1x16x128xbf16, #tpu.memory_space<vmem>>, vector<1x16x128xbf16>,
    return
  }
  func.func @transform_0(%arg0: i32, %arg1: i32, %arg2: i32) -> (i32, i32) {
    %c0_i32 = arith.constant 0 : i32
    %c0_i32_0 = arith.constant 0 : i32
    return %arg0, %c0_i32 : i32, i32
  }
  func.func @transform_1(%arg0: i32, %arg1: i32, %arg2: i32) -> (i32, i32) {
    %c0_i32 = arith.constant 0 : i32
    %c0_i32_0 = arith.constant 0 : i32
    %c0_i32_1 = arith.constant 0 : i32
    return %c0_i32, %c0_i32_0 : i32, i32
  }
  func.func @transform_2(%arg0: i32, %arg1: i32, %arg2: i32) -> (i32, i32) {
    %c0_i32 = arith.constant 0 : i32
    %c0_i32_0 = arith.constant 0 : i32
    %c0_i32_1 = arith.constant 0 : i32
    return %c0_i32, %c0_i32_0 : i32, i32
  }
  func.func @transform_3(%arg0: i32, %arg1: i32, %arg2: i32) -> (i32, i32, i32) {
    %c0_i32 = arith.constant 0 : i32
    %c0_i32_0 = arith.constant 0 : i32
    return %arg1, %c0_i32, %arg2 : i32, i32, i32
  }
  func.func @transform_4(%arg0: i32, %arg1: i32, %arg2: i32) -> (i32, i32, i32) {
    %c0_i32 = arith.constant 0 : i32
    %c0_i32_0 = arith.constant 0 : i32
    return %arg1, %c0_i32, %arg2 : i32, i32, i32
  }
  func.func @transform_5(%arg0: i32, %arg1: i32, %arg2: i32) -> (i32, i32, i32) {
    %c0_i32 = arith.constant 0 : i32
    return %arg1, %arg0, %arg2 : i32, i32, i32
  }
}

module attributes {stable_mosaic.version = 11 : i64} {
  func.func @_ln_linear_kernel(%arg0: i32, %arg1: i32, %arg2: i32, %arg3: memref<16x32xf32, #tpu.memory_space<vmem>>, %arg4: memref<1x32xf32, #tpu.memory_space<vmem>>, %arg5: memref<1x32xf32, #tpu.memory_space<vmem>>, %arg6: memref<1x32x32xbf16, #tpu.memory_space<vmem>>, %arg7: memref<1x1x32xf32, #tpu.memory_space<vmem>>, %arg8: memref<1x16x32xbf16, #tpu.memory_space<vmem>>, %arg9: memref<16x32xbf16, #tpu.memory_space<vmem>>) attributes {dimension_semantics = [#tpu.dimension_semantics<parallel>, #tpu.dimension_semantics<arbitrary>, #tpu.dimension_semantics<arbitrary>], iteration_bounds = array<i64: 1, 3, 1>, scalar_prefetch = 0 : i64, scratch_operands = 1 : i64, tpu.core_type = #tpu.core_type<tc>, window_params = [{transform_indices = @transform_0, window_bounds = array<i64: 16, 32>}, {pipeline_mode = #tpu.pipeline_mode<synchronous>, transform_indices = @transform_1, window_bounds = array<i64: 1, 32>}, {pipeline_mode = #tpu.pipeline_mode<synchronous>, transform_indices = @transform_2, window_bounds = array<i64: 1, 32>}, {transform_indices = @transform_3, window_bounds = array<i64: 1, 32, 32>}, {transform_indices = @transform_4, window_bounds = array<i64: 1, 1, 32>}, {transform_indices = @transform_5, window_bounds = array<i64: 1, 16, 32>}]} {
    %c0_i32 = arith.constant 0 : i32
    %0 = arith.cmpi eq, %arg1, %c0_i32 : i32
    %c0_i32_0 = arith.constant 0 : i32
    %1 = arith.cmpi eq, %arg2, %c0_i32_0 : i32
    %2 = arith.andi %0, %1 : i1
    %3 = arith.extui %2 : i1 to i32
    %c0_i32_1 = arith.constant 0 : i32
    %4 = arith.cmpi ne, %3, %c0_i32_1 : i32
    scf.if %4 {
      %c0_12 = arith.constant 0 : index
      %c0_13 = arith.constant 0 : index
      %17 = vector.load %arg3[%c0_12, %c0_13] : memref<16x32xf32, #tpu.memory_space<vmem>>, vector<16x32xf32>
      %cst_14 = arith.constant dense<0.000000e+00> : vector<16xf32>
      %18 = vector.multi_reduction <add>, %17, %cst_14 [1] : vector<16x32xf32> to vector<16xf32>
      %19 = vector.shape_cast %18 : vector<16xf32> to vector<16x1xf32>
      %cst_15 = arith.constant 3.200000e+01 : f32
      %20 = vector.broadcast %cst_15 : f32 to vector<16x1xf32>
      %21 = arith.divf %19, %20 : vector<16x1xf32>
      %22 = vector.broadcast %21 : vector<16x1xf32> to vector<16x32xf32>
      %23 = arith.subf %17, %22 : vector<16x32xf32>
      %24 = arith.mulf %23, %23 : vector<16x32xf32>
      %cst_16 = arith.constant dense<0.000000e+00> : vector<16xf32>
      %25 = vector.multi_reduction <add>, %24, %cst_16 [1] : vector<16x32xf32> to vector<16xf32>
      %26 = vector.shape_cast %25 : vector<16xf32> to vector<16x1xf32>
      %cst_17 = arith.constant 3.200000e+01 : f32
      %27 = vector.broadcast %cst_17 : f32 to vector<16x1xf32>
      %28 = arith.divf %26, %27 : vector<16x1xf32>
      %29 = vector.broadcast %21 : vector<16x1xf32> to vector<16x32xf32>
      %30 = arith.subf %17, %29 : vector<16x32xf32>
      %cst_18 = arith.constant 9.99999997E-7 : f32
      %31 = vector.broadcast %cst_18 : f32 to vector<16x1xf32>
      %32 = arith.addf %28, %31 : vector<16x1xf32>
      %33 = math.rsqrt %32 : vector<16x1xf32>
      %34 = vector.broadcast %33 : vector<16x1xf32> to vector<16x32xf32>
      %35 = arith.mulf %30, %34 : vector<16x32xf32>
      %c0_19 = arith.constant 0 : index
      %c0_20 = arith.constant 0 : index
      %36 = vector.load %arg4[%c0_19, %c0_20] : memref<1x32xf32, #tpu.memory_space<vmem>>, vector<1x32xf32>
      %37 = vector.broadcast %36 : vector<1x32xf32> to vector<16x32xf32>
      %38 = arith.mulf %35, %37 : vector<16x32xf32>
      %c0_21 = arith.constant 0 : index
      %c0_22 = arith.constant 0 : index
      %39 = vector.load %arg5[%c0_21, %c0_22] : memref<1x32xf32, #tpu.memory_space<vmem>>, vector<1x32xf32>
      %40 = vector.broadcast %39 : vector<1x32xf32> to vector<16x32xf32>
      %41 = arith.addf %38, %40 : vector<16x32xf32>
      %42 = arith.truncf %41 : vector<16x32xf32> to vector<16x32xbf16>
      %c0_23 = arith.constant 0 : index
      %c0_24 = arith.constant 0 : index
      %43 = vector.load %arg9[%c0_23, %c0_24] : memref<16x32xbf16, #tpu.memory_space<vmem>>, vector<16x32xbf16>
      tpu.vector_store %arg9[%c0_23, %c0_24], %42 {strides = array<i32>} : memref<16x32xbf16, #tpu.memory_space<vmem>>, vector<16x32xbf16>,
    } else {
    }
    %c0 = arith.constant 0 : index
    %c0_2 = arith.constant 0 : index
    %5 = vector.load %arg9[%c0, %c0_2] : memref<16x32xbf16, #tpu.memory_space<vmem>>, vector<16x32xbf16>
    %c0_3 = arith.constant 0 : index
    %c0_4 = arith.constant 0 : index
    %c0_5 = arith.constant 0 : index
    %6 = vector.load %arg6[%c0_3, %c0_4, %c0_5] : memref<1x32x32xbf16, #tpu.memory_space<vmem>>, vector<1x32x32xbf16>
    %7 = vector.shape_cast %6 : vector<1x32x32xbf16> to vector<32x32xbf16>
    %cst = arith.constant dense<0.000000e+00> : vector<16x32xf32>
    %8 = tpu.matmul %5, %7, %cst {dimension_numbers = #tpu.dot_dimension_numbers<[1], [0], [0], [1], [0, 0, 1, 1], [], []>} : vector<16x32xbf16>, vector<32x32xbf16>, vector<16x32xf32> -> vector<16x32xf32>
    %c0_6 = arith.constant 0 : index
    %c0_7 = arith.constant 0 : index
    %c0_8 = arith.constant 0 : index
    %9 = vector.load %arg7[%c0_6, %c0_7, %c0_8] : memref<1x1x32xf32, #tpu.memory_space<vmem>>, vector<1x1x32xf32>
    %10 = vector.shape_cast %9 : vector<1x1x32xf32> to vector<1x32xf32>
    %11 = vector.broadcast %10 : vector<1x32xf32> to vector<16x32xf32>
    %12 = arith.addf %8, %11 : vector<16x32xf32>
    %13 = arith.truncf %12 : vector<16x32xf32> to vector<16x32xbf16>
    %c0_9 = arith.constant 0 : index
    %c0_10 = arith.constant 0 : index
    %c0_11 = arith.constant 0 : index
    %14 = vector.load %arg8[%c0_9, %c0_10, %c0_11] : memref<1x16x32xbf16, #tpu.memory_space<vmem>>, vector<1x16x32xbf16>
    %15 = vector.shape_cast %14 : vector<1x16x32xbf16> to vector<16x32xbf16>
    %16 = vector.shape_cast %13 : vector<16x32xbf16> to vector<1x16x32xbf16>
    tpu.vector_store %arg8[%c0_9, %c0_10, %c0_11], %16 {strides = array<i32>} : memref<1x16x32xbf16, #tpu.memory_space<vmem>>, vector<1x16x32xbf16>,
    return
  }
  func.func @transform_0(%arg0: i32, %arg1: i32, %arg2: i32) -> (i32, i32) {
    %c0_i32 = arith.constant 0 : i32
    %c0_i32_0 = arith.constant 0 : i32
    return %arg0, %c0_i32 : i32, i32
  }
  func.func @transform_1(%arg0: i32, %arg1: i32, %arg2: i32) -> (i32, i32) {
    %c0_i32 = arith.constant 0 : i32
    %c0_i32_0 = arith.constant 0 : i32
    %c0_i32_1 = arith.constant 0 : i32
    return %c0_i32, %c0_i32_0 : i32, i32
  }
  func.func @transform_2(%arg0: i32, %arg1: i32, %arg2: i32) -> (i32, i32) {
    %c0_i32 = arith.constant 0 : i32
    %c0_i32_0 = arith.constant 0 : i32
    %c0_i32_1 = arith.constant 0 : i32
    return %c0_i32, %c0_i32_0 : i32, i32
  }
  func.func @transform_3(%arg0: i32, %arg1: i32, %arg2: i32) -> (i32, i32, i32) {
    %c0_i32 = arith.constant 0 : i32
    %c0_i32_0 = arith.constant 0 : i32
    return %arg1, %c0_i32, %arg2 : i32, i32, i32
  }
  func.func @transform_4(%arg0: i32, %arg1: i32, %arg2: i32) -> (i32, i32, i32) {
    %c0_i32 = arith.constant 0 : i32
    %c0_i32_0 = arith.constant 0 : i32
    return %arg1, %c0_i32, %arg2 : i32, i32, i32
  }
  func.func @transform_5(%arg0: i32, %arg1: i32, %arg2: i32) -> (i32, i32, i32) {
    %c0_i32 = arith.constant 0 : i32
    return %arg1, %arg0, %arg2 : i32, i32, i32
  }
}

module attributes {stable_mosaic.version = 11 : i64} {
  func.func @_flash_attn_kernel(%arg0: i32, %arg1: i32, %arg2: i32, %arg3: memref<1x1x8x32xbf16, #tpu.memory_space<vmem>>, %arg4: memref<1x1x8x32xbf16, #tpu.memory_space<vmem>>, %arg5: memref<1x1x8x32xbf16, #tpu.memory_space<vmem>>, %arg6: memref<1x8xf32, #tpu.memory_space<vmem>>, %arg7: memref<1x8xf32, #tpu.memory_space<vmem>>, %arg8: memref<1x8xf32, #tpu.memory_space<vmem>>, %arg9: memref<1x8xf32, #tpu.memory_space<vmem>>, %arg10: memref<1x8x32xbf16, #tpu.memory_space<vmem>>, %arg11: memref<4x8x8xbf16, #tpu.memory_space<vmem>>, %arg12: memref<4x8x1xf32, #tpu.memory_space<vmem>>, %arg13: memref<4x8x1xf32, #tpu.memory_space<vmem>>, %arg14: memref<4x8x8xf32, #tpu.memory_space<vmem>>) attributes {dimension_semantics = [#tpu.dimension_semantics<parallel>, #tpu.dimension_semantics<parallel>, #tpu.dimension_semantics<arbitrary>], iteration_bounds = array<i64: 2, 1, 1>, scalar_prefetch = 0 : i64, scratch_operands = 4 : i64, tpu.core_type = #tpu.core_type<tc>, window_params = [{transform_indices = @transform_0, window_bounds = array<i64: 1, 1, 8, 32>}, {transform_indices = @transform_1, window_bounds = array<i64: 1, 1, 8, 32>}, {transform_indices = @transform_2, window_bounds = array<i64: 1, 1, 8, 32>}, {pipeline_mode = #tpu.pipeline_mode<synchronous>, transform_indices = @transform_3, window_bounds = array<i64: 1, 8>}, {pipeline_mode = #tpu.pipeline_mode<synchronous>, transform_indices = @transform_4, window_bounds = array<i64: 1, 8>}, {pipeline_mode = #tpu.pipeline_mode<synchronous>, transform_indices = @transform_5, window_bounds = array<i64: 1, 8>}, {pipeline_mode = #tpu.pipeline_mode<synchronous>, transform_indices = @transform_6, window_bounds = array<i64: 1, 8>}, {transform_indices = @transform_7, window_bounds = array<i64: 1, 8, 32>}]} {
    %c0_i32 = arith.constant 0 : i32
    %0 = arith.cmpi eq, %arg2, %c0_i32 : i32
    %1 = arith.extui %0 : i1 to i32
    %c0_i32_0 = arith.constant 0 : i32
    %2 = arith.cmpi ne, %1, %c0_i32_0 : i32
    scf.if %2 {
      %cst_163 = arith.constant 0xFF800000 : f32
      %266 = vector.broadcast %cst_163 : f32 to vector<4x8x1xf32>
      %c0_164 = arith.constant 0 : index
      %c0_165 = arith.constant 0 : index
      %c0_166 = arith.constant 0 : index
      %267 = vector.load %arg12[%c0_164, %c0_165, %c0_166] : memref<4x8x1xf32, #tpu.memory_space<vmem>>, vector<4x8x1xf32>
      tpu.vector_store %arg12[%c0_164, %c0_165, %c0_166], %266 {strides = array<i32>} : memref<4x8x1xf32, #tpu.memory_space<vmem>>, vector<4x8x1xf32>,
      %cst_167 = arith.constant 0.000000e+00 : f32
      %268 = vector.broadcast %cst_167 : f32 to vector<4x8x1xf32>
      %c0_168 = arith.constant 0 : index
      %c0_169 = arith.constant 0 : index
      %c0_170 = arith.constant 0 : index
      %269 = vector.load %arg13[%c0_168, %c0_169, %c0_170] : memref<4x8x1xf32, #tpu.memory_space<vmem>>, vector<4x8x1xf32>
      tpu.vector_store %arg13[%c0_168, %c0_169, %c0_170], %268 {strides = array<i32>} : memref<4x8x1xf32, #tpu.memory_space<vmem>>, vector<4x8x1xf32>,
      %cst_171 = arith.constant 0.000000e+00 : f32
      %270 = vector.broadcast %cst_171 : f32 to vector<4x8x8xf32>
      %c0_172 = arith.constant 0 : index
      %c0_173 = arith.constant 0 : index
      %c0_174 = arith.constant 0 : index
      %271 = vector.load %arg14[%c0_172, %c0_173, %c0_174] : memref<4x8x8xf32, #tpu.memory_space<vmem>>, vector<4x8x8xf32>
      tpu.vector_store %arg14[%c0_172, %c0_173, %c0_174], %270 {strides = array<i32>} : memref<4x8x8xf32, #tpu.memory_space<vmem>>, vector<4x8x8xf32>,
      %c0_175 = arith.constant 0 : index
      %c0_176 = arith.constant 0 : index
      %c0_177 = arith.constant 0 : index
      %c0_178 = arith.constant 0 : index
      %272 = vector.load %arg3[%c0_175, %c0_176, %c0_177, %c0_178] : memref<1x1x8x32xbf16, #tpu.memory_space<vmem>>, vector<1x1x8x8xbf16>
      %273 = vector.shape_cast %272 : vector<1x1x8x8xbf16> to vector<8x8xbf16>
      %274 = arith.extf %273 : vector<8x8xbf16> to vector<8x8xf32>
      %c0_179 = arith.constant 0 : index
      %c0_180 = arith.constant 0 : index
      %275 = vector.load %arg6[%c0_179, %c0_180] : memref<1x8xf32, #tpu.memory_space<vmem>>, vector<1x8xf32>
      %c0_181 = arith.constant 0 : index
      %c0_182 = arith.constant 0 : index
      %276 = vector.load %arg7[%c0_181, %c0_182] : memref<1x8xf32, #tpu.memory_space<vmem>>, vector<1x8xf32>
      %cst_183 = arith.constant dense<0.000000e+00> : vector<8xf32>
      %277 = vector.multi_reduction <add>, %274, %cst_183 [1] : vector<8x8xf32> to vector<8xf32>
      %278 = vector.shape_cast %277 : vector<8xf32> to vector<8x1xf32>
      %cst_184 = arith.constant 8.000000e+00 : f32
      %279 = vector.broadcast %cst_184 : f32 to vector<8x1xf32>
      %280 = arith.divf %278, %279 : vector<8x1xf32>
      %281 = vector.broadcast %280 : vector<8x1xf32> to vector<8x8xf32>
      %282 = arith.subf %274, %281 : vector<8x8xf32>
      %283 = arith.mulf %282, %282 : vector<8x8xf32>
      %cst_185 = arith.constant dense<0.000000e+00> : vector<8xf32>
      %284 = vector.multi_reduction <add>, %283, %cst_185 [1] : vector<8x8xf32> to vector<8xf32>
      %285 = vector.shape_cast %284 : vector<8xf32> to vector<8x1xf32>
      %cst_186 = arith.constant 8.000000e+00 : f32
      %286 = vector.broadcast %cst_186 : f32 to vector<8x1xf32>
      %287 = arith.divf %285, %286 : vector<8x1xf32>
      %288 = vector.broadcast %280 : vector<8x1xf32> to vector<8x8xf32>
      %289 = arith.subf %274, %288 : vector<8x8xf32>
      %cst_187 = arith.constant 9.99999997E-7 : f32
      %290 = vector.broadcast %cst_187 : f32 to vector<8x1xf32>
      %291 = arith.addf %287, %290 : vector<8x1xf32>
      %292 = math.rsqrt %291 : vector<8x1xf32>
      %293 = vector.broadcast %292 : vector<8x1xf32> to vector<8x8xf32>
      %294 = arith.mulf %289, %293 : vector<8x8xf32>
      %295 = vector.broadcast %275 : vector<1x8xf32> to vector<8x8xf32>
      %296 = arith.mulf %294, %295 : vector<8x8xf32>
      %297 = vector.broadcast %276 : vector<1x8xf32> to vector<8x8xf32>
      %298 = arith.addf %296, %297 : vector<8x8xf32>
      %cst_188 = arith.constant 0.353553385 : f32
      %299 = vector.broadcast %cst_188 : f32 to vector<8x8xf32>
      %300 = arith.mulf %298, %299 : vector<8x8xf32>
      %301 = arith.truncf %300 : vector<8x8xf32> to vector<8x8xbf16>
      %c0_189 = arith.constant 0 : index
      %c0_190 = arith.constant 0 : index
      %c0_191 = arith.constant 0 : index
      %302 = vector.load %arg11[%c0_189, %c0_190, %c0_191] : memref<4x8x8xbf16, #tpu.memory_space<vmem>>, vector<1x8x8xbf16>
      %303 = vector.shape_cast %302 : vector<1x8x8xbf16> to vector<8x8xbf16>
      %304 = vector.shape_cast %301 : vector<8x8xbf16> to vector<1x8x8xbf16>
      tpu.vector_store %arg11[%c0_189, %c0_190, %c0_191], %304 {strides = array<i32>} : memref<4x8x8xbf16, #tpu.memory_space<vmem>>, vector<1x8x8xbf16>,
      %c0_192 = arith.constant 0 : index
      %c0_193 = arith.constant 0 : index
      %c0_194 = arith.constant 0 : index
      %c8_195 = arith.constant 8 : index
      %305 = vector.load %arg3[%c0_192, %c0_193, %c0_194, %c8_195] : memref<1x1x8x32xbf16, #tpu.memory_space<vmem>>, vector<1x1x8x8xbf16>
      %306 = vector.shape_cast %305 : vector<1x1x8x8xbf16> to vector<8x8xbf16>
      %307 = arith.extf %306 : vector<8x8xbf16> to vector<8x8xf32>
      %c0_196 = arith.constant 0 : index
      %c0_197 = arith.constant 0 : index
      %308 = vector.load %arg6[%c0_196, %c0_197] : memref<1x8xf32, #tpu.memory_space<vmem>>, vector<1x8xf32>
      %c0_198 = arith.constant 0 : index
      %c0_199 = arith.constant 0 : index
      %309 = vector.load %arg7[%c0_198, %c0_199] : memref<1x8xf32, #tpu.memory_space<vmem>>, vector<1x8xf32>
      %cst_200 = arith.constant dense<0.000000e+00> : vector<8xf32>
      %310 = vector.multi_reduction <add>, %307, %cst_200 [1] : vector<8x8xf32> to vector<8xf32>
      %311 = vector.shape_cast %310 : vector<8xf32> to vector<8x1xf32>
      %cst_201 = arith.constant 8.000000e+00 : f32
      %312 = vector.broadcast %cst_201 : f32 to vector<8x1xf32>
      %313 = arith.divf %311, %312 : vector<8x1xf32>
      %314 = vector.broadcast %313 : vector<8x1xf32> to vector<8x8xf32>
      %315 = arith.subf %307, %314 : vector<8x8xf32>
      %316 = arith.mulf %315, %315 : vector<8x8xf32>
      %cst_202 = arith.constant dense<0.000000e+00> : vector<8xf32>
      %317 = vector.multi_reduction <add>, %316, %cst_202 [1] : vector<8x8xf32> to vector<8xf32>
      %318 = vector.shape_cast %317 : vector<8xf32> to vector<8x1xf32>
      %cst_203 = arith.constant 8.000000e+00 : f32
      %319 = vector.broadcast %cst_203 : f32 to vector<8x1xf32>
      %320 = arith.divf %318, %319 : vector<8x1xf32>
      %321 = vector.broadcast %313 : vector<8x1xf32> to vector<8x8xf32>
      %322 = arith.subf %307, %321 : vector<8x8xf32>
      %cst_204 = arith.constant 9.99999997E-7 : f32
      %323 = vector.broadcast %cst_204 : f32 to vector<8x1xf32>
      %324 = arith.addf %320, %323 : vector<8x1xf32>
      %325 = math.rsqrt %324 : vector<8x1xf32>
      %326 = vector.broadcast %325 : vector<8x1xf32> to vector<8x8xf32>
      %327 = arith.mulf %322, %326 : vector<8x8xf32>
      %328 = vector.broadcast %308 : vector<1x8xf32> to vector<8x8xf32>
      %329 = arith.mulf %327, %328 : vector<8x8xf32>
      %330 = vector.broadcast %309 : vector<1x8xf32> to vector<8x8xf32>
      %331 = arith.addf %329, %330 : vector<8x8xf32>
      %cst_205 = arith.constant 0.353553385 : f32
      %332 = vector.broadcast %cst_205 : f32 to vector<8x8xf32>
      %333 = arith.mulf %331, %332 : vector<8x8xf32>
      %334 = arith.truncf %333 : vector<8x8xf32> to vector<8x8xbf16>
      %c1_206 = arith.constant 1 : index
      %c0_207 = arith.constant 0 : index
      %c0_208 = arith.constant 0 : index
      %335 = vector.load %arg11[%c1_206, %c0_207, %c0_208] : memref<4x8x8xbf16, #tpu.memory_space<vmem>>, vector<1x8x8xbf16>
      %336 = vector.shape_cast %335 : vector<1x8x8xbf16> to vector<8x8xbf16>
      %337 = vector.shape_cast %334 : vector<8x8xbf16> to vector<1x8x8xbf16>
      tpu.vector_store %arg11[%c1_206, %c0_207, %c0_208], %337 {strides = array<i32>} : memref<4x8x8xbf16, #tpu.memory_space<vmem>>, vector<1x8x8xbf16>,
      %c0_209 = arith.constant 0 : index
      %c0_210 = arith.constant 0 : index
      %c0_211 = arith.constant 0 : index
      %c16_212 = arith.constant 16 : index
      %338 = vector.load %arg3[%c0_209, %c0_210, %c0_211, %c16_212] : memref<1x1x8x32xbf16, #tpu.memory_space<vmem>>, vector<1x1x8x8xbf16>
      %339 = vector.shape_cast %338 : vector<1x1x8x8xbf16> to vector<8x8xbf16>
      %340 = arith.extf %339 : vector<8x8xbf16> to vector<8x8xf32>
      %c0_213 = arith.constant 0 : index
      %c0_214 = arith.constant 0 : index
      %341 = vector.load %arg6[%c0_213, %c0_214] : memref<1x8xf32, #tpu.memory_space<vmem>>, vector<1x8xf32>
      %c0_215 = arith.constant 0 : index
      %c0_216 = arith.constant 0 : index
      %342 = vector.load %arg7[%c0_215, %c0_216] : memref<1x8xf32, #tpu.memory_space<vmem>>, vector<1x8xf32>
      %cst_217 = arith.constant dense<0.000000e+00> : vector<8xf32>
      %343 = vector.multi_reduction <add>, %340, %cst_217 [1] : vector<8x8xf32> to vector<8xf32>
      %344 = vector.shape_cast %343 : vector<8xf32> to vector<8x1xf32>
      %cst_218 = arith.constant 8.000000e+00 : f32
      %345 = vector.broadcast %cst_218 : f32 to vector<8x1xf32>
      %346 = arith.divf %344, %345 : vector<8x1xf32>
      %347 = vector.broadcast %346 : vector<8x1xf32> to vector<8x8xf32>
      %348 = arith.subf %340, %347 : vector<8x8xf32>
      %349 = arith.mulf %348, %348 : vector<8x8xf32>
      %cst_219 = arith.constant dense<0.000000e+00> : vector<8xf32>
      %350 = vector.multi_reduction <add>, %349, %cst_219 [1] : vector<8x8xf32> to vector<8xf32>
      %351 = vector.shape_cast %350 : vector<8xf32> to vector<8x1xf32>
      %cst_220 = arith.constant 8.000000e+00 : f32
      %352 = vector.broadcast %cst_220 : f32 to vector<8x1xf32>
      %353 = arith.divf %351, %352 : vector<8x1xf32>
      %354 = vector.broadcast %346 : vector<8x1xf32> to vector<8x8xf32>
      %355 = arith.subf %340, %354 : vector<8x8xf32>
      %cst_221 = arith.constant 9.99999997E-7 : f32
      %356 = vector.broadcast %cst_221 : f32 to vector<8x1xf32>
      %357 = arith.addf %353, %356 : vector<8x1xf32>
      %358 = math.rsqrt %357 : vector<8x1xf32>
      %359 = vector.broadcast %358 : vector<8x1xf32> to vector<8x8xf32>
      %360 = arith.mulf %355, %359 : vector<8x8xf32>
      %361 = vector.broadcast %341 : vector<1x8xf32> to vector<8x8xf32>
      %362 = arith.mulf %360, %361 : vector<8x8xf32>
      %363 = vector.broadcast %342 : vector<1x8xf32> to vector<8x8xf32>
      %364 = arith.addf %362, %363 : vector<8x8xf32>
      %cst_222 = arith.constant 0.353553385 : f32
      %365 = vector.broadcast %cst_222 : f32 to vector<8x8xf32>
      %366 = arith.mulf %364, %365 : vector<8x8xf32>
      %367 = arith.truncf %366 : vector<8x8xf32> to vector<8x8xbf16>
      %c2_223 = arith.constant 2 : index
      %c0_224 = arith.constant 0 : index
      %c0_225 = arith.constant 0 : index
      %368 = vector.load %arg11[%c2_223, %c0_224, %c0_225] : memref<4x8x8xbf16, #tpu.memory_space<vmem>>, vector<1x8x8xbf16>
      %369 = vector.shape_cast %368 : vector<1x8x8xbf16> to vector<8x8xbf16>
      %370 = vector.shape_cast %367 : vector<8x8xbf16> to vector<1x8x8xbf16>
      tpu.vector_store %arg11[%c2_223, %c0_224, %c0_225], %370 {strides = array<i32>} : memref<4x8x8xbf16, #tpu.memory_space<vmem>>, vector<1x8x8xbf16>,
      %c0_226 = arith.constant 0 : index
      %c0_227 = arith.constant 0 : index
      %c0_228 = arith.constant 0 : index
      %c24_229 = arith.constant 24 : index
      %371 = vector.load %arg3[%c0_226, %c0_227, %c0_228, %c24_229] : memref<1x1x8x32xbf16, #tpu.memory_space<vmem>>, vector<1x1x8x8xbf16>
      %372 = vector.shape_cast %371 : vector<1x1x8x8xbf16> to vector<8x8xbf16>
      %373 = arith.extf %372 : vector<8x8xbf16> to vector<8x8xf32>
      %c0_230 = arith.constant 0 : index
      %c0_231 = arith.constant 0 : index
      %374 = vector.load %arg6[%c0_230, %c0_231] : memref<1x8xf32, #tpu.memory_space<vmem>>, vector<1x8xf32>
      %c0_232 = arith.constant 0 : index
      %c0_233 = arith.constant 0 : index
      %375 = vector.load %arg7[%c0_232, %c0_233] : memref<1x8xf32, #tpu.memory_space<vmem>>, vector<1x8xf32>
      %cst_234 = arith.constant dense<0.000000e+00> : vector<8xf32>
      %376 = vector.multi_reduction <add>, %373, %cst_234 [1] : vector<8x8xf32> to vector<8xf32>
      %377 = vector.shape_cast %376 : vector<8xf32> to vector<8x1xf32>
      %cst_235 = arith.constant 8.000000e+00 : f32
      %378 = vector.broadcast %cst_235 : f32 to vector<8x1xf32>
      %379 = arith.divf %377, %378 : vector<8x1xf32>
      %380 = vector.broadcast %379 : vector<8x1xf32> to vector<8x8xf32>
      %381 = arith.subf %373, %380 : vector<8x8xf32>
      %382 = arith.mulf %381, %381 : vector<8x8xf32>
      %cst_236 = arith.constant dense<0.000000e+00> : vector<8xf32>
      %383 = vector.multi_reduction <add>, %382, %cst_236 [1] : vector<8x8xf32> to vector<8xf32>
      %384 = vector.shape_cast %383 : vector<8xf32> to vector<8x1xf32>
      %cst_237 = arith.constant 8.000000e+00 : f32
      %385 = vector.broadcast %cst_237 : f32 to vector<8x1xf32>
      %386 = arith.divf %384, %385 : vector<8x1xf32>
      %387 = vector.broadcast %379 : vector<8x1xf32> to vector<8x8xf32>
      %388 = arith.subf %373, %387 : vector<8x8xf32>
      %cst_238 = arith.constant 9.99999997E-7 : f32
      %389 = vector.broadcast %cst_238 : f32 to vector<8x1xf32>
      %390 = arith.addf %386, %389 : vector<8x1xf32>
      %391 = math.rsqrt %390 : vector<8x1xf32>
      %392 = vector.broadcast %391 : vector<8x1xf32> to vector<8x8xf32>
      %393 = arith.mulf %388, %392 : vector<8x8xf32>
      %394 = vector.broadcast %374 : vector<1x8xf32> to vector<8x8xf32>
      %395 = arith.mulf %393, %394 : vector<8x8xf32>
      %396 = vector.broadcast %375 : vector<1x8xf32> to vector<8x8xf32>
      %397 = arith.addf %395, %396 : vector<8x8xf32>
      %cst_239 = arith.constant 0.353553385 : f32
      %398 = vector.broadcast %cst_239 : f32 to vector<8x8xf32>
      %399 = arith.mulf %397, %398 : vector<8x8xf32>
      %400 = arith.truncf %399 : vector<8x8xf32> to vector<8x8xbf16>
      %c3_240 = arith.constant 3 : index
      %c0_241 = arith.constant 0 : index
      %c0_242 = arith.constant 0 : index
      %401 = vector.load %arg11[%c3_240, %c0_241, %c0_242] : memref<4x8x8xbf16, #tpu.memory_space<vmem>>, vector<1x8x8xbf16>
      %402 = vector.shape_cast %401 : vector<1x8x8xbf16> to vector<8x8xbf16>
      %403 = vector.shape_cast %400 : vector<8x8xbf16> to vector<1x8x8xbf16>
      tpu.vector_store %arg11[%c3_240, %c0_241, %c0_242], %403 {strides = array<i32>} : memref<4x8x8xbf16, #tpu.memory_space<vmem>>, vector<1x8x8xbf16>,
    } else {
    }
    %c0 = arith.constant 0 : index
    %c0_1 = arith.constant 0 : index
    %c0_2 = arith.constant 0 : index
    %c0_3 = arith.constant 0 : index
    %3 = vector.load %arg4[%c0, %c0_1, %c0_2, %c0_3] : memref<1x1x8x32xbf16, #tpu.memory_space<vmem>>, vector<1x1x8x8xbf16>
    %4 = vector.shape_cast %3 : vector<1x1x8x8xbf16> to vector<8x8xbf16>
    %5 = arith.extf %4 : vector<8x8xbf16> to vector<8x8xf32>
    %c0_4 = arith.constant 0 : index
    %c0_5 = arith.constant 0 : index
    %c0_6 = arith.constant 0 : index
    %c0_7 = arith.constant 0 : index
    %6 = vector.load %arg5[%c0_4, %c0_5, %c0_6, %c0_7] : memref<1x1x8x32xbf16, #tpu.memory_space<vmem>>, vector<1x1x8x8xbf16>
    %7 = vector.shape_cast %6 : vector<1x1x8x8xbf16> to vector<8x8xbf16>
    %c0_8 = arith.constant 0 : index
    %c0_9 = arith.constant 0 : index
    %8 = vector.load %arg8[%c0_8, %c0_9] : memref<1x8xf32, #tpu.memory_space<vmem>>, vector<1x8xf32>
    %c0_10 = arith.constant 0 : index
    %c0_11 = arith.constant 0 : index
    %9 = vector.load %arg9[%c0_10, %c0_11] : memref<1x8xf32, #tpu.memory_space<vmem>>, vector<1x8xf32>
    %cst = arith.constant dense<0.000000e+00> : vector<8xf32>
    %10 = vector.multi_reduction <add>, %5, %cst [1] : vector<8x8xf32> to vector<8xf32>
    %11 = vector.shape_cast %10 : vector<8xf32> to vector<8x1xf32>
    %cst_12 = arith.constant 8.000000e+00 : f32
    %12 = vector.broadcast %cst_12 : f32 to vector<8x1xf32>
    %13 = arith.divf %11, %12 : vector<8x1xf32>
    %14 = vector.broadcast %13 : vector<8x1xf32> to vector<8x8xf32>
    %15 = arith.subf %5, %14 : vector<8x8xf32>
    %16 = arith.mulf %15, %15 : vector<8x8xf32>
    %cst_13 = arith.constant dense<0.000000e+00> : vector<8xf32>
    %17 = vector.multi_reduction <add>, %16, %cst_13 [1] : vector<8x8xf32> to vector<8xf32>
    %18 = vector.shape_cast %17 : vector<8xf32> to vector<8x1xf32>
    %cst_14 = arith.constant 8.000000e+00 : f32
    %19 = vector.broadcast %cst_14 : f32 to vector<8x1xf32>
    %20 = arith.divf %18, %19 : vector<8x1xf32>
    %21 = vector.broadcast %13 : vector<8x1xf32> to vector<8x8xf32>
    %22 = arith.subf %5, %21 : vector<8x8xf32>
    %cst_15 = arith.constant 9.99999997E-7 : f32
    %23 = vector.broadcast %cst_15 : f32 to vector<8x1xf32>
    %24 = arith.addf %20, %23 : vector<8x1xf32>
    %25 = math.rsqrt %24 : vector<8x1xf32>
    %26 = vector.broadcast %25 : vector<8x1xf32> to vector<8x8xf32>
    %27 = arith.mulf %22, %26 : vector<8x8xf32>
    %28 = vector.broadcast %8 : vector<1x8xf32> to vector<8x8xf32>
    %29 = arith.mulf %27, %28 : vector<8x8xf32>
    %30 = vector.broadcast %9 : vector<1x8xf32> to vector<8x8xf32>
    %31 = arith.addf %29, %30 : vector<8x8xf32>
    %32 = arith.truncf %31 : vector<8x8xf32> to vector<8x8xbf16>
    %c0_16 = arith.constant 0 : index
    %c0_17 = arith.constant 0 : index
    %c0_18 = arith.constant 0 : index
    %33 = vector.load %arg11[%c0_16, %c0_17, %c0_18] : memref<4x8x8xbf16, #tpu.memory_space<vmem>>, vector<1x8x8xbf16>
    %34 = vector.shape_cast %33 : vector<1x8x8xbf16> to vector<8x8xbf16>
    %cst_19 = arith.constant dense<0.000000e+00> : vector<8x8xf32>
    %35 = tpu.matmul %34, %32, %cst_19 {dimension_numbers = #tpu.dot_dimension_numbers<[1], [1], [0], [0], [0, 0, 1, 0], [], []>} : vector<8x8xbf16>, vector<8x8xbf16>, vector<8x8xf32> -> vector<8x8xf32>
    %c0_20 = arith.constant 0 : index
    %c0_21 = arith.constant 0 : index
    %c0_22 = arith.constant 0 : index
    %36 = vector.load %arg12[%c0_20, %c0_21, %c0_22] : memref<4x8x1xf32, #tpu.memory_space<vmem>>, vector<1x8x1xf32>
    %37 = vector.shape_cast %36 : vector<1x8x1xf32> to vector<8x1xf32>
    %cst_23 = arith.constant dense<0xFF800000> : vector<8xf32>
    %38 = vector.multi_reduction <maximumf>, %35, %cst_23 [1] : vector<8x8xf32> to vector<8xf32>
    %39 = vector.shape_cast %38 : vector<8xf32> to vector<8x1xf32>
    %40 = arith.maximumf %37, %39 : vector<8x1xf32>
    %41 = arith.subf %37, %40 : vector<8x1xf32>
    %42 = math.exp %41 : vector<8x1xf32>
    %43 = vector.broadcast %40 : vector<8x1xf32> to vector<8x8xf32>
    %44 = arith.subf %35, %43 : vector<8x8xf32>
    %45 = math.exp %44 : vector<8x8xf32>
    %c0_24 = arith.constant 0 : index
    %c0_25 = arith.constant 0 : index
    %c0_26 = arith.constant 0 : index
    %46 = vector.load %arg13[%c0_24, %c0_25, %c0_26] : memref<4x8x1xf32, #tpu.memory_space<vmem>>, vector<1x8x1xf32>
    %47 = vector.shape_cast %46 : vector<1x8x1xf32> to vector<8x1xf32>
    %48 = arith.mulf %42, %47 : vector<8x1xf32>
    %cst_27 = arith.constant dense<0.000000e+00> : vector<8xf32>
    %49 = vector.multi_reduction <add>, %45, %cst_27 [1] : vector<8x8xf32> to vector<8xf32>
    %50 = vector.shape_cast %49 : vector<8xf32> to vector<8x1xf32>
    %51 = arith.addf %48, %50 : vector<8x1xf32>
    %c0_28 = arith.constant 0 : index
    %c0_29 = arith.constant 0 : index
    %c0_30 = arith.constant 0 : index
    %52 = vector.load %arg13[%c0_28, %c0_29, %c0_30] : memref<4x8x1xf32, #tpu.memory_space<vmem>>, vector<1x8x1xf32>
    %53 = vector.shape_cast %52 : vector<1x8x1xf32> to vector<8x1xf32>
    %54 = vector.shape_cast %51 : vector<8x1xf32> to vector<1x8x1xf32>
    tpu.vector_store %arg13[%c0_28, %c0_29, %c0_30], %54 {strides = array<i32>} : memref<4x8x1xf32, #tpu.memory_space<vmem>>, vector<1x8x1xf32>,
    %c0_31 = arith.constant 0 : index
    %c0_32 = arith.constant 0 : index
    %c0_33 = arith.constant 0 : index
    %55 = vector.load %arg14[%c0_31, %c0_32, %c0_33] : memref<4x8x8xf32, #tpu.memory_space<vmem>>, vector<1x8x8xf32>
    %56 = vector.shape_cast %55 : vector<1x8x8xf32> to vector<8x8xf32>
    %57 = vector.broadcast %42 : vector<8x1xf32> to vector<8x8xf32>
    %58 = arith.mulf %57, %56 : vector<8x8xf32>
    %59 = arith.truncf %45 : vector<8x8xf32> to vector<8x8xbf16>
    %cst_34 = arith.constant dense<0.000000e+00> : vector<8x8xf32>
    %60 = tpu.matmul %59, %7, %cst_34 {dimension_numbers = #tpu.dot_dimension_numbers<[1], [0], [0], [1], [0, 0, 1, 1], [], []>} : vector<8x8xbf16>, vector<8x8xbf16>, vector<8x8xf32> -> vector<8x8xf32>
    %61 = arith.addf %58, %60 : vector<8x8xf32>
    %c0_35 = arith.constant 0 : index
    %c0_36 = arith.constant 0 : index
    %c0_37 = arith.constant 0 : index
    %62 = vector.load %arg14[%c0_35, %c0_36, %c0_37] : memref<4x8x8xf32, #tpu.memory_space<vmem>>, vector<1x8x8xf32>
    %63 = vector.shape_cast %62 : vector<1x8x8xf32> to vector<8x8xf32>
    %64 = vector.shape_cast %61 : vector<8x8xf32> to vector<1x8x8xf32>
    tpu.vector_store %arg14[%c0_35, %c0_36, %c0_37], %64 {strides = array<i32>} : memref<4x8x8xf32, #tpu.memory_space<vmem>>, vector<1x8x8xf32>,
    %c0_38 = arith.constant 0 : index
    %c0_39 = arith.constant 0 : index
    %c0_40 = arith.constant 0 : index
    %65 = vector.load %arg12[%c0_38, %c0_39, %c0_40] : memref<4x8x1xf32, #tpu.memory_space<vmem>>, vector<1x8x1xf32>
    %66 = vector.shape_cast %65 : vector<1x8x1xf32> to vector<8x1xf32>
    %67 = vector.shape_cast %40 : vector<8x1xf32> to vector<1x8x1xf32>
    tpu.vector_store %arg12[%c0_38, %c0_39, %c0_40], %67 {strides = array<i32>} : memref<4x8x1xf32, #tpu.memory_space<vmem>>, vector<1x8x1xf32>,
    %c0_41 = arith.constant 0 : index
    %c0_42 = arith.constant 0 : index
    %c0_43 = arith.constant 0 : index
    %c8 = arith.constant 8 : index
    %68 = vector.load %arg4[%c0_41, %c0_42, %c0_43, %c8] : memref<1x1x8x32xbf16, #tpu.memory_space<vmem>>, vector<1x1x8x8xbf16>
    %69 = vector.shape_cast %68 : vector<1x1x8x8xbf16> to vector<8x8xbf16>
    %70 = arith.extf %69 : vector<8x8xbf16> to vector<8x8xf32>
    %c0_44 = arith.constant 0 : index
    %c0_45 = arith.constant 0 : index
    %c0_46 = arith.constant 0 : index
    %c8_47 = arith.constant 8 : index
    %71 = vector.load %arg5[%c0_44, %c0_45, %c0_46, %c8_47] : memref<1x1x8x32xbf16, #tpu.memory_space<vmem>>, vector<1x1x8x8xbf16>
    %72 = vector.shape_cast %71 : vector<1x1x8x8xbf16> to vector<8x8xbf16>
    %c0_48 = arith.constant 0 : index
    %c0_49 = arith.constant 0 : index
    %73 = vector.load %arg8[%c0_48, %c0_49] : memref<1x8xf32, #tpu.memory_space<vmem>>, vector<1x8xf32>
    %c0_50 = arith.constant 0 : index
    %c0_51 = arith.constant 0 : index
    %74 = vector.load %arg9[%c0_50, %c0_51] : memref<1x8xf32, #tpu.memory_space<vmem>>, vector<1x8xf32>
    %cst_52 = arith.constant dense<0.000000e+00> : vector<8xf32>
    %75 = vector.multi_reduction <add>, %70, %cst_52 [1] : vector<8x8xf32> to vector<8xf32>
    %76 = vector.shape_cast %75 : vector<8xf32> to vector<8x1xf32>
    %cst_53 = arith.constant 8.000000e+00 : f32
    %77 = vector.broadcast %cst_53 : f32 to vector<8x1xf32>
    %78 = arith.divf %76, %77 : vector<8x1xf32>
    %79 = vector.broadcast %78 : vector<8x1xf32> to vector<8x8xf32>
    %80 = arith.subf %70, %79 : vector<8x8xf32>
    %81 = arith.mulf %80, %80 : vector<8x8xf32>
    %cst_54 = arith.constant dense<0.000000e+00> : vector<8xf32>
    %82 = vector.multi_reduction <add>, %81, %cst_54 [1] : vector<8x8xf32> to vector<8xf32>
    %83 = vector.shape_cast %82 : vector<8xf32> to vector<8x1xf32>
    %cst_55 = arith.constant 8.000000e+00 : f32
    %84 = vector.broadcast %cst_55 : f32 to vector<8x1xf32>
    %85 = arith.divf %83, %84 : vector<8x1xf32>
    %86 = vector.broadcast %78 : vector<8x1xf32> to vector<8x8xf32>
    %87 = arith.subf %70, %86 : vector<8x8xf32>
    %cst_56 = arith.constant 9.99999997E-7 : f32
    %88 = vector.broadcast %cst_56 : f32 to vector<8x1xf32>
    %89 = arith.addf %85, %88 : vector<8x1xf32>
    %90 = math.rsqrt %89 : vector<8x1xf32>
    %91 = vector.broadcast %90 : vector<8x1xf32> to vector<8x8xf32>
    %92 = arith.mulf %87, %91 : vector<8x8xf32>
    %93 = vector.broadcast %73 : vector<1x8xf32> to vector<8x8xf32>
    %94 = arith.mulf %92, %93 : vector<8x8xf32>
    %95 = vector.broadcast %74 : vector<1x8xf32> to vector<8x8xf32>
    %96 = arith.addf %94, %95 : vector<8x8xf32>
    %97 = arith.truncf %96 : vector<8x8xf32> to vector<8x8xbf16>
    %c1 = arith.constant 1 : index
    %c0_57 = arith.constant 0 : index
    %c0_58 = arith.constant 0 : index
    %98 = vector.load %arg11[%c1, %c0_57, %c0_58] : memref<4x8x8xbf16, #tpu.memory_space<vmem>>, vector<1x8x8xbf16>
    %99 = vector.shape_cast %98 : vector<1x8x8xbf16> to vector<8x8xbf16>
    %cst_59 = arith.constant dense<0.000000e+00> : vector<8x8xf32>
    %100 = tpu.matmul %99, %97, %cst_59 {dimension_numbers = #tpu.dot_dimension_numbers<[1], [1], [0], [0], [0, 0, 1, 0], [], []>} : vector<8x8xbf16>, vector<8x8xbf16>, vector<8x8xf32> -> vector<8x8xf32>
    %c1_60 = arith.constant 1 : index
    %c0_61 = arith.constant 0 : index
    %c0_62 = arith.constant 0 : index
    %101 = vector.load %arg12[%c1_60, %c0_61, %c0_62] : memref<4x8x1xf32, #tpu.memory_space<vmem>>, vector<1x8x1xf32>
    %102 = vector.shape_cast %101 : vector<1x8x1xf32> to vector<8x1xf32>
    %cst_63 = arith.constant dense<0xFF800000> : vector<8xf32>
    %103 = vector.multi_reduction <maximumf>, %100, %cst_63 [1] : vector<8x8xf32> to vector<8xf32>
    %104 = vector.shape_cast %103 : vector<8xf32> to vector<8x1xf32>
    %105 = arith.maximumf %102, %104 : vector<8x1xf32>
    %106 = arith.subf %102, %105 : vector<8x1xf32>
    %107 = math.exp %106 : vector<8x1xf32>
    %108 = vector.broadcast %105 : vector<8x1xf32> to vector<8x8xf32>
    %109 = arith.subf %100, %108 : vector<8x8xf32>
    %110 = math.exp %109 : vector<8x8xf32>
    %c1_64 = arith.constant 1 : index
    %c0_65 = arith.constant 0 : index
    %c0_66 = arith.constant 0 : index
    %111 = vector.load %arg13[%c1_64, %c0_65, %c0_66] : memref<4x8x1xf32, #tpu.memory_space<vmem>>, vector<1x8x1xf32>
    %112 = vector.shape_cast %111 : vector<1x8x1xf32> to vector<8x1xf32>
    %113 = arith.mulf %107, %112 : vector<8x1xf32>
    %cst_67 = arith.constant dense<0.000000e+00> : vector<8xf32>
    %114 = vector.multi_reduction <add>, %110, %cst_67 [1] : vector<8x8xf32> to vector<8xf32>
    %115 = vector.shape_cast %114 : vector<8xf32> to vector<8x1xf32>
    %116 = arith.addf %113, %115 : vector<8x1xf32>
    %c1_68 = arith.constant 1 : index
    %c0_69 = arith.constant 0 : index
    %c0_70 = arith.constant 0 : index
    %117 = vector.load %arg13[%c1_68, %c0_69, %c0_70] : memref<4x8x1xf32, #tpu.memory_space<vmem>>, vector<1x8x1xf32>
    %118 = vector.shape_cast %117 : vector<1x8x1xf32> to vector<8x1xf32>
    %119 = vector.shape_cast %116 : vector<8x1xf32> to vector<1x8x1xf32>
    tpu.vector_store %arg13[%c1_68, %c0_69, %c0_70], %119 {strides = array<i32>} : memref<4x8x1xf32, #tpu.memory_space<vmem>>, vector<1x8x1xf32>,
    %c1_71 = arith.constant 1 : index
    %c0_72 = arith.constant 0 : index
    %c0_73 = arith.constant 0 : index
    %120 = vector.load %arg14[%c1_71, %c0_72, %c0_73] : memref<4x8x8xf32, #tpu.memory_space<vmem>>, vector<1x8x8xf32>
    %121 = vector.shape_cast %120 : vector<1x8x8xf32> to vector<8x8xf32>
    %122 = vector.broadcast %107 : vector<8x1xf32> to vector<8x8xf32>
    %123 = arith.mulf %122, %121 : vector<8x8xf32>
    %124 = arith.truncf %110 : vector<8x8xf32> to vector<8x8xbf16>
    %cst_74 = arith.constant dense<0.000000e+00> : vector<8x8xf32>
    %125 = tpu.matmul %124, %72, %cst_74 {dimension_numbers = #tpu.dot_dimension_numbers<[1], [0], [0], [1], [0, 0, 1, 1], [], []>} : vector<8x8xbf16>, vector<8x8xbf16>, vector<8x8xf32> -> vector<8x8xf32>
    %126 = arith.addf %123, %125 : vector<8x8xf32>
    %c1_75 = arith.constant 1 : index
    %c0_76 = arith.constant 0 : index
    %c0_77 = arith.constant 0 : index
    %127 = vector.load %arg14[%c1_75, %c0_76, %c0_77] : memref<4x8x8xf32, #tpu.memory_space<vmem>>, vector<1x8x8xf32>
    %128 = vector.shape_cast %127 : vector<1x8x8xf32> to vector<8x8xf32>
    %129 = vector.shape_cast %126 : vector<8x8xf32> to vector<1x8x8xf32>
    tpu.vector_store %arg14[%c1_75, %c0_76, %c0_77], %129 {strides = array<i32>} : memref<4x8x8xf32, #tpu.memory_space<vmem>>, vector<1x8x8xf32>,
    %c1_78 = arith.constant 1 : index
    %c0_79 = arith.constant 0 : index
    %c0_80 = arith.constant 0 : index
    %130 = vector.load %arg12[%c1_78, %c0_79, %c0_80] : memref<4x8x1xf32, #tpu.memory_space<vmem>>, vector<1x8x1xf32>
    %131 = vector.shape_cast %130 : vector<1x8x1xf32> to vector<8x1xf32>
    %132 = vector.shape_cast %105 : vector<8x1xf32> to vector<1x8x1xf32>
    tpu.vector_store %arg12[%c1_78, %c0_79, %c0_80], %132 {strides = array<i32>} : memref<4x8x1xf32, #tpu.memory_space<vmem>>, vector<1x8x1xf32>,
    %c0_81 = arith.constant 0 : index
    %c0_82 = arith.constant 0 : index
    %c0_83 = arith.constant 0 : index
    %c16 = arith.constant 16 : index
    %133 = vector.load %arg4[%c0_81, %c0_82, %c0_83, %c16] : memref<1x1x8x32xbf16, #tpu.memory_space<vmem>>, vector<1x1x8x8xbf16>
    %134 = vector.shape_cast %133 : vector<1x1x8x8xbf16> to vector<8x8xbf16>
    %135 = arith.extf %134 : vector<8x8xbf16> to vector<8x8xf32>
    %c0_84 = arith.constant 0 : index
    %c0_85 = arith.constant 0 : index
    %c0_86 = arith.constant 0 : index
    %c16_87 = arith.constant 16 : index
    %136 = vector.load %arg5[%c0_84, %c0_85, %c0_86, %c16_87] : memref<1x1x8x32xbf16, #tpu.memory_space<vmem>>, vector<1x1x8x8xbf16>
    %137 = vector.shape_cast %136 : vector<1x1x8x8xbf16> to vector<8x8xbf16>
    %c0_88 = arith.constant 0 : index
    %c0_89 = arith.constant 0 : index
    %138 = vector.load %arg8[%c0_88, %c0_89] : memref<1x8xf32, #tpu.memory_space<vmem>>, vector<1x8xf32>
    %c0_90 = arith.constant 0 : index
    %c0_91 = arith.constant 0 : index
    %139 = vector.load %arg9[%c0_90, %c0_91] : memref<1x8xf32, #tpu.memory_space<vmem>>, vector<1x8xf32>
    %cst_92 = arith.constant dense<0.000000e+00> : vector<8xf32>
    %140 = vector.multi_reduction <add>, %135, %cst_92 [1] : vector<8x8xf32> to vector<8xf32>
    %141 = vector.shape_cast %140 : vector<8xf32> to vector<8x1xf32>
    %cst_93 = arith.constant 8.000000e+00 : f32
    %142 = vector.broadcast %cst_93 : f32 to vector<8x1xf32>
    %143 = arith.divf %141, %142 : vector<8x1xf32>
    %144 = vector.broadcast %143 : vector<8x1xf32> to vector<8x8xf32>
    %145 = arith.subf %135, %144 : vector<8x8xf32>
    %146 = arith.mulf %145, %145 : vector<8x8xf32>
    %cst_94 = arith.constant dense<0.000000e+00> : vector<8xf32>
    %147 = vector.multi_reduction <add>, %146, %cst_94 [1] : vector<8x8xf32> to vector<8xf32>
    %148 = vector.shape_cast %147 : vector<8xf32> to vector<8x1xf32>
    %cst_95 = arith.constant 8.000000e+00 : f32
    %149 = vector.broadcast %cst_95 : f32 to vector<8x1xf32>
    %150 = arith.divf %148, %149 : vector<8x1xf32>
    %151 = vector.broadcast %143 : vector<8x1xf32> to vector<8x8xf32>
    %152 = arith.subf %135, %151 : vector<8x8xf32>
    %cst_96 = arith.constant 9.99999997E-7 : f32
    %153 = vector.broadcast %cst_96 : f32 to vector<8x1xf32>
    %154 = arith.addf %150, %153 : vector<8x1xf32>
    %155 = math.rsqrt %154 : vector<8x1xf32>
    %156 = vector.broadcast %155 : vector<8x1xf32> to vector<8x8xf32>
    %157 = arith.mulf %152, %156 : vector<8x8xf32>
    %158 = vector.broadcast %138 : vector<1x8xf32> to vector<8x8xf32>
    %159 = arith.mulf %157, %158 : vector<8x8xf32>
    %160 = vector.broadcast %139 : vector<1x8xf32> to vector<8x8xf32>
    %161 = arith.addf %159, %160 : vector<8x8xf32>
    %162 = arith.truncf %161 : vector<8x8xf32> to vector<8x8xbf16>
    %c2 = arith.constant 2 : index
    %c0_97 = arith.constant 0 : index
    %c0_98 = arith.constant 0 : index
    %163 = vector.load %arg11[%c2, %c0_97, %c0_98] : memref<4x8x8xbf16, #tpu.memory_space<vmem>>, vector<1x8x8xbf16>
    %164 = vector.shape_cast %163 : vector<1x8x8xbf16> to vector<8x8xbf16>
    %cst_99 = arith.constant dense<0.000000e+00> : vector<8x8xf32>
    %165 = tpu.matmul %164, %162, %cst_99 {dimension_numbers = #tpu.dot_dimension_numbers<[1], [1], [0], [0], [0, 0, 1, 0], [], []>} : vector<8x8xbf16>, vector<8x8xbf16>, vector<8x8xf32> -> vector<8x8xf32>
    %c2_100 = arith.constant 2 : index
    %c0_101 = arith.constant 0 : index
    %c0_102 = arith.constant 0 : index
    %166 = vector.load %arg12[%c2_100, %c0_101, %c0_102] : memref<4x8x1xf32, #tpu.memory_space<vmem>>, vector<1x8x1xf32>
    %167 = vector.shape_cast %166 : vector<1x8x1xf32> to vector<8x1xf32>
    %cst_103 = arith.constant dense<0xFF800000> : vector<8xf32>
    %168 = vector.multi_reduction <maximumf>, %165, %cst_103 [1] : vector<8x8xf32> to vector<8xf32>
    %169 = vector.shape_cast %168 : vector<8xf32> to vector<8x1xf32>
    %170 = arith.maximumf %167, %169 : vector<8x1xf32>
    %171 = arith.subf %167, %170 : vector<8x1xf32>
    %172 = math.exp %171 : vector<8x1xf32>
    %173 = vector.broadcast %170 : vector<8x1xf32> to vector<8x8xf32>
    %174 = arith.subf %165, %173 : vector<8x8xf32>
    %175 = math.exp %174 : vector<8x8xf32>
    %c2_104 = arith.constant 2 : index
    %c0_105 = arith.constant 0 : index
    %c0_106 = arith.constant 0 : index
    %176 = vector.load %arg13[%c2_104, %c0_105, %c0_106] : memref<4x8x1xf32, #tpu.memory_space<vmem>>, vector<1x8x1xf32>
    %177 = vector.shape_cast %176 : vector<1x8x1xf32> to vector<8x1xf32>
    %178 = arith.mulf %172, %177 : vector<8x1xf32>
    %cst_107 = arith.constant dense<0.000000e+00> : vector<8xf32>
    %179 = vector.multi_reduction <add>, %175, %cst_107 [1] : vector<8x8xf32> to vector<8xf32>
    %180 = vector.shape_cast %179 : vector<8xf32> to vector<8x1xf32>
    %181 = arith.addf %178, %180 : vector<8x1xf32>
    %c2_108 = arith.constant 2 : index
    %c0_109 = arith.constant 0 : index
    %c0_110 = arith.constant 0 : index
    %182 = vector.load %arg13[%c2_108, %c0_109, %c0_110] : memref<4x8x1xf32, #tpu.memory_space<vmem>>, vector<1x8x1xf32>
    %183 = vector.shape_cast %182 : vector<1x8x1xf32> to vector<8x1xf32>
    %184 = vector.shape_cast %181 : vector<8x1xf32> to vector<1x8x1xf32>
    tpu.vector_store %arg13[%c2_108, %c0_109, %c0_110], %184 {strides = array<i32>} : memref<4x8x1xf32, #tpu.memory_space<vmem>>, vector<1x8x1xf32>,
    %c2_111 = arith.constant 2 : index
    %c0_112 = arith.constant 0 : index
    %c0_113 = arith.constant 0 : index
    %185 = vector.load %arg14[%c2_111, %c0_112, %c0_113] : memref<4x8x8xf32, #tpu.memory_space<vmem>>, vector<1x8x8xf32>
    %186 = vector.shape_cast %185 : vector<1x8x8xf32> to vector<8x8xf32>
    %187 = vector.broadcast %172 : vector<8x1xf32> to vector<8x8xf32>
    %188 = arith.mulf %187, %186 : vector<8x8xf32>
    %189 = arith.truncf %175 : vector<8x8xf32> to vector<8x8xbf16>
    %cst_114 = arith.constant dense<0.000000e+00> : vector<8x8xf32>
    %190 = tpu.matmul %189, %137, %cst_114 {dimension_numbers = #tpu.dot_dimension_numbers<[1], [0], [0], [1], [0, 0, 1, 1], [], []>} : vector<8x8xbf16>, vector<8x8xbf16>, vector<8x8xf32> -> vector<8x8xf32>
    %191 = arith.addf %188, %190 : vector<8x8xf32>
    %c2_115 = arith.constant 2 : index
    %c0_116 = arith.constant 0 : index
    %c0_117 = arith.constant 0 : index
    %192 = vector.load %arg14[%c2_115, %c0_116, %c0_117] : memref<4x8x8xf32, #tpu.memory_space<vmem>>, vector<1x8x8xf32>
    %193 = vector.shape_cast %192 : vector<1x8x8xf32> to vector<8x8xf32>
    %194 = vector.shape_cast %191 : vector<8x8xf32> to vector<1x8x8xf32>
    tpu.vector_store %arg14[%c2_115, %c0_116, %c0_117], %194 {strides = array<i32>} : memref<4x8x8xf32, #tpu.memory_space<vmem>>, vector<1x8x8xf32>,
    %c2_118 = arith.constant 2 : index
    %c0_119 = arith.constant 0 : index
    %c0_120 = arith.constant 0 : index
    %195 = vector.load %arg12[%c2_118, %c0_119, %c0_120] : memref<4x8x1xf32, #tpu.memory_space<vmem>>, vector<1x8x1xf32>
    %196 = vector.shape_cast %195 : vector<1x8x1xf32> to vector<8x1xf32>
    %197 = vector.shape_cast %170 : vector<8x1xf32> to vector<1x8x1xf32>
    tpu.vector_store %arg12[%c2_118, %c0_119, %c0_120], %197 {strides = array<i32>} : memref<4x8x1xf32, #tpu.memory_space<vmem>>, vector<1x8x1xf32>,
    %c0_121 = arith.constant 0 : index
    %c0_122 = arith.constant 0 : index
    %c0_123 = arith.constant 0 : index
    %c24 = arith.constant 24 : index
    %198 = vector.load %arg4[%c0_121, %c0_122, %c0_123, %c24] : memref<1x1x8x32xbf16, #tpu.memory_space<vmem>>, vector<1x1x8x8xbf16>
    %199 = vector.shape_cast %198 : vector<1x1x8x8xbf16> to vector<8x8xbf16>
    %200 = arith.extf %199 : vector<8x8xbf16> to vector<8x8xf32>
    %c0_124 = arith.constant 0 : index
    %c0_125 = arith.constant 0 : index
    %c0_126 = arith.constant 0 : index
    %c24_127 = arith.constant 24 : index
    %201 = vector.load %arg5[%c0_124, %c0_125, %c0_126, %c24_127] : memref<1x1x8x32xbf16, #tpu.memory_space<vmem>>, vector<1x1x8x8xbf16>
    %202 = vector.shape_cast %201 : vector<1x1x8x8xbf16> to vector<8x8xbf16>
    %c0_128 = arith.constant 0 : index
    %c0_129 = arith.constant 0 : index
    %203 = vector.load %arg8[%c0_128, %c0_129] : memref<1x8xf32, #tpu.memory_space<vmem>>, vector<1x8xf32>
    %c0_130 = arith.constant 0 : index
    %c0_131 = arith.constant 0 : index
    %204 = vector.load %arg9[%c0_130, %c0_131] : memref<1x8xf32, #tpu.memory_space<vmem>>, vector<1x8xf32>
    %cst_132 = arith.constant dense<0.000000e+00> : vector<8xf32>
    %205 = vector.multi_reduction <add>, %200, %cst_132 [1] : vector<8x8xf32> to vector<8xf32>
    %206 = vector.shape_cast %205 : vector<8xf32> to vector<8x1xf32>
    %cst_133 = arith.constant 8.000000e+00 : f32
    %207 = vector.broadcast %cst_133 : f32 to vector<8x1xf32>
    %208 = arith.divf %206, %207 : vector<8x1xf32>
    %209 = vector.broadcast %208 : vector<8x1xf32> to vector<8x8xf32>
    %210 = arith.subf %200, %209 : vector<8x8xf32>
    %211 = arith.mulf %210, %210 : vector<8x8xf32>
    %cst_134 = arith.constant dense<0.000000e+00> : vector<8xf32>
    %212 = vector.multi_reduction <add>, %211, %cst_134 [1] : vector<8x8xf32> to vector<8xf32>
    %213 = vector.shape_cast %212 : vector<8xf32> to vector<8x1xf32>
    %cst_135 = arith.constant 8.000000e+00 : f32
    %214 = vector.broadcast %cst_135 : f32 to vector<8x1xf32>
    %215 = arith.divf %213, %214 : vector<8x1xf32>
    %216 = vector.broadcast %208 : vector<8x1xf32> to vector<8x8xf32>
    %217 = arith.subf %200, %216 : vector<8x8xf32>
    %cst_136 = arith.constant 9.99999997E-7 : f32
    %218 = vector.broadcast %cst_136 : f32 to vector<8x1xf32>
    %219 = arith.addf %215, %218 : vector<8x1xf32>
    %220 = math.rsqrt %219 : vector<8x1xf32>
    %221 = vector.broadcast %220 : vector<8x1xf32> to vector<8x8xf32>
    %222 = arith.mulf %217, %221 : vector<8x8xf32>
    %223 = vector.broadcast %203 : vector<1x8xf32> to vector<8x8xf32>
    %224 = arith.mulf %222, %223 : vector<8x8xf32>
    %225 = vector.broadcast %204 : vector<1x8xf32> to vector<8x8xf32>
    %226 = arith.addf %224, %225 : vector<8x8xf32>
    %227 = arith.truncf %226 : vector<8x8xf32> to vector<8x8xbf16>
    %c3 = arith.constant 3 : index
    %c0_137 = arith.constant 0 : index
    %c0_138 = arith.constant 0 : index
    %228 = vector.load %arg11[%c3, %c0_137, %c0_138] : memref<4x8x8xbf16, #tpu.memory_space<vmem>>, vector<1x8x8xbf16>
    %229 = vector.shape_cast %228 : vector<1x8x8xbf16> to vector<8x8xbf16>
    %cst_139 = arith.constant dense<0.000000e+00> : vector<8x8xf32>
    %230 = tpu.matmul %229, %227, %cst_139 {dimension_numbers = #tpu.dot_dimension_numbers<[1], [1], [0], [0], [0, 0, 1, 0], [], []>} : vector<8x8xbf16>, vector<8x8xbf16>, vector<8x8xf32> -> vector<8x8xf32>
    %c3_140 = arith.constant 3 : index
    %c0_141 = arith.constant 0 : index
    %c0_142 = arith.constant 0 : index
    %231 = vector.load %arg12[%c3_140, %c0_141, %c0_142] : memref<4x8x1xf32, #tpu.memory_space<vmem>>, vector<1x8x1xf32>
    %232 = vector.shape_cast %231 : vector<1x8x1xf32> to vector<8x1xf32>
    %cst_143 = arith.constant dense<0xFF800000> : vector<8xf32>
    %233 = vector.multi_reduction <maximumf>, %230, %cst_143 [1] : vector<8x8xf32> to vector<8xf32>
    %234 = vector.shape_cast %233 : vector<8xf32> to vector<8x1xf32>
    %235 = arith.maximumf %232, %234 : vector<8x1xf32>
    %236 = arith.subf %232, %235 : vector<8x1xf32>
    %237 = math.exp %236 : vector<8x1xf32>
    %238 = vector.broadcast %235 : vector<8x1xf32> to vector<8x8xf32>
    %239 = arith.subf %230, %238 : vector<8x8xf32>
    %240 = math.exp %239 : vector<8x8xf32>
    %c3_144 = arith.constant 3 : index
    %c0_145 = arith.constant 0 : index
    %c0_146 = arith.constant 0 : index
    %241 = vector.load %arg13[%c3_144, %c0_145, %c0_146] : memref<4x8x1xf32, #tpu.memory_space<vmem>>, vector<1x8x1xf32>
    %242 = vector.shape_cast %241 : vector<1x8x1xf32> to vector<8x1xf32>
    %243 = arith.mulf %237, %242 : vector<8x1xf32>
    %cst_147 = arith.constant dense<0.000000e+00> : vector<8xf32>
    %244 = vector.multi_reduction <add>, %240, %cst_147 [1] : vector<8x8xf32> to vector<8xf32>
    %245 = vector.shape_cast %244 : vector<8xf32> to vector<8x1xf32>
    %246 = arith.addf %243, %245 : vector<8x1xf32>
    %c3_148 = arith.constant 3 : index
    %c0_149 = arith.constant 0 : index
    %c0_150 = arith.constant 0 : index
    %247 = vector.load %arg13[%c3_148, %c0_149, %c0_150] : memref<4x8x1xf32, #tpu.memory_space<vmem>>, vector<1x8x1xf32>
    %248 = vector.shape_cast %247 : vector<1x8x1xf32> to vector<8x1xf32>
    %249 = vector.shape_cast %246 : vector<8x1xf32> to vector<1x8x1xf32>
    tpu.vector_store %arg13[%c3_148, %c0_149, %c0_150], %249 {strides = array<i32>} : memref<4x8x1xf32, #tpu.memory_space<vmem>>, vector<1x8x1xf32>,
    %c3_151 = arith.constant 3 : index
    %c0_152 = arith.constant 0 : index
    %c0_153 = arith.constant 0 : index
    %250 = vector.load %arg14[%c3_151, %c0_152, %c0_153] : memref<4x8x8xf32, #tpu.memory_space<vmem>>, vector<1x8x8xf32>
    %251 = vector.shape_cast %250 : vector<1x8x8xf32> to vector<8x8xf32>
    %252 = vector.broadcast %237 : vector<8x1xf32> to vector<8x8xf32>
    %253 = arith.mulf %252, %251 : vector<8x8xf32>
    %254 = arith.truncf %240 : vector<8x8xf32> to vector<8x8xbf16>
    %cst_154 = arith.constant dense<0.000000e+00> : vector<8x8xf32>
    %255 = tpu.matmul %254, %202, %cst_154 {dimension_numbers = #tpu.dot_dimension_numbers<[1], [0], [0], [1], [0, 0, 1, 1], [], []>} : vector<8x8xbf16>, vector<8x8xbf16>, vector<8x8xf32> -> vector<8x8xf32>
    %256 = arith.addf %253, %255 : vector<8x8xf32>
    %c3_155 = arith.constant 3 : index
    %c0_156 = arith.constant 0 : index
    %c0_157 = arith.constant 0 : index
    %257 = vector.load %arg14[%c3_155, %c0_156, %c0_157] : memref<4x8x8xf32, #tpu.memory_space<vmem>>, vector<1x8x8xf32>
    %258 = vector.shape_cast %257 : vector<1x8x8xf32> to vector<8x8xf32>
    %259 = vector.shape_cast %256 : vector<8x8xf32> to vector<1x8x8xf32>
    tpu.vector_store %arg14[%c3_155, %c0_156, %c0_157], %259 {strides = array<i32>} : memref<4x8x8xf32, #tpu.memory_space<vmem>>, vector<1x8x8xf32>,
    %c3_158 = arith.constant 3 : index
    %c0_159 = arith.constant 0 : index
    %c0_160 = arith.constant 0 : index
    %260 = vector.load %arg12[%c3_158, %c0_159, %c0_160] : memref<4x8x1xf32, #tpu.memory_space<vmem>>, vector<1x8x1xf32>
    %261 = vector.shape_cast %260 : vector<1x8x1xf32> to vector<8x1xf32>
    %262 = vector.shape_cast %235 : vector<8x1xf32> to vector<1x8x1xf32>
    tpu.vector_store %arg12[%c3_158, %c0_159, %c0_160], %262 {strides = array<i32>} : memref<4x8x1xf32, #tpu.memory_space<vmem>>, vector<1x8x1xf32>,
    %c0_i32_161 = arith.constant 0 : i32
    %263 = arith.cmpi eq, %arg2, %c0_i32_161 : i32
    %264 = arith.extui %263 : i1 to i32
    %c0_i32_162 = arith.constant 0 : i32
    %265 = arith.cmpi ne, %264, %c0_i32_162 : i32
    scf.if %265 {
      %c0_163 = arith.constant 0 : index
      %c0_164 = arith.constant 0 : index
      %c0_165 = arith.constant 0 : index
      %266 = vector.load %arg13[%c0_163, %c0_164, %c0_165] : memref<4x8x1xf32, #tpu.memory_space<vmem>>, vector<1x8x1xf32>
      %267 = vector.shape_cast %266 : vector<1x8x1xf32> to vector<8x1xf32>
      %268 = tpu.reciprocal %267 {approx = true} : vector<8x1xf32> -> vector<8x1xf32>
      %c0_166 = arith.constant 0 : index
      %c0_167 = arith.constant 0 : index
      %c0_168 = arith.constant 0 : index
      %269 = vector.load %arg14[%c0_166, %c0_167, %c0_168] : memref<4x8x8xf32, #tpu.memory_space<vmem>>, vector<1x8x8xf32>
      %270 = vector.shape_cast %269 : vector<1x8x8xf32> to vector<8x8xf32>
      %271 = vector.broadcast %268 : vector<8x1xf32> to vector<8x8xf32>
      %272 = arith.mulf %270, %271 : vector<8x8xf32>
      %273 = arith.truncf %272 : vector<8x8xf32> to vector<8x8xbf16>
      %c1_169 = arith.constant 1 : index
      %c0_170 = arith.constant 0 : index
      %c0_171 = arith.constant 0 : index
      %274 = vector.load %arg13[%c1_169, %c0_170, %c0_171] : memref<4x8x1xf32, #tpu.memory_space<vmem>>, vector<1x8x1xf32>
      %275 = vector.shape_cast %274 : vector<1x8x1xf32> to vector<8x1xf32>
      %276 = tpu.reciprocal %275 {approx = true} : vector<8x1xf32> -> vector<8x1xf32>
      %c1_172 = arith.constant 1 : index
      %c0_173 = arith.constant 0 : index
      %c0_174 = arith.constant 0 : index
      %277 = vector.load %arg14[%c1_172, %c0_173, %c0_174] : memref<4x8x8xf32, #tpu.memory_space<vmem>>, vector<1x8x8xf32>
      %278 = vector.shape_cast %277 : vector<1x8x8xf32> to vector<8x8xf32>
      %279 = vector.broadcast %276 : vector<8x1xf32> to vector<8x8xf32>
      %280 = arith.mulf %278, %279 : vector<8x8xf32>
      %281 = arith.truncf %280 : vector<8x8xf32> to vector<8x8xbf16>
      %c2_175 = arith.constant 2 : index
      %c0_176 = arith.constant 0 : index
      %c0_177 = arith.constant 0 : index
      %282 = vector.load %arg13[%c2_175, %c0_176, %c0_177] : memref<4x8x1xf32, #tpu.memory_space<vmem>>, vector<1x8x1xf32>
      %283 = vector.shape_cast %282 : vector<1x8x1xf32> to vector<8x1xf32>
      %284 = tpu.reciprocal %283 {approx = true} : vector<8x1xf32> -> vector<8x1xf32>
      %c2_178 = arith.constant 2 : index
      %c0_179 = arith.constant 0 : index
      %c0_180 = arith.constant 0 : index
      %285 = vector.load %arg14[%c2_178, %c0_179, %c0_180] : memref<4x8x8xf32, #tpu.memory_space<vmem>>, vector<1x8x8xf32>
      %286 = vector.shape_cast %285 : vector<1x8x8xf32> to vector<8x8xf32>
      %287 = vector.broadcast %284 : vector<8x1xf32> to vector<8x8xf32>
      %288 = arith.mulf %286, %287 : vector<8x8xf32>
      %289 = arith.truncf %288 : vector<8x8xf32> to vector<8x8xbf16>
      %c3_181 = arith.constant 3 : index
      %c0_182 = arith.constant 0 : index
      %c0_183 = arith.constant 0 : index
      %290 = vector.load %arg13[%c3_181, %c0_182, %c0_183] : memref<4x8x1xf32, #tpu.memory_space<vmem>>, vector<1x8x1xf32>
      %291 = vector.shape_cast %290 : vector<1x8x1xf32> to vector<8x1xf32>
      %292 = tpu.reciprocal %291 {approx = true} : vector<8x1xf32> -> vector<8x1xf32>
      %c3_184 = arith.constant 3 : index
      %c0_185 = arith.constant 0 : index
      %c0_186 = arith.constant 0 : index
      %293 = vector.load %arg14[%c3_184, %c0_185, %c0_186] : memref<4x8x8xf32, #tpu.memory_space<vmem>>, vector<1x8x8xf32>
      %294 = vector.shape_cast %293 : vector<1x8x8xf32> to vector<8x8xf32>
      %295 = vector.broadcast %292 : vector<8x1xf32> to vector<8x8xf32>
      %296 = arith.mulf %294, %295 : vector<8x8xf32>
      %297 = arith.truncf %296 : vector<8x8xf32> to vector<8x8xbf16>
      %298 = tpu.concatenate %273, %281, %289, %297 in 1 : vector<8x8xbf16>, vector<8x8xbf16>, vector<8x8xbf16>, vector<8x8xbf16> -> vector<8x32xbf16>
      %c0_187 = arith.constant 0 : index
      %c0_188 = arith.constant 0 : index
      %c0_189 = arith.constant 0 : index
      %299 = vector.load %arg10[%c0_187, %c0_188, %c0_189] : memref<1x8x32xbf16, #tpu.memory_space<vmem>>, vector<1x8x32xbf16>
      %300 = vector.shape_cast %299 : vector<1x8x32xbf16> to vector<8x32xbf16>
      %301 = vector.shape_cast %298 : vector<8x32xbf16> to vector<1x8x32xbf16>
      tpu.vector_store %arg10[%c0_187, %c0_188, %c0_189], %301 {strides = array<i32>} : memref<1x8x32xbf16, #tpu.memory_space<vmem>>, vector<1x8x32xbf16>,
    } else {
    }
    return
  }
  func.func @transform_0(%arg0: i32, %arg1: i32, %arg2: i32) -> (i32, i32, i32, i32) {
    %c0_i32 = arith.constant 0 : i32
    %c0_i32_0 = arith.constant 0 : i32
    %c0_i32_1 = arith.constant 0 : i32
    return %c0_i32, %arg0, %arg1, %c0_i32_0 : i32, i32, i32, i32
  }
  func.func @transform_1(%arg0: i32, %arg1: i32, %arg2: i32) -> (i32, i32, i32, i32) {
    %c1_i32 = arith.constant 1 : i32
    %c0_i32 = arith.constant 0 : i32
    %c0_i32_0 = arith.constant 0 : i32
    return %c1_i32, %arg0, %arg2, %c0_i32 : i32, i32, i32, i32
  }
  func.func @transform_2(%arg0: i32, %arg1: i32, %arg2: i32) -> (i32, i32, i32, i32) {
    %c2_i32 = arith.constant 2 : i32
    %c0_i32 = arith.constant 0 : i32
    %c0_i32_0 = arith.constant 0 : i32
    return %c2_i32, %arg0, %arg2, %c0_i32 : i32, i32, i32, i32
  }
  func.func @transform_3(%arg0: i32, %arg1: i32, %arg2: i32) -> (i32, i32) {
    %c0_i32 = arith.constant 0 : i32
    %c0_i32_0 = arith.constant 0 : i32
    %c0_i32_1 = arith.constant 0 : i32
    return %c0_i32, %c0_i32_0 : i32, i32
  }
  func.func @transform_4(%arg0: i32, %arg1: i32, %arg2: i32) -> (i32, i32) {
    %c0_i32 = arith.constant 0 : i32
    %c0_i32_0 = arith.constant 0 : i32
    %c0_i32_1 = arith.constant 0 : i32
    return %c0_i32, %c0_i32_0 : i32, i32
  }
  func.func @transform_5(%arg0: i32, %arg1: i32, %arg2: i32) -> (i32, i32) {
    %c0_i32 = arith.constant 0 : i32
    %c0_i32_0 = arith.constant 0 : i32
    %c0_i32_1 = arith.constant 0 : i32
    return %c0_i32, %c0_i32_0 : i32, i32
  }
  func.func @transform_6(%arg0: i32, %arg1: i32, %arg2: i32) -> (i32, i32) {
    %c0_i32 = arith.constant 0 : i32
    %c0_i32_0 = arith.constant 0 : i32
    %c0_i32_1 = arith.constant 0 : i32
    return %c0_i32, %c0_i32_0 : i32, i32
  }
  func.func @transform_7(%arg0: i32, %arg1: i32, %arg2: i32) -> (i32, i32, i32) {
    %c0_i32 = arith.constant 0 : i32
    %c0_i32_0 = arith.constant 0 : i32
    return %arg0, %arg1, %c0_i32 : i32, i32, i32
  }
}

module attributes {stable_mosaic.version = 11 : i64} {
  func.func @_linear_res_kernel(%arg0: i32, %arg1: i32, %arg2: i32, %arg3: memref<16x128xbf16, #tpu.memory_space<vmem>>, %arg4: memref<128x32xbf16, #tpu.memory_space<vmem>>, %arg5: memref<1x32xf32, #tpu.memory_space<vmem>>, %arg6: memref<16x32xf32, #tpu.memory_space<vmem>>, %arg7: memref<16x32xf32, #tpu.memory_space<vmem>>) attributes {dimension_semantics = [#tpu.dimension_semantics<parallel>, #tpu.dimension_semantics<parallel>, #tpu.dimension_semantics<arbitrary>], iteration_bounds = array<i64: 1, 1, 1>, scalar_prefetch = 0 : i64, scratch_operands = 0 : i64, tpu.core_type = #tpu.core_type<tc>, window_params = [{transform_indices = @transform_0, window_bounds = array<i64: 16, 128>}, {transform_indices = @transform_1, window_bounds = array<i64: 128, 32>}, {transform_indices = @transform_2, window_bounds = array<i64: 1, 32>}, {transform_indices = @transform_3, window_bounds = array<i64: 16, 32>}, {transform_indices = @transform_4, window_bounds = array<i64: 16, 32>}]} {
    %c0_i32 = arith.constant 0 : i32
    %0 = arith.cmpi eq, %arg2, %c0_i32 : i32
    %1 = arith.extui %0 : i1 to i32
    %c0_i32_0 = arith.constant 0 : i32
    %2 = arith.cmpi ne, %1, %c0_i32_0 : i32
    scf.if %2 {
      %cst_10 = arith.constant 0.000000e+00 : f32
      %12 = vector.broadcast %cst_10 : f32 to vector<16x32xf32>
      %c0_11 = arith.constant 0 : index
      %c0_12 = arith.constant 0 : index
      %13 = vector.load %arg7[%c0_11, %c0_12] : memref<16x32xf32, #tpu.memory_space<vmem>>, vector<16x32xf32>
      tpu.vector_store %arg7[%c0_11, %c0_12], %12 {strides = array<i32>} : memref<16x32xf32, #tpu.memory_space<vmem>>, vector<16x32xf32>,
    } else {
    }
    %c0 = arith.constant 0 : index
    %c0_1 = arith.constant 0 : index
    %3 = vector.load %arg7[%c0, %c0_1] : memref<16x32xf32, #tpu.memory_space<vmem>>, vector<16x32xf32>
    %c0_2 = arith.constant 0 : index
    %c0_3 = arith.constant 0 : index
    %4 = vector.load %arg3[%c0_2, %c0_3] : memref<16x128xbf16, #tpu.memory_space<vmem>>, vector<16x128xbf16>
    %c0_4 = arith.constant 0 : index
    %c0_5 = arith.constant 0 : index
    %5 = vector.load %arg4[%c0_4, %c0_5] : memref<128x32xbf16, #tpu.memory_space<vmem>>, vector<128x32xbf16>
    %cst = arith.constant dense<0.000000e+00> : vector<16x32xf32>
    %6 = tpu.matmul %4, %5, %cst {dimension_numbers = #tpu.dot_dimension_numbers<[1], [0], [0], [1], [0, 0, 1, 1], [], []>} : vector<16x128xbf16>, vector<128x32xbf16>, vector<16x32xf32> -> vector<16x32xf32>
    %7 = arith.addf %3, %6 : vector<16x32xf32>
    %c0_6 = arith.constant 0 : index
    %c0_7 = arith.constant 0 : index
    %8 = vector.load %arg7[%c0_6, %c0_7] : memref<16x32xf32, #tpu.memory_space<vmem>>, vector<16x32xf32>
    tpu.vector_store %arg7[%c0_6, %c0_7], %7 {strides = array<i32>} : memref<16x32xf32, #tpu.memory_space<vmem>>, vector<16x32xf32>,
    %c0_i32_8 = arith.constant 0 : i32
    %9 = arith.cmpi eq, %arg2, %c0_i32_8 : i32
    %10 = arith.extui %9 : i1 to i32
    %c0_i32_9 = arith.constant 0 : i32
    %11 = arith.cmpi ne, %10, %c0_i32_9 : i32
    scf.if %11 {
      %c0_10 = arith.constant 0 : index
      %c0_11 = arith.constant 0 : index
      %12 = vector.load %arg7[%c0_10, %c0_11] : memref<16x32xf32, #tpu.memory_space<vmem>>, vector<16x32xf32>
      %c0_12 = arith.constant 0 : index
      %c0_13 = arith.constant 0 : index
      %13 = vector.load %arg5[%c0_12, %c0_13] : memref<1x32xf32, #tpu.memory_space<vmem>>, vector<1x32xf32>
      %c0_14 = arith.constant 0 : index
      %c0_15 = arith.constant 0 : index
      %14 = vector.load %arg6[%c0_14, %c0_15] : memref<16x32xf32, #tpu.memory_space<vmem>>, vector<16x32xf32>
      %15 = vector.broadcast %13 : vector<1x32xf32> to vector<16x32xf32>
      %16 = arith.addf %15, %14 : vector<16x32xf32>
      %17 = arith.addf %12, %16 : vector<16x32xf32>
      %c0_16 = arith.constant 0 : index
      %c0_17 = arith.constant 0 : index
      %18 = vector.load %arg7[%c0_16, %c0_17] : memref<16x32xf32, #tpu.memory_space<vmem>>, vector<16x32xf32>
      tpu.vector_store %arg7[%c0_16, %c0_17], %17 {strides = array<i32>} : memref<16x32xf32, #tpu.memory_space<vmem>>, vector<16x32xf32>,
    } else {
    }
    return
  }
  func.func @transform_0(%arg0: i32, %arg1: i32, %arg2: i32) -> (i32, i32) {
    %c0_i32 = arith.constant 0 : i32
    return %arg0, %arg2 : i32, i32
  }
  func.func @transform_1(%arg0: i32, %arg1: i32, %arg2: i32) -> (i32, i32) {
    %c0_i32 = arith.constant 0 : i32
    return %arg2, %arg1 : i32, i32
  }
  func.func @transform_2(%arg0: i32, %arg1: i32, %arg2: i32) -> (i32, i32) {
    %c0_i32 = arith.constant 0 : i32
    %c0_i32_0 = arith.constant 0 : i32
    return %c0_i32, %arg1 : i32, i32
  }
  func.func @transform_3(%arg0: i32, %arg1: i32, %arg2: i32) -> (i32, i32) {
    %c0_i32 = arith.constant 0 : i32
    return %arg0, %arg1 : i32, i32
  }
  func.func @transform_4(%arg0: i32, %arg1: i32, %arg2: i32) -> (i32, i32) {
    %c0_i32 = arith.constant 0 : i32
    return %arg0, %arg1 : i32, i32
  }
}

module attributes {stable_mosaic.version = 11 : i64} {
  func.func @_ln_linear_kernel(%arg0: i32, %arg1: i32, %arg2: i32, %arg3: memref<16x32xf32, #tpu.memory_space<vmem>>, %arg4: memref<1x32xf32, #tpu.memory_space<vmem>>, %arg5: memref<1x32xf32, #tpu.memory_space<vmem>>, %arg6: memref<1x32x32xbf16, #tpu.memory_space<vmem>>, %arg7: memref<1x1x32xf32, #tpu.memory_space<vmem>>, %arg8: memref<1x16x32xbf16, #tpu.memory_space<vmem>>, %arg9: memref<16x32xbf16, #tpu.memory_space<vmem>>) attributes {dimension_semantics = [#tpu.dimension_semantics<parallel>, #tpu.dimension_semantics<arbitrary>, #tpu.dimension_semantics<arbitrary>], iteration_bounds = array<i64: 1, 3, 1>, scalar_prefetch = 0 : i64, scratch_operands = 1 : i64, tpu.core_type = #tpu.core_type<tc>, window_params = [{transform_indices = @transform_0, window_bounds = array<i64: 16, 32>}, {pipeline_mode = #tpu.pipeline_mode<synchronous>, transform_indices = @transform_1, window_bounds = array<i64: 1, 32>}, {pipeline_mode = #tpu.pipeline_mode<synchronous>, transform_indices = @transform_2, window_bounds = array<i64: 1, 32>}, {transform_indices = @transform_3, window_bounds = array<i64: 1, 32, 32>}, {transform_indices = @transform_4, window_bounds = array<i64: 1, 1, 32>}, {transform_indices = @transform_5, window_bounds = array<i64: 1, 16, 32>}]} {
    %c0_i32 = arith.constant 0 : i32
    %0 = arith.cmpi eq, %arg1, %c0_i32 : i32
    %c0_i32_0 = arith.constant 0 : i32
    %1 = arith.cmpi eq, %arg2, %c0_i32_0 : i32
    %2 = arith.andi %0, %1 : i1
    %3 = arith.extui %2 : i1 to i32
    %c0_i32_1 = arith.constant 0 : i32
    %4 = arith.cmpi ne, %3, %c0_i32_1 : i32
    scf.if %4 {
      %c0_12 = arith.constant 0 : index
      %c0_13 = arith.constant 0 : index
      %17 = vector.load %arg3[%c0_12, %c0_13] : memref<16x32xf32, #tpu.memory_space<vmem>>, vector<16x32xf32>
      %cst_14 = arith.constant dense<0.000000e+00> : vector<16xf32>
      %18 = vector.multi_reduction <add>, %17, %cst_14 [1] : vector<16x32xf32> to vector<16xf32>
      %19 = vector.shape_cast %18 : vector<16xf32> to vector<16x1xf32>
      %cst_15 = arith.constant 3.200000e+01 : f32
      %20 = vector.broadcast %cst_15 : f32 to vector<16x1xf32>
      %21 = arith.divf %19, %20 : vector<16x1xf32>
      %22 = vector.broadcast %21 : vector<16x1xf32> to vector<16x32xf32>
      %23 = arith.subf %17, %22 : vector<16x32xf32>
      %24 = arith.mulf %23, %23 : vector<16x32xf32>
      %cst_16 = arith.constant dense<0.000000e+00> : vector<16xf32>
      %25 = vector.multi_reduction <add>, %24, %cst_16 [1] : vector<16x32xf32> to vector<16xf32>
      %26 = vector.shape_cast %25 : vector<16xf32> to vector<16x1xf32>
      %cst_17 = arith.constant 3.200000e+01 : f32
      %27 = vector.broadcast %cst_17 : f32 to vector<16x1xf32>
      %28 = arith.divf %26, %27 : vector<16x1xf32>
      %29 = vector.broadcast %21 : vector<16x1xf32> to vector<16x32xf32>
      %30 = arith.subf %17, %29 : vector<16x32xf32>
      %cst_18 = arith.constant 9.99999997E-7 : f32
      %31 = vector.broadcast %cst_18 : f32 to vector<16x1xf32>
      %32 = arith.addf %28, %31 : vector<16x1xf32>
      %33 = math.rsqrt %32 : vector<16x1xf32>
      %34 = vector.broadcast %33 : vector<16x1xf32> to vector<16x32xf32>
      %35 = arith.mulf %30, %34 : vector<16x32xf32>
      %c0_19 = arith.constant 0 : index
      %c0_20 = arith.constant 0 : index
      %36 = vector.load %arg4[%c0_19, %c0_20] : memref<1x32xf32, #tpu.memory_space<vmem>>, vector<1x32xf32>
      %37 = vector.broadcast %36 : vector<1x32xf32> to vector<16x32xf32>
      %38 = arith.mulf %35, %37 : vector<16x32xf32>
      %c0_21 = arith.constant 0 : index
      %c0_22 = arith.constant 0 : index
      %39 = vector.load %arg5[%c0_21, %c0_22] : memref<1x32xf32, #tpu.memory_space<vmem>>, vector<1x32xf32>
      %40 = vector.broadcast %39 : vector<1x32xf32> to vector<16x32xf32>
      %41 = arith.addf %38, %40 : vector<16x32xf32>
      %42 = arith.truncf %41 : vector<16x32xf32> to vector<16x32xbf16>
      %c0_23 = arith.constant 0 : index
      %c0_24 = arith.constant 0 : index
      %43 = vector.load %arg9[%c0_23, %c0_24] : memref<16x32xbf16, #tpu.memory_space<vmem>>, vector<16x32xbf16>
      tpu.vector_store %arg9[%c0_23, %c0_24], %42 {strides = array<i32>} : memref<16x32xbf16, #tpu.memory_space<vmem>>, vector<16x32xbf16>,
    } else {
    }
    %c0 = arith.constant 0 : index
    %c0_2 = arith.constant 0 : index
    %5 = vector.load %arg9[%c0, %c0_2] : memref<16x32xbf16, #tpu.memory_space<vmem>>, vector<16x32xbf16>
    %c0_3 = arith.constant 0 : index
    %c0_4 = arith.constant 0 : index
    %c0_5 = arith.constant 0 : index
    %6 = vector.load %arg6[%c0_3, %c0_4, %c0_5] : memref<1x32x32xbf16, #tpu.memory_space<vmem>>, vector<1x32x32xbf16>
    %7 = vector.shape_cast %6 : vector<1x32x32xbf16> to vector<32x32xbf16>
    %cst = arith.constant dense<0.000000e+00> : vector<16x32xf32>
    %8 = tpu.matmul %5, %7, %cst {dimension_numbers = #tpu.dot_dimension_numbers<[1], [0], [0], [1], [0, 0, 1, 1], [], []>} : vector<16x32xbf16>, vector<32x32xbf16>, vector<16x32xf32> -> vector<16x32xf32>
    %c0_6 = arith.constant 0 : index
    %c0_7 = arith.constant 0 : index
    %c0_8 = arith.constant 0 : index
    %9 = vector.load %arg7[%c0_6, %c0_7, %c0_8] : memref<1x1x32xf32, #tpu.memory_space<vmem>>, vector<1x1x32xf32>
    %10 = vector.shape_cast %9 : vector<1x1x32xf32> to vector<1x32xf32>
    %11 = vector.broadcast %10 : vector<1x32xf32> to vector<16x32xf32>
    %12 = arith.addf %8, %11 : vector<16x32xf32>
    %13 = arith.truncf %12 : vector<16x32xf32> to vector<16x32xbf16>
    %c0_9 = arith.constant 0 : index
    %c0_10 = arith.constant 0 : index
    %c0_11 = arith.constant 0 : index
    %14 = vector.load %arg8[%c0_9, %c0_10, %c0_11] : memref<1x16x32xbf16, #tpu.memory_space<vmem>>, vector<1x16x32xbf16>
    %15 = vector.shape_cast %14 : vector<1x16x32xbf16> to vector<16x32xbf16>
    %16 = vector.shape_cast %13 : vector<16x32xbf16> to vector<1x16x32xbf16>
    tpu.vector_store %arg8[%c0_9, %c0_10, %c0_11], %16 {strides = array<i32>} : memref<1x16x32xbf16, #tpu.memory_space<vmem>>, vector<1x16x32xbf16>,
    return
  }
  func.func @transform_0(%arg0: i32, %arg1: i32, %arg2: i32) -> (i32, i32) {
    %c0_i32 = arith.constant 0 : i32
    %c0_i32_0 = arith.constant 0 : i32
    return %arg0, %c0_i32 : i32, i32
  }
  func.func @transform_1(%arg0: i32, %arg1: i32, %arg2: i32) -> (i32, i32) {
    %c0_i32 = arith.constant 0 : i32
    %c0_i32_0 = arith.constant 0 : i32
    %c0_i32_1 = arith.constant 0 : i32
    return %c0_i32, %c0_i32_0 : i32, i32
  }
  func.func @transform_2(%arg0: i32, %arg1: i32, %arg2: i32) -> (i32, i32) {
    %c0_i32 = arith.constant 0 : i32
    %c0_i32_0 = arith.constant 0 : i32
    %c0_i32_1 = arith.constant 0 : i32
    return %c0_i32, %c0_i32_0 : i32, i32
  }
  func.func @transform_3(%arg0: i32, %arg1: i32, %arg2: i32) -> (i32, i32, i32) {
    %c0_i32 = arith.constant 0 : i32
    %c0_i32_0 = arith.constant 0 : i32
    return %arg1, %c0_i32, %arg2 : i32, i32, i32
  }
  func.func @transform_4(%arg0: i32, %arg1: i32, %arg2: i32) -> (i32, i32, i32) {
    %c0_i32 = arith.constant 0 : i32
    %c0_i32_0 = arith.constant 0 : i32
    return %arg1, %c0_i32, %arg2 : i32, i32, i32
  }
  func.func @transform_5(%arg0: i32, %arg1: i32, %arg2: i32) -> (i32, i32, i32) {
    %c0_i32 = arith.constant 0 : i32
    return %arg1, %arg0, %arg2 : i32, i32, i32
  }
}

module attributes {stable_mosaic.version = 11 : i64} {
  func.func @_linear_res_kernel(%arg0: i32, %arg1: i32, %arg2: i32, %arg3: memref<16x128xbf16, #tpu.memory_space<vmem>>, %arg4: memref<128x32xbf16, #tpu.memory_space<vmem>>, %arg5: memref<1x32xf32, #tpu.memory_space<vmem>>, %arg6: memref<16x32xf32, #tpu.memory_space<vmem>>, %arg7: memref<16x32xf32, #tpu.memory_space<vmem>>) attributes {dimension_semantics = [#tpu.dimension_semantics<parallel>, #tpu.dimension_semantics<parallel>, #tpu.dimension_semantics<arbitrary>], iteration_bounds = array<i64: 1, 1, 1>, scalar_prefetch = 0 : i64, scratch_operands = 0 : i64, tpu.core_type = #tpu.core_type<tc>, window_params = [{transform_indices = @transform_0, window_bounds = array<i64: 16, 128>}, {transform_indices = @transform_1, window_bounds = array<i64: 128, 32>}, {transform_indices = @transform_2, window_bounds = array<i64: 1, 32>}, {transform_indices = @transform_3, window_bounds = array<i64: 16, 32>}, {transform_indices = @transform_4, window_bounds = array<i64: 16, 32>}]} {
    %c0_i32 = arith.constant 0 : i32
    %0 = arith.cmpi eq, %arg2, %c0_i32 : i32
    %1 = arith.extui %0 : i1 to i32
    %c0_i32_0 = arith.constant 0 : i32
    %2 = arith.cmpi ne, %1, %c0_i32_0 : i32
    scf.if %2 {
      %cst_10 = arith.constant 0.000000e+00 : f32
      %12 = vector.broadcast %cst_10 : f32 to vector<16x32xf32>
      %c0_11 = arith.constant 0 : index
      %c0_12 = arith.constant 0 : index
      %13 = vector.load %arg7[%c0_11, %c0_12] : memref<16x32xf32, #tpu.memory_space<vmem>>, vector<16x32xf32>
      tpu.vector_store %arg7[%c0_11, %c0_12], %12 {strides = array<i32>} : memref<16x32xf32, #tpu.memory_space<vmem>>, vector<16x32xf32>,
    } else {
    }
    %c0 = arith.constant 0 : index
    %c0_1 = arith.constant 0 : index
    %3 = vector.load %arg7[%c0, %c0_1] : memref<16x32xf32, #tpu.memory_space<vmem>>, vector<16x32xf32>
    %c0_2 = arith.constant 0 : index
    %c0_3 = arith.constant 0 : index
    %4 = vector.load %arg3[%c0_2, %c0_3] : memref<16x128xbf16, #tpu.memory_space<vmem>>, vector<16x128xbf16>
    %c0_4 = arith.constant 0 : index
    %c0_5 = arith.constant 0 : index
    %5 = vector.load %arg4[%c0_4, %c0_5] : memref<128x32xbf16, #tpu.memory_space<vmem>>, vector<128x32xbf16>
    %cst = arith.constant dense<0.000000e+00> : vector<16x32xf32>
    %6 = tpu.matmul %4, %5, %cst {dimension_numbers = #tpu.dot_dimension_numbers<[1], [0], [0], [1], [0, 0, 1, 1], [], []>} : vector<16x128xbf16>, vector<128x32xbf16>, vector<16x32xf32> -> vector<16x32xf32>
    %7 = arith.addf %3, %6 : vector<16x32xf32>
    %c0_6 = arith.constant 0 : index
    %c0_7 = arith.constant 0 : index
    %8 = vector.load %arg7[%c0_6, %c0_7] : memref<16x32xf32, #tpu.memory_space<vmem>>, vector<16x32xf32>
    tpu.vector_store %arg7[%c0_6, %c0_7], %7 {strides = array<i32>} : memref<16x32xf32, #tpu.memory_space<vmem>>, vector<16x32xf32>,
    %c0_i32_8 = arith.constant 0 : i32
    %9 = arith.cmpi eq, %arg2, %c0_i32_8 : i32
    %10 = arith.extui %9 : i1 to i32
    %c0_i32_9 = arith.constant 0 : i32
    %11 = arith.cmpi ne, %10, %c0_i32_9 : i32
    scf.if %11 {
      %c0_10 = arith.constant 0 : index
      %c0_11 = arith.constant 0 : index
      %12 = vector.load %arg7[%c0_10, %c0_11] : memref<16x32xf32, #tpu.memory_space<vmem>>, vector<16x32xf32>
      %c0_12 = arith.constant 0 : index
      %c0_13 = arith.constant 0 : index
      %13 = vector.load %arg5[%c0_12, %c0_13] : memref<1x32xf32, #tpu.memory_space<vmem>>, vector<1x32xf32>
      %c0_14 = arith.constant 0 : index
      %c0_15 = arith.constant 0 : index
      %14 = vector.load %arg6[%c0_14, %c0_15] : memref<16x32xf32, #tpu.memory_space<vmem>>, vector<16x32xf32>
      %15 = vector.broadcast %13 : vector<1x32xf32> to vector<16x32xf32>
      %16 = arith.addf %15, %14 : vector<16x32xf32>
      %17 = arith.addf %12, %16 : vector<16x32xf32>
      %c0_16 = arith.constant 0 : index
      %c0_17 = arith.constant 0 : index
      %18 = vector.load %arg7[%c0_16, %c0_17] : memref<16x32xf32, #tpu.memory_space<vmem>>, vector<16x32xf32>
      tpu.vector_store %arg7[%c0_16, %c0_17], %17 {strides = array<i32>} : memref<16x32xf32, #tpu.memory_space<vmem>>, vector<16x32xf32>,
    } else {
    }
    return
  }
  func.func @transform_0(%arg0: i32, %arg1: i32, %arg2: i32) -> (i32, i32) {
    %c0_i32 = arith.constant 0 : i32
    return %arg0, %arg2 : i32, i32
  }
  func.func @transform_1(%arg0: i32, %arg1: i32, %arg2: i32) -> (i32, i32) {
    %c0_i32 = arith.constant 0 : i32
    return %arg2, %arg1 : i32, i32
  }
  func.func @transform_2(%arg0: i32, %arg1: i32, %arg2: i32) -> (i32, i32) {
    %c0_i32 = arith.constant 0 : i32
    %c0_i32_0 = arith.constant 0 : i32
    return %c0_i32, %arg1 : i32, i32
  }
  func.func @transform_3(%arg0: i32, %arg1: i32, %arg2: i32) -> (i32, i32) {
    %c0_i32 = arith.constant 0 : i32
    return %arg0, %arg1 : i32, i32
  }
  func.func @transform_4(%arg0: i32, %arg1: i32, %arg2: i32) -> (i32, i32) {
    %c0_i32 = arith.constant 0 : i32
    return %arg0, %arg1 : i32, i32
  }
}

</mosaic_0001>

<llo_original>
// kernel: transformer.12
$region0: #{transformer.12}
  #allocation0 [shape = 'u32[]', space=smem, size = 0x4, offset = 0x4, fixed_abs, tag = 'smem constant byte address 0x4 - core index']
  #allocation1 [shape = 'u32[144,128]{1,0:T(1,128)}', space=vmem, size = 0x12000, scoped, tag = 'internal scratch']
  %s0 = inlined_call_operand.vmem [shape: bf16[16,32], index: 0, kind: input, shape index: {}]
  %s1 = inlined_call_operand.vmem [shape: bf16[32,32], index: 1, kind: input, shape index: {}]
  %s2 = inlined_call_operand.vmem [shape: f32[1,32], index: 2, kind: input, shape index: {}]
  %s3 = inlined_call_operand.vmem [shape: f32[16,32], index: 3, kind: input, shape index: {}]
  %s4 = inlined_call_operand.vmem [shape: f32[16,32], index: 4, kind: output, shape index: {}]
  %s5 = sld [smem:[#allocation0]]
  $region34: #{transformer.12} parent=0
    _
  %s7 = ssub.s32 1, %s5
  %s8 = scalar_select 0, %s7, %s5
  // Predicated region
  $region2: #{transformer.12} parent=0 // pred_check
    _
  $region3: #{transformer.12} parent=0 // pred_check_branch
    %10 = sbr.rel (0) target = $region5
  $region4: #{transformer.12} parent=0 // pred_region
    _
  $region5: #{transformer.12} parent=0 // pred_fallthru
    _
  // Predicated region
  $region6: #{transformer.12} parent=0 // pred_check
    _
  $region7: #{transformer.12} parent=0 // pred_check_branch
    %12 = sbr.rel (0) target = $region9
  $region8: #{transformer.12} parent=0 // pred_region
    _
  $region9: #{transformer.12} parent=0 // pred_fallthru
    _
  // Predicated region
  $region10: #{transformer.12} parent=0 // pred_check
    _
  $region11: #{transformer.12} parent=0 // pred_check_branch
    %14 = sbr.rel (0) target = $region13
  $region12: #{transformer.12} parent=0 // pred_region
    _
  $region13: #{transformer.12} parent=0 // pred_fallthru
    _
  // Predicated region
  $region14: #{transformer.12} parent=0 // pred_check
    _
  $region15: #{transformer.12} parent=0 // pred_check_branch
    %16 = sbr.rel (0) target = $region17
  $region16: #{transformer.12} parent=0 // pred_region
    _
  $region17: #{transformer.12} parent=0 // pred_fallthru
    _
  %p18 = scmp.eq.s32.totalorder 0, 0
  // Predicated region
  $region18: #{transformer.12} parent=0 // pred_check
    %p19 = pneg %p18
  $region19: #{transformer.12} parent=0 // pred_check_branch
    %21 = sbr.rel (%p19) target = $region21
  $region20: #{transformer.12} parent=0 // pred_region
    %vm22 = vcmask 261120
    %23 = vst.msk [vmem:[%s4] sm:$0xff] %vm22, 0.0
    %24 = vst.msk [vmem:[%s4 + $0x8] sm:$0xff] %vm22, 0.0
  $region21: #{transformer.12} parent=0 // pred_fallthru
    _
  %v25 = vld [vmem:[%s4] sm:$0xff]
  %v26 = vld [vmem:[%s4 + $0x8] sm:$0xff]
  %v27 = vld [vmem:[%s0] sm:$0xf]
  %v28 = vld [vmem:[%s0 + $0x4] sm:$0xf]
  %v29 = vld [vmem:[%s1] sm:$0xf]
  %v30 = vld [vmem:[%s1 + $0x4] sm:$0xf]
  %v31 = vld [vmem:[%s1 + $0x8] sm:$0xf]
  %v32 = vld [vmem:[%s1 + $0xc] sm:$0xf]
  %v35 = vunpack.c.l.b16 %v27
  %v36 = vunpack.c.l.b16 %v28
  %v37 = vpack.c.b16 %v36, %v35
  %v42 = vunpack.c.l.b16 %v29
  %v43 = vunpack.c.l.b16 %v30
  %v44 = vunpack.c.l.b16 %v31
  %v45 = vunpack.c.l.b16 %v32
  %v46 = vpack.c.b16 %v43, %v42
  %v47 = vpack.c.b16 %v45, %v44
  %vm50 = vcmask 261120
  %v52 = vsel %vm50, %v37, 0
  %54 = vmatprep.subr.bf16.mxu0 0
  %55 = vmatpush1.bf16.msra.mxu0 %v46
  %56 = vmatprep.subr.bf16.mxu0 0
  %57 = vmatpush1.bf16.msra.mxu0 %v47
  %58 = vmatprep.subr.bf16.mxu0 0
  %59 = vmatpush1.bf16.msra.mxu0 0
  %60 = vmatprep.subr.bf16.mxu0 0
  %61 = vmatpush1.bf16.msra.mxu0 0
  %62 = vmatprep.subr.bf16.mxu0 0
  %63 = vmatpush1.bf16.msra.mxu0 0
  %64 = vmatprep.subr.bf16.mxu0 0
  %65 = vmatpush1.bf16.msra.mxu0 0
  %66 = vmatprep.subr.bf16.mxu0 0
  %67 = vmatpush1.bf16.msra.mxu0 0
  %68 = vmatprep.subr.bf16.mxu0 0
  %69 = vmatpush1.bf16.msra.mxu0 0
  %70 = vmatprep.subr.bf16.mxu0 0
  %71 = vmatpush1.bf16.msra.mxu0 0
  %72 = vmatprep.subr.bf16.mxu0 0
  %73 = vmatpush1.bf16.msra.mxu0 0
  %74 = vmatprep.subr.bf16.mxu0 0
  %75 = vmatpush1.bf16.msra.mxu0 0
  %76 = vmatprep.subr.bf16.mxu0 0
  %77 = vmatpush1.bf16.msra.mxu0 0
  %78 = vmatprep.subr.bf16.mxu0 0
  %79 = vmatpush1.bf16.msra.mxu0 0
  %80 = vmatprep.subr.bf16.mxu0 0
  %81 = vmatpush1.bf16.msra.mxu0 0
  %82 = vmatprep.subr.bf16.mxu0 0
  %83 = vmatpush1.bf16.msra.mxu0 0
  %84 = vmatprep.subr.bf16.mxu0 0
  %85 = vmatpush1.bf16.msra.mxu0 0
  %86 = vmatprep.mubr.bf16.mxu0 0
  %87 = vmatmul.mubr.bf16.gmra.mrb[0].mxu0 %v52
  %v88 = vpop.f32.mrb[0].mxu0
  %v89 = vadd.f32 0.0, %v88
  %v90 = vpop.f32.mrb[0].mxu0
  %v91 = vpop.f32.mrb[0].mxu0
  %v92 = vadd.f32 0.0, %v91
  %v93 = vpop.f32.mrb[0].mxu0
  %94 = vdwg.mxu0
  %v95 = vadd.f32 %v25, %v89
  %v96 = vadd.f32 %v26, %v92
  %97 = vst.msk [vmem:[%s4] sm:$0xff] %vm50, %v95
  %98 = vst.msk [vmem:[%s4 + $0x8] sm:$0xff] %vm50, %v96
  // Predicated region
  $region22: #{transformer.12} parent=0 // pred_check
    %p99 = pneg %p18
  $region23: #{transformer.12} parent=0 // pred_check_branch
    %101 = sbr.rel (%p99) target = $region25
  $region24: #{transformer.12} parent=0 // pred_region
    %v102 = vld [vmem:[%s4] sm:$0xff]
    %v103 = vld [vmem:[%s4 + $0x8] sm:$0xff]
    %v104 = vld [vmem:[%s2] sm:$0x1]
    %v105 = vld [vmem:[%s3] sm:$0xff]
    %v106 = vld [vmem:[%s3 + $0x8] sm:$0xff]
    %v108 = vlaneseq
    %v109 = vshrl.u32 %v108, 7
    %v110 = vsub.s32 0, %v109
    %v111 = vrot.slane %v104, %v110
    %v113 = vadd.f32 %v111, %v105
    %v114 = vadd.f32 %v111, %v106
    %v115 = vadd.f32 %v102, %v113
    %v116 = vadd.f32 %v103, %v114
    %117 = vst.msk [vmem:[%s4] sm:$0xff] %vm50, %v115
    %118 = vst.msk [vmem:[%s4 + $0x8] sm:$0xff] %vm50, %v116
  $region25: #{transformer.12} parent=0 // pred_fallthru
    _
  // Predicated region
  $region26: #{transformer.12} parent=0 // pred_check
    _
  $region27: #{transformer.12} parent=0 // pred_check_branch
    %120 = sbr.rel (0) target = $region29
  $region28: #{transformer.12} parent=0 // pred_region
    _
  $region29: #{transformer.12} parent=0 // pred_fallthru
    _
  // Predicated region
  $region30: #{transformer.12} parent=0 // pred_check
    _
  $region31: #{transformer.12} parent=0 // pred_check_branch
    %122 = sbr.rel (0) target = $region33
  $region32: #{transformer.12} parent=0 // pred_region
    _
  $region33: #{transformer.12} parent=0 // pred_fallthru
    _

// kernel: transformer.10
$region0: #{transformer.10}
  #allocation0 [shape = 'u32[]', space=smem, size = 0x4, offset = 0x4, fixed_abs, tag = 'smem constant byte address 0x4 - core index']
  #allocation1 [shape = 'u32[144,128]{1,0:T(1,128)}', space=vmem, size = 0x12000, scoped, tag = 'internal scratch']
  #allocation2 [shape = 'bf16[16,32]{1,0:T(16,128)(2,1)}', space=vmem, size = 0x1000, scoped, tag = 'scratch operand']
  %s0 = inlined_call_operand.hbm [shape: f32[16,32], index: 0, kind: input, shape index: {}]
  %s1 = inlined_call_operand.vmem [shape: f32[1,32], index: 1, kind: input, shape index: {}]
  %s2 = inlined_call_operand.vmem [shape: f32[1,32], index: 2, kind: input, shape index: {}]
  %s3 = inlined_call_operand.vmem [shape: bf16[3,32,32], index: 3, kind: input, shape index: {}]
  %s4 = inlined_call_operand.vmem [shape: f32[3,1,32], index: 4, kind: input, shape index: {}]
  %s5 = inlined_call_operand.vmem [shape: bf16[3,16,32], index: 5, kind: output, shape index: {}]
  %s6 = sld [smem:[#allocation0]]
  $region61: #{transformer.10} parent=0
    _
  %s8 = ssub.s32 1, %s6
  %s9 = scalar_select 0, %s8, %s6
  $region1: #{transformer.10} parent=0
    #allocation3 [shape = 'u8[8192]{0}', space=vmem, size = 0x2000, scoped, tag = 'input window, operand 0, single buffered']
    #allocation4 [shape = 's32[2]{0}', space=sflag, size = 0x8, scoped, tag = 'scoped memory for transformer.10']
    %10 = vsyncpa [#allocation4], 0
    loop: start=0, step=1, limit=5
    $region2: #{transformer.10} parent=1 // loop_pre_header
      _
    $region3: #{transformer.10} parent=1 // loop_header
      %s12 = sphi 0, %s16
      %p13 = scmp.ge.s32.totalorder %s12, 5
      %s19 = sphi 0, %s38
      %s20 = sphi 0, %s34
      %s21 = sphi 0, %s30
      %s22 = sphi 0, %s19
      %s23 = sphi 0, %s20
      %s24 = sphi 0, %s21
      %s25 = sphi 0, %s22
      %s26 = sphi 0, %s23
      %s27 = sphi 0, %s24
      %s41 = sphi 0, %s43
      %s44 = sphi 0, %s41
      %s45 = sphi 0, %s44
      %s61 = sphi 0, %s45
      %s65 = sphi 0, %s65
      %s67 = sphi 0, %s65
      %s68 = sphi 0, %s67
      %s82 = sphi 0, %s68
      %s86 = sphi 0, %s86
      %s88 = sphi 0, %s86
      %s89 = sphi 0, %s88
      %s103 = sphi 0, %s89
      %s111 = sphi 0, %s113
      %s114 = sphi 0, %s111
      %s115 = sphi 0, %s114
      %s131 = sphi 0, %s115
      %s139 = sphi 0, %s141
      %s142 = sphi 0, %s139
      %s143 = sphi 0, %s142
      %s159 = sphi 0, %s143
      %s169 = sphi 0, %s171
      %s172 = sphi 0, %s169
      %s173 = sphi 0, %s172
      %s189 = sphi 0, %s173
    $region4: #{transformer.10} parent=1 // loop_header_branch
      %15 = sbr.rel (%p13) target = $region8
    $region5: #{transformer.10} parent=1 // loop_body
      %s17 = ssub.s32 %s12, 1
      %s18 = ssub.s32 %s12, 2
      %s28 = sadd.s32 1, %s21
      %p29 = scmp.ge.s32.totalorder %s28, 1
      %s30 = scalar_select %p29, 0, %s28
      %s31 = sadd.s32 1, %s20
      %s32 = scalar_select %p29, %s31, %s20
      %p33 = scmp.ge.s32.totalorder %s32, 3
      %s34 = scalar_select %p33, 0, %s32
      %s35 = sadd.s32 1, %s19
      %s36 = scalar_select %p33, %s35, %s19
      %p37 = scmp.ge.s32.totalorder %s36, 1
      %s38 = scalar_select %p37, 0, %s36
      %s39 = ssub.s32 %s19, %s38
      %p40 = scmp.eq.s32.totalorder %s39, 0
      %s42 = sadd.s32 %s41, 1
      %s43 = scalar_select %p40, %s41, %s42
      %p46 = pneg %p40
      %p47 = scmp.eq.s32.totalorder %s12, 2
      %p48 = por %p46, %p47
      %p49 = scmp.ne.s32.totalorder %s41, %s44
      %p50 = scmp.eq.s32.totalorder %s12, 0
      %p51 = por %p49, %p50
      %p52 = scmp.ne.s32.totalorder %s41, %s44
      %p53 = scmp.eq.s32.totalorder %s17, 2
      %p54 = por %p52, %p53
      %p55 = scmp.ne.s32.totalorder %s44, %s45
      %p56 = scmp.eq.s32.totalorder %s17, 0
      %p57 = por %p55, %p56
      %p58 = scmp.ne.s32.totalorder %s44, %s45
      %p59 = scmp.eq.s32.totalorder %s18, 2
      %p60 = por %p58, %p59
      %p62 = scmp.ne.s32.totalorder %s45, %s61
      %p63 = scmp.eq.s32.totalorder %s18, 0
      %p64 = por %p62, %p63
      %s66 = sadd.s32 %s65, 1
      %p69 = scmp.eq.s32.totalorder %s12, 2
      %p70 = scmp.ne.s32.totalorder %s65, %s67
      %p71 = scmp.eq.s32.totalorder %s12, 0
      %p72 = por %p70, %p71
      %p73 = scmp.ne.s32.totalorder %s65, %s67
      %p74 = scmp.eq.s32.totalorder %s17, 2
      %p75 = por %p73, %p74
      %p76 = scmp.ne.s32.totalorder %s67, %s68
      %p77 = scmp.eq.s32.totalorder %s17, 0
      %p78 = por %p76, %p77
      %p79 = scmp.ne.s32.totalorder %s67, %s68
      %p80 = scmp.eq.s32.totalorder %s18, 2
      %p81 = por %p79, %p80
      %p83 = scmp.ne.s32.totalorder %s68, %s82
      %p84 = scmp.eq.s32.totalorder %s18, 0
      %p85 = por %p83, %p84
      %s87 = sadd.s32 %s86, 1
      %p90 = scmp.eq.s32.totalorder %s12, 2
      %p91 = scmp.ne.s32.totalorder %s86, %s88
      %p92 = scmp.eq.s32.totalorder %s12, 0
      %p93 = por %p91, %p92
      %p94 = scmp.ne.s32.totalorder %s86, %s88
      %p95 = scmp.eq.s32.totalorder %s17, 2
      %p96 = por %p94, %p95
      %p97 = scmp.ne.s32.totalorder %s88, %s89
      %p98 = scmp.eq.s32.totalorder %s17, 0
      %p99 = por %p97, %p98
      %p100 = scmp.ne.s32.totalorder %s88, %s89
      %p101 = scmp.eq.s32.totalorder %s18, 2
      %p102 = por %p100, %p101
      %p104 = scmp.ne.s32.totalorder %s89, %s103
      %p105 = scmp.eq.s32.totalorder %s18, 0
      %p106 = por %p104, %p105
      %s107 = ssub.s32 %s20, %s34
      %s108 = ssub.s32 %s21, %s30
      %s109 = sor.u32 %s107, %s108
      %p110 = scmp.eq.s32.totalorder %s109, 0
      %s112 = sadd.s32 %s111, 1
      %s113 = scalar_select %p110, %s111, %s112
      %p116 = pneg %p110
      %p117 = scmp.eq.s32.totalorder %s12, 2
      %p118 = por %p116, %p117
      %p119 = scmp.ne.s32.totalorder %s111, %s114
      %p120 = scmp.eq.s32.totalorder %s12, 0
      %p121 = por %p119, %p120
      %p122 = scmp.ne.s32.totalorder %s111, %s114
      %p123 = scmp.eq.s32.totalorder %s17, 2
      %p124 = por %p122, %p123
      %p125 = scmp.ne.s32.totalorder %s114, %s115
      %p126 = scmp.eq.s32.totalorder %s17, 0
      %p127 = por %p125, %p126
      %p128 = scmp.ne.s32.totalorder %s114, %s115
      %p129 = scmp.eq.s32.totalorder %s18, 2
      %p130 = por %p128, %p129
      %p132 = scmp.ne.s32.totalorder %s115, %s131
      %p133 = scmp.eq.s32.totalorder %s18, 0
      %p134 = por %p132, %p133
      %s135 = ssub.s32 %s20, %s34
      %s136 = ssub.s32 %s21, %s30
      %s137 = sor.u32 %s135, %s136
      %p138 = scmp.eq.s32.totalorder %s137, 0
      %s140 = sadd.s32 %s139, 1
      %s141 = scalar_select %p138, %s139, %s140
      %p144 = pneg %p138
      %p145 = scmp.eq.s32.totalorder %s12, 2
      %p146 = por %p144, %p145
      %p147 = scmp.ne.s32.totalorder %s139, %s142
      %p148 = scmp.eq.s32.totalorder %s12, 0
      %p149 = por %p147, %p148
      %p150 = scmp.ne.s32.totalorder %s139, %s142
      %p151 = scmp.eq.s32.totalorder %s17, 2
      %p152 = por %p150, %p151
      %p153 = scmp.ne.s32.totalorder %s142, %s143
      %p154 = scmp.eq.s32.totalorder %s17, 0
      %p155 = por %p153, %p154
      %p156 = scmp.ne.s32.totalorder %s142, %s143
      %p157 = scmp.eq.s32.totalorder %s18, 2
      %p158 = por %p156, %p157
      %p160 = scmp.ne.s32.totalorder %s143, %s159
      %p161 = scmp.eq.s32.totalorder %s18, 0
      %p162 = por %p160, %p161
      %s163 = ssub.s32 %s20, %s34
      %s164 = ssub.s32 %s19, %s38
      %s165 = sor.u32 %s163, %s164
      %s166 = ssub.s32 %s21, %s30
      %s167 = sor.u32 %s165, %s166
      %p168 = scmp.eq.s32.totalorder %s167, 0
      %s170 = sadd.s32 %s169, 1
      %s171 = scalar_select %p168, %s169, %s170
      %p174 = pneg %p168
      %p175 = scmp.eq.s32.totalorder %s12, 2
      %p176 = por %p174, %p175
      %p177 = scmp.ne.s32.totalorder %s169, %s172
      %p178 = scmp.eq.s32.totalorder %s12, 0
      %p179 = por %p177, %p178
      %p180 = scmp.ne.s32.totalorder %s169, %s172
      %p181 = scmp.eq.s32.totalorder %s17, 2
      %p182 = por %p180, %p181
      %p183 = scmp.ne.s32.totalorder %s172, %s173
      %p184 = scmp.eq.s32.totalorder %s17, 0
      %p185 = por %p183, %p184
      %p186 = scmp.ne.s32.totalorder %s172, %s173
      %p187 = scmp.eq.s32.totalorder %s18, 2
      %p188 = por %p186, %p187
      %p190 = scmp.ne.s32.totalorder %s173, %s189
      %p191 = scmp.eq.s32.totalorder %s18, 0
      %p192 = por %p190, %p191
      %p193 = scmp.le.s32.totalorder 1, %s12
      %p194 = scmp.lt.s32.totalorder %s12, 4
      %p195 = pnand %p193, %p194
      %p196 = pneg %p195
      // Predicated region
      $region9: #{transformer.10} parent=5 // pred_check
        _
      $region10: #{transformer.10} parent=5 // pred_check_branch
        %198 = sbr.rel (%p195) target = $region12
      $region11: #{transformer.10} parent=5 // pred_region
        %s199 = ssub.s32 %s12, 1
        // Predicated region
        $region13: #{transformer.10} parent=11 // pred_check
          %p200 = pneg %p57
        $region14: #{transformer.10} parent=11 // pred_check_branch
          %202 = sbr.rel (%p200) target = $region16
        $region15: #{transformer.10} parent=11 // pred_region
          %s203 = smul.u32 2, %s22
          %s205 = ssub.s32 256, 256
          %206 = vsyncadd [#allocation4], %s205
          %s207 = smul.addr %s203, 128
          %s208 = scalar_lea.hbm %s0, %s207
          %s209 = sshll.u32 [#allocation3], 4
          %s210 = int_to_ptr.vmem [resolvable:$true] %s209
          %215 = dma.hbm_to_vmem [thread:$0]  %s208, 256, %s210, [#allocation4], 128, 128, 8
        $region16: #{transformer.10} parent=11 // pred_fallthru
          _
        // Predicated region
        $region17: #{transformer.10} parent=11 // pred_check
          %p216 = pneg %p78
        $region18: #{transformer.10} parent=11 // pred_check_branch
          %218 = sbr.rel (%p216) target = $region20
        $region19: #{transformer.10} parent=11 // pred_region
          _
        $region20: #{transformer.10} parent=11 // pred_fallthru
          _
        // Predicated region
        $region21: #{transformer.10} parent=11 // pred_check
          %p219 = pneg %p99
        $region22: #{transformer.10} parent=11 // pred_check_branch
          %221 = sbr.rel (%p219) target = $region24
        $region23: #{transformer.10} parent=11 // pred_region
          _
        $region24: #{transformer.10} parent=11 // pred_fallthru
          _
      $region12: #{transformer.10} parent=5 // pred_fallthru
        _
      %p222 = scmp.lt.s32.totalorder %s12, 3
      // Predicated region
      $region25: #{transformer.10} parent=5 // pred_check
        %p223 = pneg %p222
      $region26: #{transformer.10} parent=5 // pred_check_branch
        %225 = sbr.rel (%p223) target = $region28
      $region27: #{transformer.10} parent=5 // pred_region
        // Predicated region
        $region29: #{transformer.10} parent=27 // pred_check
          %p226 = pneg %p121
        $region30: #{transformer.10} parent=27 // pred_check_branch
          %228 = sbr.rel (%p226) target = $region32
        $region31: #{transformer.10} parent=27 // pred_region
          %p229 = scmp.lt.s32.totalorder %s20, 2
          %s230 = scalar_select %p229, %s20, 2
          %p231 = scmp.lt.s32.totalorder %s21, 0
          %s232 = scalar_select %p231, %s21, 0
          %s233 = smul.addr %s230, 4
          %s234 = sadd.s32 %s232, %s233
          %s235 = smul.addr %s234, 4
          %s236 = scalar_lea.vmem %s3, %s235
        $region32: #{transformer.10} parent=27 // pred_fallthru
          _
        // Predicated region
        $region33: #{transformer.10} parent=27 // pred_check
          %p237 = pneg %p149
        $region34: #{transformer.10} parent=27 // pred_check_branch
          %239 = sbr.rel (%p237) target = $region36
        $region35: #{transformer.10} parent=27 // pred_region
          %p240 = scmp.lt.s32.totalorder %s20, 2
          %s241 = scalar_select %p240, %s20, 2
          %p242 = scmp.lt.s32.totalorder %s21, 0
          %s243 = scalar_select %p242, %s21, 0
          %s244 = sadd.s32 %s243, %s241
          %s245 = scalar_lea.vmem %s4, %s244
        $region36: #{transformer.10} parent=27 // pred_fallthru
          _
      $region28: #{transformer.10} parent=5 // pred_fallthru
        _
      %p246 = scmp.le.s32.totalorder 1, %s12
      %p247 = scmp.lt.s32.totalorder %s12, 4
      %p248 = pnand %p246, %p247
      %p249 = pneg %p248
      // Predicated region
      $region37: #{transformer.10} parent=5 // pred_check
        _
      $region38: #{transformer.10} parent=5 // pred_check_branch
        %251 = sbr.rel (%p248) target = $region40
      $region39: #{transformer.10} parent=5 // pred_region
        %s252 = ssub.s32 %s12, 1
        // Predicated region
        $region41: #{transformer.10} parent=39 // pred_check
          %p253 = pneg %p57
        $region42: #{transformer.10} parent=39 // pred_check_branch
          %255 = sbr.rel (%p253) target = $region44
        $region43: #{transformer.10} parent=39 // pred_region
          %256 = dma.done [#allocation4], 256
        $region44: #{transformer.10} parent=39 // pred_fallthru
          _
        %p257 = pneg %p57
        %p258 = pneg %p54
        %p259 = pneg %p78
        %p260 = pneg %p75
        %p261 = pneg %p99
        %p262 = pneg %p96
        %p263 = scmp.lt.s32.totalorder %s23, 2
        %s264 = scalar_select %p263, %s23, 2
        %p265 = scmp.lt.s32.totalorder %s24, 0
        %s266 = scalar_select %p265, %s24, 0
        %s267 = smul.addr %s264, 4
        %s268 = sadd.s32 %s266, %s267
        %s269 = smul.addr %s268, 4
        %s270 = scalar_lea.vmem %s3, %s269
        %p271 = pneg %p127
        %p272 = pneg %p124
        %p273 = scmp.lt.s32.totalorder %s23, 2
        %s274 = scalar_select %p273, %s23, 2
        %p275 = scmp.lt.s32.totalorder %s24, 0
        %s276 = scalar_select %p275, %s24, 0
        %s277 = sadd.s32 %s276, %s274
        %s278 = scalar_lea.vmem %s4, %s277
        %p279 = pneg %p155
        %p280 = pneg %p152
        %p281 = pneg %p185
        %p282 = pneg %p182
        %s283 = smul.u32 2, %s22
        %p284 = scmp.lt.s32.totalorder %s23, 2
        %s285 = scalar_select %p284, %s23, 2
        %p286 = scmp.lt.s32.totalorder %s283, 1
        %s287 = scalar_select %p286, %s283, 1
        %p288 = scmp.lt.s32.totalorder %s24, 0
        %s289 = scalar_select %p288, %s24, 0
        %s290 = sadd.s32 %s289, %s287
        %s291 = smul.addr %s285, 2
        %s292 = sadd.s32 %s290, %s291
        %s293 = smul.addr %s292, 4
        %s294 = scalar_lea.vmem %s5, %s293
        %s295 = smul.u32 2, %s22
        %p296 = scmp.lt.s32.totalorder %s23, 2
        %s297 = scalar_select %p296, %s23, 2
        %p298 = scmp.lt.s32.totalorder %s24, 0
        %s299 = scalar_select %p298, %s24, 0
        %s300 = smul.addr %s297, 4
        %s301 = sadd.s32 %s299, %s300
        %s302 = smul.addr %s301, 4
        %s303 = scalar_lea.vmem %s3, %s302
        %p304 = scmp.lt.s32.totalorder %s23, 2
        %s305 = scalar_select %p304, %s23, 2
        %p306 = scmp.lt.s32.totalorder %s24, 0
        %s307 = scalar_select %p306, %s24, 0
        %s308 = sadd.s32 %s307, %s305
        %s309 = scalar_lea.vmem %s4, %s308
        %s310 = smul.u32 2, %s22
        %p311 = scmp.lt.s32.totalorder %s23, 2
        %s312 = scalar_select %p311, %s23, 2
        %p313 = scmp.lt.s32.totalorder %s310, 1
        %s314 = scalar_select %p313, %s310, 1
        %p315 = scmp.lt.s32.totalorder %s24, 0
        %s316 = scalar_select %p315, %s24, 0
        %s317 = sadd.s32 %s316, %s314
        %s318 = smul.addr %s312, 2
        %s319 = sadd.s32 %s317, %s318
        %s320 = smul.addr %s319, 4
        %s321 = scalar_lea.vmem %s5, %s320
        %s322 = smul.u32 2, %s22
        %p324 = scmp.eq.s32.totalorder %s23, 0
        %p325 = scmp.eq.s32.totalorder %s24, 0
        %p326 = pnand %p324, %p325
        %p327 = pneg %p326
        // Predicated region
        $region45: #{transformer.10} parent=39 // pred_check
          _
        $region46: #{transformer.10} parent=39 // pred_check_branch
          %329 = sbr.rel (%p326) target = $region48
        $region47: #{transformer.10} parent=39 // pred_region
          %v330 = vld [vmem:[#allocation3] sm:$0xff]
          %v331 = vld [vmem:[#allocation3 + $0x8] sm:$0xff]
          %vm332 = vcmask 261120
          %v333 = vsel %vm332, %v330, 0.0
          %334 = vadd.xlane.f32.xlu0 %v333
          %v335 = vpop.xlane.xlu0 %334
          %v336 = vsel %vm332, %v331, 0.0
          %337 = vadd.xlane.f32.xlu0 %v336
          %v338 = vpop.xlane.xlu0 %337
          %v339 = vrcp.pop 32.0
          %v340 = vmul.f32 %v335, %v339
          %v341 = vmul.f32 %v338, %v339
          %v342 = vsub.f32 %v330, %v340
          %v343 = vsub.f32 %v331, %v341
          %v344 = vmul.f32 %v342, %v342
          %v345 = vmul.f32 %v343, %v343
          %v346 = vsel %vm332, %v344, 0.0
          %347 = vadd.xlane.f32.xlu0 %v346
          %v348 = vpop.xlane.xlu0 %347
          %v349 = vsel %vm332, %v345, 0.0
          %350 = vadd.xlane.f32.xlu0 %v349
          %v351 = vpop.xlane.xlu0 %350
          %v352 = vmul.f32 %v348, %v339
          %v353 = vmul.f32 %v351, %v339
          %v354 = vadd.f32 %v352, 1e-06
          %v355 = vadd.f32 %v353, 1e-06
          %v356 = vrsqrt.pop %v354
          %v357 = vrsqrt.pop %v355
          %v358 = vmul.f32 %v342, %v356
          %v359 = vmul.f32 %v343, %v357
          %v360 = vld [vmem:[%s1] sm:$0x1]
          %v362 = vlaneseq
          %v363 = vshrl.u32 %v362, 7
          %v364 = vsub.s32 0, %v363
          %v365 = vrot.slane %v360, %v364
          %v367 = vmul.f32 %v358, %v365
          %v368 = vmul.f32 %v359, %v365
          %v369 = vld [vmem:[%s2] sm:$0x1]
          %v371 = vlaneseq
          %v372 = vshrl.u32 %v371, 7
          %v373 = vsub.s32 0, %v372
          %v374 = vrot.slane %v369, %v373
          %v376 = vadd.f32 %v367, %v374
          %v377 = vadd.f32 %v368, %v374
          %v378 = vpack.c.bf16 %v377, %v376
          %379 = vst.msk [vmem:[#allocation2] sm:$0xff] %vm332, %v378
        $region48: #{transformer.10} parent=39 // pred_fallthru
          _
        %v380 = vld [vmem:[#allocation2] sm:$0xff]
        %v381 = vld [vmem:[%s303] sm:$0xf]
        %v382 = vld [vmem:[%s303 + $0x4] sm:$0xf]
        %v383 = vld [vmem:[%s303 + $0x8] sm:$0xf]
        %v384 = vld [vmem:[%s303 + $0xc] sm:$0xf]
        %v385 = vld [vmem:[%s309] sm:$0x1]
        %v387 = vlaneseq
        %v388 = vshrl.u32 %v387, 7
        %v389 = vsub.s32 0, %v388
        %v390 = vrot.slane %v385, %v389
        %v396 = vunpack.c.l.b16 %v381
        %v397 = vunpack.c.l.b16 %v382
        %v398 = vunpack.c.l.b16 %v383
        %v399 = vunpack.c.l.b16 %v384
        %v400 = vpack.c.b16 %v397, %v396
        %v401 = vpack.c.b16 %v399, %v398
        %vm404 = vcmask 261120
        %v406 = vsel %vm404, %v380, 0
        %408 = vmatprep.subr.bf16.mxu0 0
        %409 = vmatpush1.bf16.msra.mxu0 %v400
        %410 = vmatprep.subr.bf16.mxu0 0
        %411 = vmatpush1.bf16.msra.mxu0 %v401
        %412 = vmatprep.subr.bf16.mxu0 0
        %413 = vmatpush1.bf16.msra.mxu0 0
        %414 = vmatprep.subr.bf16.mxu0 0
        %415 = vmatpush1.bf16.msra.mxu0 0
        %416 = vmatprep.subr.bf16.mxu0 0
        %417 = vmatpush1.bf16.msra.mxu0 0
        %418 = vmatprep.subr.bf16.mxu0 0
        %419 = vmatpush1.bf16.msra.mxu0 0
        %420 = vmatprep.subr.bf16.mxu0 0
        %421 = vmatpush1.bf16.msra.mxu0 0
        %422 = vmatprep.subr.bf16.mxu0 0
        %423 = vmatpush1.bf16.msra.mxu0 0
        %424 = vmatprep.subr.bf16.mxu0 0
        %425 = vmatpush1.bf16.msra.mxu0 0
        %426 = vmatprep.subr.bf16.mxu0 0
        %427 = vmatpush1.bf16.msra.mxu0 0
        %428 = vmatprep.subr.bf16.mxu0 0
        %429 = vmatpush1.bf16.msra.mxu0 0
        %430 = vmatprep.subr.bf16.mxu0 0
        %431 = vmatpush1.bf16.msra.mxu0 0
        %432 = vmatprep.subr.bf16.mxu0 0
        %433 = vmatpush1.bf16.msra.mxu0 0
        %434 = vmatprep.subr.bf16.mxu0 0
        %435 = vmatpush1.bf16.msra.mxu0 0
        %436 = vmatprep.subr.bf16.mxu0 0
        %437 = vmatpush1.bf16.msra.mxu0 0
        %438 = vmatprep.subr.bf16.mxu0 0
        %439 = vmatpush1.bf16.msra.mxu0 0
        %440 = vmatprep.mubr.bf16.mxu0 0
        %441 = vmatmul.mubr.bf16.gmra.mrb[0].mxu0 %v406
        %v442 = vpop.f32.mrb[0].mxu0
        %v443 = vadd.f32 %v390, %v442
        %v444 = vpop.f32.mrb[0].mxu0
        %v445 = vpop.f32.mrb[0].mxu0
        %v446 = vadd.f32 %v390, %v445
        %v447 = vpop.f32.mrb[0].mxu0
        %448 = vdwg.mxu0
        %v449 = vpack.c.bf16 %v446, %v443
        %v451 = vunpack.c.l.b16 %v449
        %v452 = vunpack.c.h.b16 %v449
        %v453 = vpack.c.b16 %v451, %v451
        %v454 = vpack.c.b16 %v452, %v452
        %vm457 = vcmask 257024
        %458 = vst.msk [vmem:[%s321] sm:$0xf] %vm457, %v453
        %459 = vst.msk [vmem:[%s321 + $0x4] sm:$0xf] %vm457, %v454
        %s460 = smul.u32 2, %s22
        %p461 = scmp.lt.s32.totalorder %s23, 2
        %s462 = scalar_select %p461, %s23, 2
        %p463 = scmp.lt.s32.totalorder %s460, 1
        %s464 = scalar_select %p463, %s460, 1
        %p465 = scmp.lt.s32.totalorder %s24, 0
        %s466 = scalar_select %p465, %s24, 0
        %s467 = sadd.s32 %s466, %s464
        %s468 = smul.addr %s462, 2
        %s469 = sadd.s32 %s467, %s468
        %s470 = smul.addr %s469, 4
        %s471 = scalar_lea.vmem %s5, %s470
        // Predicated region
        $region49: #{transformer.10} parent=39 // pred_check
          %p472 = pneg %p182
        $region50: #{transformer.10} parent=39 // pred_check_branch
          %474 = sbr.rel (%p472) target = $region52
        $region51: #{transformer.10} parent=39 // pred_region
          %s475 = smul.u32 2, %s22
        $region52: #{transformer.10} parent=39 // pred_fallthru
          _
      $region40: #{transformer.10} parent=5 // pred_fallthru
        _
      %p476 = scmp.le.s32.totalorder 2, %s12
      // Predicated region
      $region53: #{transformer.10} parent=5 // pred_check
        %p477 = pneg %p476
      $region54: #{transformer.10} parent=5 // pred_check_branch
        %479 = sbr.rel (%p477) target = $region56
      $region55: #{transformer.10} parent=5 // pred_region
        %s480 = ssub.s32 %s12, 2
        // Predicated region
        $region57: #{transformer.10} parent=55 // pred_check
          %p481 = pneg %p188
        $region58: #{transformer.10} parent=55 // pred_check_branch
          %483 = sbr.rel (%p481) target = $region60
        $region59: #{transformer.10} parent=55 // pred_region
          %s484 = smul.u32 2, %s25
          %p485 = scmp.lt.s32.totalorder %s26, 2
          %s486 = scalar_select %p485, %s26, 2
          %p487 = scmp.lt.s32.totalorder %s484, 1
          %s488 = scalar_select %p487, %s484, 1
          %p489 = scmp.lt.s32.totalorder %s27, 0
          %s490 = scalar_select %p489, %s27, 0
          %s491 = sadd.s32 %s490, %s488
          %s492 = smul.addr %s486, 2
          %s493 = sadd.s32 %s491, %s492
          %s494 = smul.addr %s493, 4
          %s495 = scalar_lea.vmem %s5, %s494
        $region60: #{transformer.10} parent=55 // pred_fallthru
          _
      $region56: #{transformer.10} parent=5 // pred_fallthru
        _
    $region6: #{transformer.10} parent=1 // loop_footer
      %s16 = sadd.s32 1, %s12
    $region7: #{transformer.10} parent=1 // loop_footer_branch
      %11 = sbr.rel target = $region3
    $region8: #{transformer.10} parent=1 // loop_exit
      _
    %496 = vsyncpa [#allocation4], 1
    %s497 = scalar_lea.sflag [#allocation4], 1
    %498 = vsyncpa %s497, 1

// kernel: transformer.13
$region0: #{transformer.13}
  #allocation0 [shape = 'u32[]', space=smem, size = 0x4, offset = 0x4, fixed_abs, tag = 'smem constant byte address 0x4 - core index']
  #allocation1 [shape = 'u32[144,128]{1,0:T(1,128)}', space=vmem, size = 0x12000, scoped, tag = 'internal scratch']
  #allocation2 [shape = 'bf16[16,32]{1,0:T(16,128)(2,1)}', space=vmem, size = 0x1000, scoped, tag = 'scratch operand']
  %s0 = inlined_call_operand.vmem [shape: f32[16,32], index: 0, kind: input, shape index: {}]
  %s1 = inlined_call_operand.vmem [shape: f32[1,32], index: 1, kind: input, shape index: {}]
  %s2 = inlined_call_operand.vmem [shape: f32[1,32], index: 2, kind: input, shape index: {}]
  %s3 = inlined_call_operand.vmem [shape: bf16[1,32,128], index: 3, kind: input, shape index: {}]
  %s4 = inlined_call_operand.vmem [shape: f32[1,1,128], index: 4, kind: input, shape index: {}]
  %s5 = inlined_call_operand.vmem [shape: bf16[1,16,128], index: 5, kind: output, shape index: {}]
  %s6 = sld [smem:[#allocation0]]
  $region34: #{transformer.13} parent=0
    _
  %s8 = ssub.s32 1, %s6
  %s9 = scalar_select 0, %s8, %s6
  // Predicated region
  $region2: #{transformer.13} parent=0 // pred_check
    _
  $region3: #{transformer.13} parent=0 // pred_check_branch
    %11 = sbr.rel (0) target = $region5
  $region4: #{transformer.13} parent=0 // pred_region
    _
  $region5: #{transformer.13} parent=0 // pred_fallthru
    _
  // Predicated region
  $region6: #{transformer.13} parent=0 // pred_check
    _
  $region7: #{transformer.13} parent=0 // pred_check_branch
    %13 = sbr.rel (0) target = $region9
  $region8: #{transformer.13} parent=0 // pred_region
    _
  $region9: #{transformer.13} parent=0 // pred_fallthru
    _
  // Predicated region
  $region10: #{transformer.13} parent=0 // pred_check
    _
  $region11: #{transformer.13} parent=0 // pred_check_branch
    %15 = sbr.rel (0) target = $region13
  $region12: #{transformer.13} parent=0 // pred_region
    _
  $region13: #{transformer.13} parent=0 // pred_fallthru
    _
  // Predicated region
  $region14: #{transformer.13} parent=0 // pred_check
    _
  $region15: #{transformer.13} parent=0 // pred_check_branch
    %17 = sbr.rel (0) target = $region17
  $region16: #{transformer.13} parent=0 // pred_region
    _
  $region17: #{transformer.13} parent=0 // pred_fallthru
    _
  // Predicated region
  $region18: #{transformer.13} parent=0 // pred_check
    _
  $region19: #{transformer.13} parent=0 // pred_check_branch
    %19 = sbr.rel (0) target = $region21
  $region20: #{transformer.13} parent=0 // pred_region
    _
  $region21: #{transformer.13} parent=0 // pred_fallthru
    _
  %p21 = scmp.eq.s32.totalorder 0, 0
  %p22 = scmp.eq.s32.totalorder 0, 0
  %p23 = pnand %p21, %p22
  %p24 = pneg %p23
  // Predicated region
  $region22: #{transformer.13} parent=0 // pred_check
    _
  $region23: #{transformer.13} parent=0 // pred_check_branch
    %26 = sbr.rel (%p23) target = $region25
  $region24: #{transformer.13} parent=0 // pred_region
    %v27 = vld [vmem:[%s0] sm:$0xff]
    %v28 = vld [vmem:[%s0 + $0x8] sm:$0xff]
    %vm29 = vcmask 261120
    %v30 = vsel %vm29, %v27, 0.0
    %31 = vadd.xlane.f32.xlu0 %v30
    %v32 = vpop.xlane.xlu0 %31
    %v33 = vsel %vm29, %v28, 0.0
    %34 = vadd.xlane.f32.xlu0 %v33
    %v35 = vpop.xlane.xlu0 %34
    %v36 = vrcp.pop 32.0
    %v37 = vmul.f32 %v32, %v36
    %v38 = vmul.f32 %v35, %v36
    %v39 = vsub.f32 %v27, %v37
    %v40 = vsub.f32 %v28, %v38
    %v41 = vmul.f32 %v39, %v39
    %v42 = vmul.f32 %v40, %v40
    %v43 = vsel %vm29, %v41, 0.0
    %44 = vadd.xlane.f32.xlu0 %v43
    %v45 = vpop.xlane.xlu0 %44
    %v46 = vsel %vm29, %v42, 0.0
    %47 = vadd.xlane.f32.xlu0 %v46
    %v48 = vpop.xlane.xlu0 %47
    %v49 = vmul.f32 %v45, %v36
    %v50 = vmul.f32 %v48, %v36
    %v51 = vadd.f32 %v49, 1e-06
    %v52 = vadd.f32 %v50, 1e-06
    %v53 = vrsqrt.pop %v51
    %v54 = vrsqrt.pop %v52
    %v55 = vmul.f32 %v39, %v53
    %v56 = vmul.f32 %v40, %v54
    %v57 = vld [vmem:[%s1] sm:$0x1]
    %v59 = vlaneseq
    %v60 = vshrl.u32 %v59, 7
    %v61 = vsub.s32 0, %v60
    %v62 = vrot.slane %v57, %v61
    %v64 = vmul.f32 %v55, %v62
    %v65 = vmul.f32 %v56, %v62
    %v66 = vld [vmem:[%s2] sm:$0x1]
    %v68 = vlaneseq
    %v69 = vshrl.u32 %v68, 7
    %v70 = vsub.s32 0, %v69
    %v71 = vrot.slane %v66, %v70
    %v73 = vadd.f32 %v64, %v71
    %v74 = vadd.f32 %v65, %v71
    %v75 = vpack.c.bf16 %v74, %v73
    %76 = vst.msk [vmem:[#allocation2] sm:$0xff] %vm29, %v75
  $region25: #{transformer.13} parent=0 // pred_fallthru
    _
  %v77 = vld [vmem:[#allocation2] sm:$0xff]
  %v78 = vld [vmem:[%s3] sm:$0xf]
  %v79 = vld [vmem:[%s3 + $0x4] sm:$0xf]
  %v80 = vld [vmem:[%s3 + $0x8] sm:$0xf]
  %v81 = vld [vmem:[%s3 + $0xc] sm:$0xf]
  %v82 = vld [vmem:[%s4] sm:$0x1]
  %v84 = vlaneseq
  %v85 = vshrl.u32 %v84, 7
  %v86 = vsub.s32 0, %v85
  %v87 = vrot.slane %v82, %v86
  %v93 = vunpack.c.l.b16 %v78
  %v94 = vunpack.c.l.b16 %v79
  %v95 = vunpack.c.l.b16 %v80
  %v96 = vunpack.c.l.b16 %v81
  %v97 = vpack.c.b16 %v94, %v93
  %v98 = vpack.c.b16 %v96, %v95
  %vm101 = vcmask 261120
  %v103 = vsel %vm101, %v77, 0
  %105 = vmatprep.subr.bf16.mxu0 0
  %106 = vmatpush1.bf16.msra.mxu0 %v97
  %107 = vmatprep.subr.bf16.mxu0 0
  %108 = vmatpush1.bf16.msra.mxu0 %v98
  %109 = vmatprep.subr.bf16.mxu0 0
  %110 = vmatpush1.bf16.msra.mxu0 0
  %111 = vmatprep.subr.bf16.mxu0 0
  %112 = vmatpush1.bf16.msra.mxu0 0
  %113 = vmatprep.subr.bf16.mxu0 0
  %114 = vmatpush1.bf16.msra.mxu0 0
  %115 = vmatprep.subr.bf16.mxu0 0
  %116 = vmatpush1.bf16.msra.mxu0 0
  %117 = vmatprep.subr.bf16.mxu0 0
  %118 = vmatpush1.bf16.msra.mxu0 0
  %119 = vmatprep.subr.bf16.mxu0 0
  %120 = vmatpush1.bf16.msra.mxu0 0
  %121 = vmatprep.subr.bf16.mxu0 0
  %122 = vmatpush1.bf16.msra.mxu0 0
  %123 = vmatprep.subr.bf16.mxu0 0
  %124 = vmatpush1.bf16.msra.mxu0 0
  %125 = vmatprep.subr.bf16.mxu0 0
  %126 = vmatpush1.bf16.msra.mxu0 0
  %127 = vmatprep.subr.bf16.mxu0 0
  %128 = vmatpush1.bf16.msra.mxu0 0
  %129 = vmatprep.subr.bf16.mxu0 0
  %130 = vmatpush1.bf16.msra.mxu0 0
  %131 = vmatprep.subr.bf16.mxu0 0
  %132 = vmatpush1.bf16.msra.mxu0 0
  %133 = vmatprep.subr.bf16.mxu0 0
  %134 = vmatpush1.bf16.msra.mxu0 0
  %135 = vmatprep.subr.bf16.mxu0 0
  %136 = vmatpush1.bf16.msra.mxu0 0
  %137 = vmatprep.mubr.bf16.mxu0 0
  %138 = vmatmul.mubr.bf16.gmra.mrb[0].mxu0 %v103
  %v139 = vpop.f32.mrb[0].mxu0
  %v140 = vadd.f32 %v87, %v139
  %v141 = vpop.f32.mrb[0].mxu0
  %v142 = vpop.f32.mrb[0].mxu0
  %v143 = vadd.f32 %v87, %v142
  %v144 = vpop.f32.mrb[0].mxu0
  %145 = vdwg.mxu0
  %v146 = vmul.f32 %v140, 0.5
  %v147 = vmul.f32 %v143, 0.5
  %v148 = vmul.f32 %v140, 0.70710677
  %v149 = vmul.f32 %v143, 0.70710677
  %v150 = verf.f32.pop %v148
  %v151 = verf.f32.pop %v149
  %v152 = vadd.f32 %v150, 1.0
  %v153 = vadd.f32 %v151, 1.0
  %v154 = vmul.f32 %v146, %v152
  %v155 = vmul.f32 %v147, %v153
  %v156 = vpack.c.bf16 %v155, %v154
  %v158 = vunpack.c.l.b16 %v156
  %v159 = vunpack.c.h.b16 %v156
  %v160 = vpack.c.b16 %v158, %v158
  %v161 = vpack.c.b16 %v159, %v159
  %164 = vst [vmem:[%s5] sm:$0xf] %v160
  %165 = vst [vmem:[%s5 + $0x4] sm:$0xf] %v161
  // Predicated region
  $region26: #{transformer.13} parent=0 // pred_check
    _
  $region27: #{transformer.13} parent=0 // pred_check_branch
    %167 = sbr.rel (0) target = $region29
  $region28: #{transformer.13} parent=0 // pred_region
    _
  $region29: #{transformer.13} parent=0 // pred_fallthru
    _
  // Predicated region
  $region30: #{transformer.13} parent=0 // pred_check
    _
  $region31: #{transformer.13} parent=0 // pred_check_branch
    %169 = sbr.rel (0) target = $region33
  $region32: #{transformer.13} parent=0 // pred_region
    _
  $region33: #{transformer.13} parent=0 // pred_fallthru
    _

// kernel: transformer.11
$region0: #{transformer.11}
  #allocation0 [shape = 'u32[]', space=smem, size = 0x4, offset = 0x4, fixed_abs, tag = 'smem constant byte address 0x4 - core index']
  #allocation1 [shape = 'u32[144,128]{1,0:T(1,128)}', space=vmem, size = 0x12000, scoped, tag = 'internal scratch']
  #allocation2 [shape = 'bf16[4,8,8]{2,1,0:T(8,128)(2,1)}', space=vmem, size = 0x2000, scoped, tag = 'scratch operand']
  #allocation3 [shape = 'f32[4,8,1]{2,1,0:T(8,128)}', space=vmem, size = 0x4000, scoped, tag = 'scratch operand']
  #allocation4 [shape = 'f32[4,8,1]{2,1,0:T(8,128)}', space=vmem, size = 0x4000, scoped, tag = 'scratch operand']
  #allocation5 [shape = 'f32[4,8,8]{2,1,0:T(8,128)}', space=vmem, size = 0x4000, scoped, tag = 'scratch operand']
  %s0 = inlined_call_operand.vmem [shape: bf16[3,2,8,32], index: 0, kind: input, shape index: {}, may-alias: {0,1,2}]
  %s1 = inlined_call_operand.vmem [shape: bf16[3,2,8,32], index: 1, kind: input, shape index: {}, may-alias: {0,1,2}]
  %s2 = inlined_call_operand.vmem [shape: bf16[3,2,8,32], index: 2, kind: input, shape index: {}, may-alias: {0,1,2}]
  %s3 = inlined_call_operand.vmem [shape: f32[1,8], index: 3, kind: input, shape index: {}]
  %s4 = inlined_call_operand.vmem [shape: f32[1,8], index: 4, kind: input, shape index: {}]
  %s5 = inlined_call_operand.vmem [shape: f32[1,8], index: 5, kind: input, shape index: {}]
  %s6 = inlined_call_operand.vmem [shape: f32[1,8], index: 6, kind: input, shape index: {}]
  %s7 = inlined_call_operand.vmem [shape: bf16[2,8,32], index: 7, kind: output, shape index: {}]
  %s8 = sld [smem:[#allocation0]]
  $region69: #{transformer.11} parent=0
    _
  %s10 = ssub.s32 1, %s8
  %s11 = scalar_select 0, %s10, %s8
  loop: start=0, step=1, limit=4
  $region2: #{transformer.11} parent=0 // loop_pre_header
    _
  $region3: #{transformer.11} parent=0 // loop_header
    %s13 = sphi 0, %s17
    %p14 = scmp.ge.s32.totalorder %s13, 4
    %s20 = sphi 0, %s39
    %s21 = sphi 0, %s35
    %s22 = sphi 0, %s31
    %s23 = sphi 0, %s20
    %s24 = sphi 0, %s21
    %s25 = sphi 0, %s22
    %s26 = sphi 0, %s23
    %s27 = sphi 0, %s24
    %s28 = sphi 0, %s25
    %s44 = sphi 0, %s46
    %s47 = sphi 0, %s44
    %s48 = sphi 0, %s47
    %s64 = sphi 0, %s48
    %s72 = sphi 0, %s74
    %s75 = sphi 0, %s72
    %s76 = sphi 0, %s75
    %s92 = sphi 0, %s76
    %s100 = sphi 0, %s102
    %s103 = sphi 0, %s100
    %s104 = sphi 0, %s103
    %s120 = sphi 0, %s104
    %s124 = sphi 0, %s124
    %s126 = sphi 0, %s124
    %s127 = sphi 0, %s126
    %s141 = sphi 0, %s127
    %s145 = sphi 0, %s145
    %s147 = sphi 0, %s145
    %s148 = sphi 0, %s147
    %s162 = sphi 0, %s148
    %s166 = sphi 0, %s166
    %s168 = sphi 0, %s166
    %s169 = sphi 0, %s168
    %s183 = sphi 0, %s169
    %s187 = sphi 0, %s187
    %s189 = sphi 0, %s187
    %s190 = sphi 0, %s189
    %s204 = sphi 0, %s190
    %s212 = sphi 0, %s214
    %s215 = sphi 0, %s212
    %s216 = sphi 0, %s215
    %s232 = sphi 0, %s216
  $region4: #{transformer.11} parent=0 // loop_header_branch
    %16 = sbr.rel (%p14) target = $region8
  $region5: #{transformer.11} parent=0 // loop_body
    %s18 = ssub.s32 %s13, 1
    %s19 = ssub.s32 %s13, 2
    %s29 = sadd.s32 1, %s22
    %p30 = scmp.ge.s32.totalorder %s29, 1
    %s31 = scalar_select %p30, 0, %s29
    %s32 = sadd.s32 1, %s21
    %s33 = scalar_select %p30, %s32, %s21
    %p34 = scmp.ge.s32.totalorder %s33, 1
    %s35 = scalar_select %p34, 0, %s33
    %s36 = sadd.s32 1, %s20
    %s37 = scalar_select %p34, %s36, %s20
    %p38 = scmp.ge.s32.totalorder %s37, 2
    %s39 = scalar_select %p38, 0, %s37
    %s40 = ssub.s32 %s20, %s39
    %s41 = ssub.s32 %s21, %s35
    %s42 = sor.u32 %s40, %s41
    %p43 = scmp.eq.s32.totalorder %s42, 0
    %s45 = sadd.s32 %s44, 1
    %s46 = scalar_select %p43, %s44, %s45
    %p49 = pneg %p43
    %p50 = scmp.eq.s32.totalorder %s13, 1
    %p51 = por %p49, %p50
    %p52 = scmp.ne.s32.totalorder %s44, %s47
    %p53 = scmp.eq.s32.totalorder %s13, 0
    %p54 = por %p52, %p53
    %p55 = scmp.ne.s32.totalorder %s44, %s47
    %p56 = scmp.eq.s32.totalorder %s18, 1
    %p57 = por %p55, %p56
    %p58 = scmp.ne.s32.totalorder %s47, %s48
    %p59 = scmp.eq.s32.totalorder %s18, 0
    %p60 = por %p58, %p59
    %p61 = scmp.ne.s32.totalorder %s47, %s48
    %p62 = scmp.eq.s32.totalorder %s19, 1
    %p63 = por %p61, %p62
    %p65 = scmp.ne.s32.totalorder %s48, %s64
    %p66 = scmp.eq.s32.totalorder %s19, 0
    %p67 = por %p65, %p66
    %s68 = ssub.s32 %s20, %s39
    %s69 = ssub.s32 %s22, %s31
    %s70 = sor.u32 %s68, %s69
    %p71 = scmp.eq.s32.totalorder %s70, 0
    %s73 = sadd.s32 %s72, 1
    %s74 = scalar_select %p71, %s72, %s73
    %p77 = pneg %p71
    %p78 = scmp.eq.s32.totalorder %s13, 1
    %p79 = por %p77, %p78
    %p80 = scmp.ne.s32.totalorder %s72, %s75
    %p81 = scmp.eq.s32.totalorder %s13, 0
    %p82 = por %p80, %p81
    %p83 = scmp.ne.s32.totalorder %s72, %s75
    %p84 = scmp.eq.s32.totalorder %s18, 1
    %p85 = por %p83, %p84
    %p86 = scmp.ne.s32.totalorder %s75, %s76
    %p87 = scmp.eq.s32.totalorder %s18, 0
    %p88 = por %p86, %p87
    %p89 = scmp.ne.s32.totalorder %s75, %s76
    %p90 = scmp.eq.s32.totalorder %s19, 1
    %p91 = por %p89, %p90
    %p93 = scmp.ne.s32.totalorder %s76, %s92
    %p94 = scmp.eq.s32.totalorder %s19, 0
    %p95 = por %p93, %p94
    %s96 = ssub.s32 %s20, %s39
    %s97 = ssub.s32 %s22, %s31
    %s98 = sor.u32 %s96, %s97
    %p99 = scmp.eq.s32.totalorder %s98, 0
    %s101 = sadd.s32 %s100, 1
    %s102 = scalar_select %p99, %s100, %s101
    %p105 = pneg %p99
    %p106 = scmp.eq.s32.totalorder %s13, 1
    %p107 = por %p105, %p106
    %p108 = scmp.ne.s32.totalorder %s100, %s103
    %p109 = scmp.eq.s32.totalorder %s13, 0
    %p110 = por %p108, %p109
    %p111 = scmp.ne.s32.totalorder %s100, %s103
    %p112 = scmp.eq.s32.totalorder %s18, 1
    %p113 = por %p111, %p112
    %p114 = scmp.ne.s32.totalorder %s103, %s104
    %p115 = scmp.eq.s32.totalorder %s18, 0
    %p116 = por %p114, %p115
    %p117 = scmp.ne.s32.totalorder %s103, %s104
    %p118 = scmp.eq.s32.totalorder %s19, 1
    %p119 = por %p117, %p118
    %p121 = scmp.ne.s32.totalorder %s104, %s120
    %p122 = scmp.eq.s32.totalorder %s19, 0
    %p123 = por %p121, %p122
    %s125 = sadd.s32 %s124, 1
    %p128 = scmp.eq.s32.totalorder %s13, 1
    %p129 = scmp.ne.s32.totalorder %s124, %s126
    %p130 = scmp.eq.s32.totalorder %s13, 0
    %p131 = por %p129, %p130
    %p132 = scmp.ne.s32.totalorder %s124, %s126
    %p133 = scmp.eq.s32.totalorder %s18, 1
    %p134 = por %p132, %p133
    %p135 = scmp.ne.s32.totalorder %s126, %s127
    %p136 = scmp.eq.s32.totalorder %s18, 0
    %p137 = por %p135, %p136
    %p138 = scmp.ne.s32.totalorder %s126, %s127
    %p139 = scmp.eq.s32.totalorder %s19, 1
    %p140 = por %p138, %p139
    %p142 = scmp.ne.s32.totalorder %s127, %s141
    %p143 = scmp.eq.s32.totalorder %s19, 0
    %p144 = por %p142, %p143
    %s146 = sadd.s32 %s145, 1
    %p149 = scmp.eq.s32.totalorder %s13, 1
    %p150 = scmp.ne.s32.totalorder %s145, %s147
    %p151 = scmp.eq.s32.totalorder %s13, 0
    %p152 = por %p150, %p151
    %p153 = scmp.ne.s32.totalorder %s145, %s147
    %p154 = scmp.eq.s32.totalorder %s18, 1
    %p155 = por %p153, %p154
    %p156 = scmp.ne.s32.totalorder %s147, %s148
    %p157 = scmp.eq.s32.totalorder %s18, 0
    %p158 = por %p156, %p157
    %p159 = scmp.ne.s32.totalorder %s147, %s148
    %p160 = scmp.eq.s32.totalorder %s19, 1
    %p161 = por %p159, %p160
    %p163 = scmp.ne.s32.totalorder %s148, %s162
    %p164 = scmp.eq.s32.totalorder %s19, 0
    %p165 = por %p163, %p164
    %s167 = sadd.s32 %s166, 1
    %p170 = scmp.eq.s32.totalorder %s13, 1
    %p171 = scmp.ne.s32.totalorder %s166, %s168
    %p172 = scmp.eq.s32.totalorder %s13, 0
    %p173 = por %p171, %p172
    %p174 = scmp.ne.s32.totalorder %s166, %s168
    %p175 = scmp.eq.s32.totalorder %s18, 1
    %p176 = por %p174, %p175
    %p177 = scmp.ne.s32.totalorder %s168, %s169
    %p178 = scmp.eq.s32.totalorder %s18, 0
    %p179 = por %p177, %p178
    %p180 = scmp.ne.s32.totalorder %s168, %s169
    %p181 = scmp.eq.s32.totalorder %s19, 1
    %p182 = por %p180, %p181
    %p184 = scmp.ne.s32.totalorder %s169, %s183
    %p185 = scmp.eq.s32.totalorder %s19, 0
    %p186 = por %p184, %p185
    %s188 = sadd.s32 %s187, 1
    %p191 = scmp.eq.s32.totalorder %s13, 1
    %p192 = scmp.ne.s32.totalorder %s187, %s189
    %p193 = scmp.eq.s32.totalorder %s13, 0
    %p194 = por %p192, %p193
    %p195 = scmp.ne.s32.totalorder %s187, %s189
    %p196 = scmp.eq.s32.totalorder %s18, 1
    %p197 = por %p195, %p196
    %p198 = scmp.ne.s32.totalorder %s189, %s190
    %p199 = scmp.eq.s32.totalorder %s18, 0
    %p200 = por %p198, %p199
    %p201 = scmp.ne.s32.totalorder %s189, %s190
    %p202 = scmp.eq.s32.totalorder %s19, 1
    %p203 = por %p201, %p202
    %p205 = scmp.ne.s32.totalorder %s190, %s204
    %p206 = scmp.eq.s32.totalorder %s19, 0
    %p207 = por %p205, %p206
    %s208 = ssub.s32 %s20, %s39
    %s209 = ssub.s32 %s21, %s35
    %s210 = sor.u32 %s208, %s209
    %p211 = scmp.eq.s32.totalorder %s210, 0
    %s213 = sadd.s32 %s212, 1
    %s214 = scalar_select %p211, %s212, %s213
    %p217 = pneg %p211
    %p218 = scmp.eq.s32.totalorder %s13, 1
    %p219 = por %p217, %p218
    %p220 = scmp.ne.s32.totalorder %s212, %s215
    %p221 = scmp.eq.s32.totalorder %s13, 0
    %p222 = por %p220, %p221
    %p223 = scmp.ne.s32.totalorder %s212, %s215
    %p224 = scmp.eq.s32.totalorder %s18, 1
    %p225 = por %p223, %p224
    %p226 = scmp.ne.s32.totalorder %s215, %s216
    %p227 = scmp.eq.s32.totalorder %s18, 0
    %p228 = por %p226, %p227
    %p229 = scmp.ne.s32.totalorder %s215, %s216
    %p230 = scmp.eq.s32.totalorder %s19, 1
    %p231 = por %p229, %p230
    %p233 = scmp.ne.s32.totalorder %s216, %s232
    %p234 = scmp.eq.s32.totalorder %s19, 0
    %p235 = por %p233, %p234
    %p236 = scmp.le.s32.totalorder 1, %s13
    %p237 = scmp.lt.s32.totalorder %s13, 3
    %p238 = pnand %p236, %p237
    %p239 = pneg %p238
    // Predicated region
    $region9: #{transformer.11} parent=5 // pred_check
      _
    $region10: #{transformer.11} parent=5 // pred_check_branch
      %241 = sbr.rel (%p238) target = $region12
    $region11: #{transformer.11} parent=5 // pred_region
      %s242 = ssub.s32 %s13, 1
      // Predicated region
      $region13: #{transformer.11} parent=11 // pred_check
        %p243 = pneg %p137
      $region14: #{transformer.11} parent=11 // pred_check_branch
        %245 = sbr.rel (%p243) target = $region16
      $region15: #{transformer.11} parent=11 // pred_region
        _
      $region16: #{transformer.11} parent=11 // pred_fallthru
        _
      // Predicated region
      $region17: #{transformer.11} parent=11 // pred_check
        %p246 = pneg %p158
      $region18: #{transformer.11} parent=11 // pred_check_branch
        %248 = sbr.rel (%p246) target = $region20
      $region19: #{transformer.11} parent=11 // pred_region
        _
      $region20: #{transformer.11} parent=11 // pred_fallthru
        _
      // Predicated region
      $region21: #{transformer.11} parent=11 // pred_check
        %p249 = pneg %p179
      $region22: #{transformer.11} parent=11 // pred_check_branch
        %251 = sbr.rel (%p249) target = $region24
      $region23: #{transformer.11} parent=11 // pred_region
        _
      $region24: #{transformer.11} parent=11 // pred_fallthru
        _
      // Predicated region
      $region25: #{transformer.11} parent=11 // pred_check
        %p252 = pneg %p200
      $region26: #{transformer.11} parent=11 // pred_check_branch
        %254 = sbr.rel (%p252) target = $region28
      $region27: #{transformer.11} parent=11 // pred_region
        _
      $region28: #{transformer.11} parent=11 // pred_fallthru
        _
    $region12: #{transformer.11} parent=5 // pred_fallthru
      _
    %p255 = scmp.lt.s32.totalorder %s13, 2
    // Predicated region
    $region29: #{transformer.11} parent=5 // pred_check
      %p256 = pneg %p255
    $region30: #{transformer.11} parent=5 // pred_check_branch
      %258 = sbr.rel (%p256) target = $region32
    $region31: #{transformer.11} parent=5 // pred_region
      // Predicated region
      $region33: #{transformer.11} parent=31 // pred_check
        %p259 = pneg %p54
      $region34: #{transformer.11} parent=31 // pred_check_branch
        %261 = sbr.rel (%p259) target = $region36
      $region35: #{transformer.11} parent=31 // pred_region
        %p262 = scmp.lt.s32.totalorder %s20, 1
        %s263 = scalar_select %p262, %s20, 1
        %p264 = scmp.lt.s32.totalorder %s21, 0
        %s265 = scalar_select %p264, %s21, 0
        %s266 = sadd.s32 %s265, %s263
        %s267 = smul.addr %s266, 4
        %s268 = scalar_lea.vmem %s0, %s267
      $region36: #{transformer.11} parent=31 // pred_fallthru
        _
      // Predicated region
      $region37: #{transformer.11} parent=31 // pred_check
        %p269 = pneg %p82
      $region38: #{transformer.11} parent=31 // pred_check_branch
        %271 = sbr.rel (%p269) target = $region40
      $region39: #{transformer.11} parent=31 // pred_region
        %p272 = scmp.lt.s32.totalorder %s20, 1
        %s273 = scalar_select %p272, %s20, 1
        %p274 = scmp.lt.s32.totalorder %s22, 0
        %s275 = scalar_select %p274, %s22, 0
        %s276 = sadd.s32 %s275, %s273
        %s277 = sadd.s32 %s276, 2
        %s278 = smul.addr %s277, 4
        %s279 = scalar_lea.vmem %s1, %s278
      $region40: #{transformer.11} parent=31 // pred_fallthru
        _
      // Predicated region
      $region41: #{transformer.11} parent=31 // pred_check
        %p280 = pneg %p110
      $region42: #{transformer.11} parent=31 // pred_check_branch
        %282 = sbr.rel (%p280) target = $region44
      $region43: #{transformer.11} parent=31 // pred_region
        %p283 = scmp.lt.s32.totalorder %s20, 1
        %s284 = scalar_select %p283, %s20, 1
        %p285 = scmp.lt.s32.totalorder %s22, 0
        %s286 = scalar_select %p285, %s22, 0
        %s287 = sadd.s32 %s286, %s284
        %s288 = sadd.s32 %s287, 4
        %s289 = smul.addr %s288, 4
        %s290 = scalar_lea.vmem %s2, %s289
      $region44: #{transformer.11} parent=31 // pred_fallthru
        _
    $region32: #{transformer.11} parent=5 // pred_fallthru
      _
    %p291 = scmp.le.s32.totalorder 1, %s13
    %p292 = scmp.lt.s32.totalorder %s13, 3
    %p293 = pnand %p291, %p292
    %p294 = pneg %p293
    // Predicated region
    $region45: #{transformer.11} parent=5 // pred_check
      _
    $region46: #{transformer.11} parent=5 // pred_check_branch
      %296 = sbr.rel (%p293) target = $region48
    $region47: #{transformer.11} parent=5 // pred_region
      %s297 = ssub.s32 %s13, 1
      %p298 = scmp.lt.s32.totalorder %s23, 1
      %s299 = scalar_select %p298, %s23, 1
      %p300 = scmp.lt.s32.totalorder %s24, 0
      %s301 = scalar_select %p300, %s24, 0
      %s302 = sadd.s32 %s301, %s299
      %s303 = smul.addr %s302, 4
      %s304 = scalar_lea.vmem %s0, %s303
      %p305 = pneg %p60
      %p306 = pneg %p57
      %p307 = scmp.lt.s32.totalorder %s23, 1
      %s308 = scalar_select %p307, %s23, 1
      %p309 = scmp.lt.s32.totalorder %s25, 0
      %s310 = scalar_select %p309, %s25, 0
      %s311 = sadd.s32 %s310, %s308
      %s312 = sadd.s32 %s311, 2
      %s313 = smul.addr %s312, 4
      %s314 = scalar_lea.vmem %s1, %s313
      %p315 = pneg %p88
      %p316 = pneg %p85
      %p317 = scmp.lt.s32.totalorder %s23, 1
      %s318 = scalar_select %p317, %s23, 1
      %p319 = scmp.lt.s32.totalorder %s25, 0
      %s320 = scalar_select %p319, %s25, 0
      %s321 = sadd.s32 %s320, %s318
      %s322 = sadd.s32 %s321, 4
      %s323 = smul.addr %s322, 4
      %s324 = scalar_lea.vmem %s2, %s323
      %p325 = pneg %p116
      %p326 = pneg %p113
      %p327 = pneg %p137
      %p328 = pneg %p134
      %p329 = pneg %p158
      %p330 = pneg %p155
      %p331 = pneg %p179
      %p332 = pneg %p176
      %p333 = pneg %p200
      %p334 = pneg %p197
      %p335 = pneg %p228
      %p336 = pneg %p225
      %p337 = scmp.lt.s32.totalorder %s23, 1
      %s338 = scalar_select %p337, %s23, 1
      %p339 = scmp.lt.s32.totalorder %s24, 0
      %s340 = scalar_select %p339, %s24, 0
      %s341 = sadd.s32 %s340, %s338
      %s342 = smul.addr %s341, 4
      %s343 = scalar_lea.vmem %s7, %s342
      %p344 = scmp.lt.s32.totalorder %s23, 1
      %s345 = scalar_select %p344, %s23, 1
      %p346 = scmp.lt.s32.totalorder %s24, 0
      %s347 = scalar_select %p346, %s24, 0
      %s348 = sadd.s32 %s347, %s345
      %s349 = smul.addr %s348, 4
      %s350 = scalar_lea.vmem %s0, %s349
      %p351 = scmp.lt.s32.totalorder %s23, 1
      %s352 = scalar_select %p351, %s23, 1
      %p353 = scmp.lt.s32.totalorder %s25, 0
      %s354 = scalar_select %p353, %s25, 0
      %s355 = sadd.s32 %s354, %s352
      %s356 = sadd.s32 %s355, 2
      %s357 = smul.addr %s356, 4
      %s358 = scalar_lea.vmem %s1, %s357
      %p359 = scmp.lt.s32.totalorder %s23, 1
      %s360 = scalar_select %p359, %s23, 1
      %p361 = scmp.lt.s32.totalorder %s25, 0
      %s362 = scalar_select %p361, %s25, 0
      %s363 = sadd.s32 %s362, %s360
      %s364 = sadd.s32 %s363, 4
      %s365 = smul.addr %s364, 4
      %s366 = scalar_lea.vmem %s2, %s365
      %p367 = scmp.lt.s32.totalorder %s23, 1
      %s368 = scalar_select %p367, %s23, 1
      %p369 = scmp.lt.s32.totalorder %s24, 0
      %s370 = scalar_select %p369, %s24, 0
      %s371 = sadd.s32 %s370, %s368
      %s372 = smul.addr %s371, 4
      %s373 = scalar_lea.vmem %s7, %s372
      %p375 = scmp.eq.s32.totalorder %s25, 0
      // Predicated region
      $region49: #{transformer.11} parent=47 // pred_check
        %p376 = pneg %p375
      $region50: #{transformer.11} parent=47 // pred_check_branch
        %378 = sbr.rel (%p376) target = $region52
      $region51: #{transformer.11} parent=47 // pred_region
        %vm379 = vcmask 7168
        %380 = vst.msk [vmem:[#allocation3] sm:$0xff] %vm379, -inf
        %381 = vst.msk [vmem:[#allocation3 + $0x8] sm:$0xff] %vm379, -inf
        %382 = vst.msk [vmem:[#allocation3 + $0x10] sm:$0xff] %vm379, -inf
        %383 = vst.msk [vmem:[#allocation3 + $0x18] sm:$0xff] %vm379, -inf
        %384 = vst.msk [vmem:[#allocation4] sm:$0xff] %vm379, 0.0
        %385 = vst.msk [vmem:[#allocation4 + $0x8] sm:$0xff] %vm379, 0.0
        %386 = vst.msk [vmem:[#allocation4 + $0x10] sm:$0xff] %vm379, 0.0
        %387 = vst.msk [vmem:[#allocation4 + $0x18] sm:$0xff] %vm379, 0.0
        %vm388 = vcmask 64512
        %389 = vst.msk [vmem:[#allocation5] sm:$0xff] %vm388, 0.0
        %390 = vst.msk [vmem:[#allocation5 + $0x8] sm:$0xff] %vm388, 0.0
        %391 = vst.msk [vmem:[#allocation5 + $0x10] sm:$0xff] %vm388, 0.0
        %392 = vst.msk [vmem:[#allocation5 + $0x18] sm:$0xff] %vm388, 0.0
        %v393 = vld [vmem:[%s350] sm:$0xf]
        %v394 = vunpack.c.l.bf16 %v393
        %v395 = vld [vmem:[%s3] sm:$0x1]
        %v396 = vld [vmem:[%s4] sm:$0x1]
        %v397 = vsel %vm388, %v394, 0.0
        %398 = vadd.xlane.f32.xlu0 %v397
        %v399 = vpop.xlane.xlu0 %398
        %v400 = vrcp.pop 8.0
        %v401 = vmul.f32 %v399, %v400
        %v402 = vsub.f32 %v394, %v401
        %v403 = vmul.f32 %v402, %v402
        %v404 = vsel %vm388, %v403, 0.0
        %405 = vadd.xlane.f32.xlu0 %v404
        %v406 = vpop.xlane.xlu0 %405
        %v407 = vmul.f32 %v406, %v400
        %v408 = vadd.f32 %v407, 1e-06
        %v409 = vrsqrt.pop %v408
        %v410 = vmul.f32 %v402, %v409
        %v412 = vlaneseq
        %v413 = vshrl.u32 %v412, 7
        %v414 = vsub.s32 0, %v413
        %v415 = vrot.slane %v395, %v414
        %v417 = vmul.f32 %v410, %v415
        %v419 = vlaneseq
        %v420 = vshrl.u32 %v419, 7
        %v421 = vsub.s32 0, %v420
        %v422 = vrot.slane %v396, %v421
        %v424 = vadd.f32 %v417, %v422
        %v425 = vmul.f32 %v424, 0.35355338
        %v426 = vpack.c.bf16 %v425, %v425
        %vm427 = vcmask 60416
        %428 = vst.msk [vmem:[#allocation2] sm:$0xf] %vm427, %v426
        %v429 = vld [vmem:[%s350] sm:$0xf]
        %v430 = vunpack.c.l.bf16 %v429
        %v431 = vld [vmem:[%s3] sm:$0x1]
        %v432 = vld [vmem:[%s4] sm:$0x1]
        %434 = vrot.lane.b32.xlu0 %v430, 120
        %v435 = vpop.permute.xlu0 %434
        %v437 = vsel %vm388, %v435, 0.0
        %438 = vadd.xlane.f32.xlu0 %v437
        %v439 = vpop.xlane.xlu0 %438
        %v440 = vmul.f32 %v439, %v400
        %v441 = vsub.f32 %v430, %v440
        %v442 = vmul.f32 %v441, %v441
        %444 = vrot.lane.b32.xlu0 %v442, 120
        %v445 = vpop.permute.xlu0 %444
        %v447 = vsel %vm388, %v445, 0.0
        %448 = vadd.xlane.f32.xlu0 %v447
        %v449 = vpop.xlane.xlu0 %448
        %v450 = vmul.f32 %v449, %v400
        %v451 = vadd.f32 %v450, 1e-06
        %v452 = vrsqrt.pop %v451
        %v453 = vmul.f32 %v441, %v452
        %v455 = vlaneseq
        %v456 = vshrl.u32 %v455, 7
        %v457 = vsub.s32 0, %v456
        %v458 = vrot.slane %v431, %v457
        %459 = vrot.lane.b32.xlu0 %v458, 8
        %v460 = vpop.permute.xlu0 %459
        %v462 = vmul.f32 %v453, %v460
        %v464 = vlaneseq
        %v465 = vshrl.u32 %v464, 7
        %v466 = vsub.s32 0, %v465
        %v467 = vrot.slane %v432, %v466
        %468 = vrot.lane.b32.xlu0 %v467, 8
        %v469 = vpop.permute.xlu0 %468
        %v471 = vadd.f32 %v462, %v469
        %v472 = vmul.f32 %v471, 0.35355338
        %v473 = vpack.c.bf16 %v472, %v472
        %v475 = vunpack.c.l.b16 %v473
        %v476 = vpack.c.b16 %v475, %v475
        %477 = vrot.lane.b32.xlu0 %v476, 120
        %v478 = vpop.permute.xlu0 %477
        %s480 = scalar_lea.vmem [#allocation2], 4
        %481 = vst.msk [vmem:[%s480] sm:$0xf] %vm427, %v478
        %v482 = vld [vmem:[%s350] sm:$0xf]
        %v483 = vunpack.c.l.bf16 %v482
        %v484 = vld [vmem:[%s3] sm:$0x1]
        %v485 = vld [vmem:[%s4] sm:$0x1]
        %487 = vrot.lane.b32.xlu0 %v483, 112
        %v488 = vpop.permute.xlu0 %487
        %v490 = vsel %vm388, %v488, 0.0
        %491 = vadd.xlane.f32.xlu0 %v490
        %v492 = vpop.xlane.xlu0 %491
        %v493 = vmul.f32 %v492, %v400
        %v494 = vsub.f32 %v483, %v493
        %v495 = vmul.f32 %v494, %v494
        %497 = vrot.lane.b32.xlu0 %v495, 112
        %v498 = vpop.permute.xlu0 %497
        %v500 = vsel %vm388, %v498, 0.0
        %501 = vadd.xlane.f32.xlu0 %v500
        %v502 = vpop.xlane.xlu0 %501
        %v503 = vmul.f32 %v502, %v400
        %v504 = vadd.f32 %v503, 1e-06
        %v505 = vrsqrt.pop %v504
        %v506 = vmul.f32 %v494, %v505
        %v508 = vlaneseq
        %v509 = vshrl.u32 %v508, 7
        %v510 = vsub.s32 0, %v509
        %v511 = vrot.slane %v484, %v510
        %512 = vrot.lane.b32.xlu0 %v511, 16
        %v513 = vpop.permute.xlu0 %512
        %v515 = vmul.f32 %v506, %v513
        %v517 = vlaneseq
        %v518 = vshrl.u32 %v517, 7
        %v519 = vsub.s32 0, %v518
        %v520 = vrot.slane %v485, %v519
        %521 = vrot.lane.b32.xlu0 %v520, 16
        %v522 = vpop.permute.xlu0 %521
        %v524 = vadd.f32 %v515, %v522
        %v525 = vmul.f32 %v524, 0.35355338
        %v526 = vpack.c.bf16 %v525, %v525
        %v528 = vunpack.c.l.b16 %v526
        %v529 = vpack.c.b16 %v528, %v528
        %530 = vrot.lane.b32.xlu0 %v529, 112
        %v531 = vpop.permute.xlu0 %530
        %s533 = scalar_lea.vmem [#allocation2], 8
        %534 = vst.msk [vmem:[%s533] sm:$0xf] %vm427, %v531
        %v535 = vld [vmem:[%s350] sm:$0xf]
        %v536 = vunpack.c.l.bf16 %v535
        %v537 = vld [vmem:[%s3] sm:$0x1]
        %v538 = vld [vmem:[%s4] sm:$0x1]
        %540 = vrot.lane.b32.xlu0 %v536, 104
        %v541 = vpop.permute.xlu0 %540
        %v543 = vsel %vm388, %v541, 0.0
        %544 = vadd.xlane.f32.xlu0 %v543
        %v545 = vpop.xlane.xlu0 %544
        %v546 = vmul.f32 %v545, %v400
        %v547 = vsub.f32 %v536, %v546
        %v548 = vmul.f32 %v547, %v547
        %550 = vrot.lane.b32.xlu0 %v548, 104
        %v551 = vpop.permute.xlu0 %550
        %v553 = vsel %vm388, %v551, 0.0
        %554 = vadd.xlane.f32.xlu0 %v553
        %v555 = vpop.xlane.xlu0 %554
        %v556 = vmul.f32 %v555, %v400
        %v557 = vadd.f32 %v556, 1e-06
        %v558 = vrsqrt.pop %v557
        %v559 = vmul.f32 %v547, %v558
        %v561 = vlaneseq
        %v562 = vshrl.u32 %v561, 7
        %v563 = vsub.s32 0, %v562
        %v564 = vrot.slane %v537, %v563
        %565 = vrot.lane.b32.xlu0 %v564, 24
        %v566 = vpop.permute.xlu0 %565
        %v568 = vmul.f32 %v559, %v566
        %v570 = vlaneseq
        %v571 = vshrl.u32 %v570, 7
        %v572 = vsub.s32 0, %v571
        %v573 = vrot.slane %v538, %v572
        %574 = vrot.lane.b32.xlu0 %v573, 24
        %v575 = vpop.permute.xlu0 %574
        %v577 = vadd.f32 %v568, %v575
        %v578 = vmul.f32 %v577, 0.35355338
        %v579 = vpack.c.bf16 %v578, %v578
        %v581 = vunpack.c.l.b16 %v579
        %v582 = vpack.c.b16 %v581, %v581
        %583 = vrot.lane.b32.xlu0 %v582, 104
        %v584 = vpop.permute.xlu0 %583
        %s586 = scalar_lea.vmem [#allocation2], 12
        %587 = vst.msk [vmem:[%s586] sm:$0xf] %vm427, %v584
      $region52: #{transformer.11} parent=47 // pred_fallthru
        _
      %v588 = vld [vmem:[%s358] sm:$0xf]
      %v589 = vunpack.c.l.bf16 %v588
      %v590 = vld [vmem:[%s366] sm:$0xf]
      %v591 = vld [vmem:[%s5] sm:$0x1]
      %v592 = vld [vmem:[%s6] sm:$0x1]
      %vm593 = vcmask 64512
      %v594 = vsel %vm593, %v589, 0.0
      %595 = vadd.xlane.f32.xlu0 %v594
      %v596 = vpop.xlane.xlu0 %595
      %v597 = vrcp.pop 8.0
      %v598 = vmul.f32 %v596, %v597
      %v599 = vsub.f32 %v589, %v598
      %v600 = vmul.f32 %v599, %v599
      %v601 = vsel %vm593, %v600, 0.0
      %602 = vadd.xlane.f32.xlu0 %v601
      %v603 = vpop.xlane.xlu0 %602
      %v604 = vmul.f32 %v603, %v597
      %v605 = vadd.f32 %v604, 1e-06
      %v606 = vrsqrt.pop %v605
      %v607 = vmul.f32 %v599, %v606
      %v609 = vlaneseq
      %v610 = vshrl.u32 %v609, 7
      %v611 = vsub.s32 0, %v610
      %v612 = vrot.slane %v591, %v611
      %v614 = vmul.f32 %v607, %v612
      %v616 = vlaneseq
      %v617 = vshrl.u32 %v616, 7
      %v618 = vsub.s32 0, %v617
      %v619 = vrot.slane %v592, %v618
      %v621 = vadd.f32 %v614, %v619
      %v622 = vpack.c.bf16 %v621, %v621
      %v623 = vld [vmem:[#allocation2] sm:$0xf]
      %v625 = vsel %vm593, %v623, 0
      %v628 = vsel %vm593, %v622, 0
      %630 = vmatprep.subr.bf16.mxu0 0
      %631 = vmatpush1.bf16.xpose.msra.mxu0 %v628
      %632 = vmatprep.subr.bf16.mxu0 0
      %633 = vmatpush1.bf16.xpose.msra.mxu0 0
      %634 = vmatprep.subr.bf16.mxu0 0
      %635 = vmatpush1.bf16.xpose.msra.mxu0 0
      %636 = vmatprep.subr.bf16.mxu0 0
      %637 = vmatpush1.bf16.xpose.msra.mxu0 0
      %638 = vmatprep.subr.bf16.mxu0 0
      %639 = vmatpush1.bf16.xpose.msra.mxu0 0
      %640 = vmatprep.subr.bf16.mxu0 0
      %641 = vmatpush1.bf16.xpose.msra.mxu0 0
      %642 = vmatprep.subr.bf16.mxu0 0
      %643 = vmatpush1.bf16.xpose.msra.mxu0 0
      %644 = vmatprep.subr.bf16.mxu0 0
      %645 = vmatpush1.bf16.xpose.msra.mxu0 0
      %646 = vmatprep.subr.bf16.mxu0 0
      %647 = vmatpush1.bf16.xpose.msra.mxu0 0
      %648 = vmatprep.subr.bf16.mxu0 0
      %649 = vmatpush1.bf16.xpose.msra.mxu0 0
      %650 = vmatprep.subr.bf16.mxu0 0
      %651 = vmatpush1.bf16.xpose.msra.mxu0 0
      %652 = vmatprep.subr.bf16.mxu0 0
      %653 = vmatpush1.bf16.xpose.msra.mxu0 0
      %654 = vmatprep.subr.bf16.mxu0 0
      %655 = vmatpush1.bf16.xpose.msra.mxu0 0
      %656 = vmatprep.subr.bf16.mxu0 0
      %657 = vmatpush1.bf16.xpose.msra.mxu0 0
      %658 = vmatprep.subr.bf16.mxu0 0
      %659 = vmatpush1.bf16.xpose.msra.mxu0 0
      %660 = vmatprep.subr.bf16.mxu0 0
      %661 = vmatpush1.bf16.xpose.msra.mxu0 0
      %662 = vmatprep.mubr.bf16.mxu0 0
      %663 = vmatmul.mubr.bf16.gmra.mrb[0].mxu0 %v625
      %v664 = vpop.f32.mrb[0].mxu0
      %v665 = vadd.f32 0.0, %v664
      %v666 = vpop.f32.mrb[0].mxu0
      %v667 = vpop.f32.mrb[0].mxu0
      %v668 = vpop.f32.mrb[0].mxu0
      %669 = vdwg.mxu0
      %v670 = vld [vmem:[#allocation3] sm:$0xff]
      %v671 = vsel %vm593, %v665, -inf
      %672 = vmax.xlane.f32.xlu0 %v671
      %v673 = vpop.xlane.xlu0 %672
      %v674 = vmax.f32 %v670, %v673
      %v675 = vsub.f32 %v670, %v674
      %v676 = vmul.f32 %v675, 1.442695
      %v677 = vpow.pop %v676
      %679 = vset.pattern.permute.xlu0 0
      %680 = vperm.xlu0 %679, %v674
      %v681 = vpop.permute.xlu0 %680
      %v683 = vsub.f32 %v665, %v681
      %v684 = vmul.f32 %v683, 1.442695
      %v685 = vpow.pop %v684
      %v686 = vld [vmem:[#allocation4] sm:$0xff]
      %v687 = vmul.f32 %v677, %v686
      %v688 = vsel %vm593, %v685, 0.0
      %689 = vadd.xlane.f32.xlu0 %v688
      %v690 = vpop.xlane.xlu0 %689
      %v691 = vadd.f32 %v687, %v690
      %vm692 = vcmask 7168
      %693 = vst.msk [vmem:[#allocation4] sm:$0xff] %vm692, %v691
      %v694 = vld [vmem:[#allocation5] sm:$0xff]
      %696 = vset.pattern.permute.xlu0 0
      %697 = vperm.xlu0 %696, %v677
      %v698 = vpop.permute.xlu0 %697
      %v700 = vmul.f32 %v698, %v694
      %v701 = vpack.c.bf16 %v685, %v685
      %v703 = vsel %vm593, %v701, 0
      %vm705 = vcmask 1043456
      %v707 = vsel %vm705, %v590, 0
      %709 = vmatprep.subr.bf16.mxu0 0
      %710 = vmatpush1.bf16.msra.mxu0 %v707
      %711 = vmatprep.subr.bf16.mxu0 0
      %712 = vmatpush1.bf16.msra.mxu0 0
      %713 = vmatprep.subr.bf16.mxu0 0
      %714 = vmatpush1.bf16.msra.mxu0 0
      %715 = vmatprep.subr.bf16.mxu0 0
      %716 = vmatpush1.bf16.msra.mxu0 0
      %717 = vmatprep.subr.bf16.mxu0 0
      %718 = vmatpush1.bf16.msra.mxu0 0
      %719 = vmatprep.subr.bf16.mxu0 0
      %720 = vmatpush1.bf16.msra.mxu0 0
      %721 = vmatprep.subr.bf16.mxu0 0
      %722 = vmatpush1.bf16.msra.mxu0 0
      %723 = vmatprep.subr.bf16.mxu0 0
      %724 = vmatpush1.bf16.msra.mxu0 0
      %725 = vmatprep.subr.bf16.mxu0 0
      %726 = vmatpush1.bf16.msra.mxu0 0
      %727 = vmatprep.subr.bf16.mxu0 0
      %728 = vmatpush1.bf16.msra.mxu0 0
      %729 = vmatprep.subr.bf16.mxu0 0
      %730 = vmatpush1.bf16.msra.mxu0 0
      %731 = vmatprep.subr.bf16.mxu0 0
      %732 = vmatpush1.bf16.msra.mxu0 0
      %733 = vmatprep.subr.bf16.mxu0 0
      %734 = vmatpush1.bf16.msra.mxu0 0
      %735 = vmatprep.subr.bf16.mxu0 0
      %736 = vmatpush1.bf16.msra.mxu0 0
      %737 = vmatprep.subr.bf16.mxu0 0
      %738 = vmatpush1.bf16.msra.mxu0 0
      %739 = vmatprep.subr.bf16.mxu0 0
      %740 = vmatpush1.bf16.msra.mxu0 0
      %741 = vmatprep.mubr.bf16.mxu0 0
      %742 = vmatmul.mubr.bf16.gmra.mrb[0].mxu0 %v703
      %v743 = vpop.f32.mrb[0].mxu0
      %v744 = vadd.f32 0.0, %v743
      %v745 = vpop.f32.mrb[0].mxu0
      %v746 = vpop.f32.mrb[0].mxu0
      %v747 = vpop.f32.mrb[0].mxu0
      %748 = vdwg.mxu0
      %v749 = vadd.f32 %v700, %v744
      %750 = vst.msk [vmem:[#allocation5] sm:$0xff] %vm593, %v749
      %751 = vst.msk [vmem:[#allocation3] sm:$0xff] %vm692, %v674
      %v752 = vld [vmem:[%s358] sm:$0xf]
      %v753 = vunpack.c.l.bf16 %v752
      %v754 = vld [vmem:[%s366] sm:$0xf]
      %v755 = vld [vmem:[%s5] sm:$0x1]
      %v756 = vld [vmem:[%s6] sm:$0x1]
      %758 = vrot.lane.b32.xlu0 %v753, 120
      %v759 = vpop.permute.xlu0 %758
      %v761 = vsel %vm593, %v759, 0.0
      %762 = vadd.xlane.f32.xlu0 %v761
      %v763 = vpop.xlane.xlu0 %762
      %v764 = vmul.f32 %v763, %v597
      %v765 = vsub.f32 %v753, %v764
      %v766 = vmul.f32 %v765, %v765
      %768 = vrot.lane.b32.xlu0 %v766, 120
      %v769 = vpop.permute.xlu0 %768
      %v771 = vsel %vm593, %v769, 0.0
      %772 = vadd.xlane.f32.xlu0 %v771
      %v773 = vpop.xlane.xlu0 %772
      %v774 = vmul.f32 %v773, %v597
      %v775 = vadd.f32 %v774, 1e-06
      %v776 = vrsqrt.pop %v775
      %v777 = vmul.f32 %v765, %v776
      %v779 = vlaneseq
      %v780 = vshrl.u32 %v779, 7
      %v781 = vsub.s32 0, %v780
      %v782 = vrot.slane %v755, %v781
      %783 = vrot.lane.b32.xlu0 %v782, 8
      %v784 = vpop.permute.xlu0 %783
      %v786 = vmul.f32 %v777, %v784
      %v788 = vlaneseq
      %v789 = vshrl.u32 %v788, 7
      %v790 = vsub.s32 0, %v789
      %v791 = vrot.slane %v756, %v790
      %792 = vrot.lane.b32.xlu0 %v791, 8
      %v793 = vpop.permute.xlu0 %792
      %v795 = vadd.f32 %v786, %v793
      %v796 = vpack.c.bf16 %v795, %v795
      %s797 = scalar_lea.vmem [#allocation2], 4
      %v798 = vld [vmem:[%s797] sm:$0xf]
      %800 = vrot.lane.b32.xlu0 %v796, 120
      %v801 = vpop.permute.xlu0 %800
      %v803 = vsel %vm593, %v798, 0
      %v806 = vsel %vm593, %v801, 0
      %808 = vmatprep.subr.bf16.mxu0 0
      %809 = vmatpush1.bf16.xpose.msra.mxu0 %v806
      %810 = vmatprep.subr.bf16.mxu0 0
      %811 = vmatpush1.bf16.xpose.msra.mxu0 0
      %812 = vmatprep.subr.bf16.mxu0 0
      %813 = vmatpush1.bf16.xpose.msra.mxu0 0
      %814 = vmatprep.subr.bf16.mxu0 0
      %815 = vmatpush1.bf16.xpose.msra.mxu0 0
      %816 = vmatprep.subr.bf16.mxu0 0
      %817 = vmatpush1.bf16.xpose.msra.mxu0 0
      %818 = vmatprep.subr.bf16.mxu0 0
      %819 = vmatpush1.bf16.xpose.msra.mxu0 0
      %820 = vmatprep.subr.bf16.mxu0 0
      %821 = vmatpush1.bf16.xpose.msra.mxu0 0
      %822 = vmatprep.subr.bf16.mxu0 0
      %823 = vmatpush1.bf16.xpose.msra.mxu0 0
      %824 = vmatprep.subr.bf16.mxu0 0
      %825 = vmatpush1.bf16.xpose.msra.mxu0 0
      %826 = vmatprep.subr.bf16.mxu0 0
      %827 = vmatpush1.bf16.xpose.msra.mxu0 0
      %828 = vmatprep.subr.bf16.mxu0 0
      %829 = vmatpush1.bf16.xpose.msra.mxu0 0
      %830 = vmatprep.subr.bf16.mxu0 0
      %831 = vmatpush1.bf16.xpose.msra.mxu0 0
      %832 = vmatprep.subr.bf16.mxu0 0
      %833 = vmatpush1.bf16.xpose.msra.mxu0 0
      %834 = vmatprep.subr.bf16.mxu0 0
      %835 = vmatpush1.bf16.xpose.msra.mxu0 0
      %836 = vmatprep.subr.bf16.mxu0 0
      %837 = vmatpush1.bf16.xpose.msra.mxu0 0
      %838 = vmatprep.subr.bf16.mxu0 0
      %839 = vmatpush1.bf16.xpose.msra.mxu0 0
      %840 = vmatprep.mubr.bf16.mxu0 0
      %841 = vmatmul.mubr.bf16.gmra.mrb[0].mxu0 %v803
      %v842 = vpop.f32.mrb[0].mxu0
      %v843 = vadd.f32 0.0, %v842
      %v844 = vpop.f32.mrb[0].mxu0
      %v845 = vpop.f32.mrb[0].mxu0
      %v846 = vpop.f32.mrb[0].mxu0
      %847 = vdwg.mxu0
      %s848 = scalar_lea.vmem [#allocation3], 8
      %v849 = vld [vmem:[%s848] sm:$0xff]
      %v850 = vsel %vm593, %v843, -inf
      %851 = vmax.xlane.f32.xlu0 %v850
      %v852 = vpop.xlane.xlu0 %851
      %v853 = vmax.f32 %v849, %v852
      %v854 = vsub.f32 %v849, %v853
      %v855 = vmul.f32 %v854, 1.442695
      %v856 = vpow.pop %v855
      %858 = vset.pattern.permute.xlu0 0
      %859 = vperm.xlu0 %858, %v853
      %v860 = vpop.permute.xlu0 %859
      %v862 = vsub.f32 %v843, %v860
      %v863 = vmul.f32 %v862, 1.442695
      %v864 = vpow.pop %v863
      %s865 = scalar_lea.vmem [#allocation4], 8
      %v866 = vld [vmem:[%s865] sm:$0xff]
      %v867 = vmul.f32 %v856, %v866
      %v868 = vsel %vm593, %v864, 0.0
      %869 = vadd.xlane.f32.xlu0 %v868
      %v870 = vpop.xlane.xlu0 %869
      %v871 = vadd.f32 %v867, %v870
      %872 = vst.msk [vmem:[%s865] sm:$0xff] %vm692, %v871
      %s873 = scalar_lea.vmem [#allocation5], 8
      %v874 = vld [vmem:[%s873] sm:$0xff]
      %876 = vset.pattern.permute.xlu0 0
      %877 = vperm.xlu0 %876, %v856
      %v878 = vpop.permute.xlu0 %877
      %v880 = vmul.f32 %v878, %v874
      %v881 = vpack.c.bf16 %v864, %v864
      %v883 = vunpack.c.l.b16 %v754
      %v884 = vpack.c.b16 %v883, %v883
      %885 = vrot.lane.b32.xlu0 %v884, 120
      %v886 = vpop.permute.xlu0 %885
      %v888 = vsel %vm593, %v881, 0
      %v891 = vsel %vm705, %v886, 0
      %893 = vmatprep.subr.bf16.mxu0 0
      %894 = vmatpush1.bf16.msra.mxu0 %v891
      %895 = vmatprep.subr.bf16.mxu0 0
      %896 = vmatpush1.bf16.msra.mxu0 0
      %897 = vmatprep.subr.bf16.mxu0 0
      %898 = vmatpush1.bf16.msra.mxu0 0
      %899 = vmatprep.subr.bf16.mxu0 0
      %900 = vmatpush1.bf16.msra.mxu0 0
      %901 = vmatprep.subr.bf16.mxu0 0
      %902 = vmatpush1.bf16.msra.mxu0 0
      %903 = vmatprep.subr.bf16.mxu0 0
      %904 = vmatpush1.bf16.msra.mxu0 0
      %905 = vmatprep.subr.bf16.mxu0 0
      %906 = vmatpush1.bf16.msra.mxu0 0
      %907 = vmatprep.subr.bf16.mxu0 0
      %908 = vmatpush1.bf16.msra.mxu0 0
      %909 = vmatprep.subr.bf16.mxu0 0
      %910 = vmatpush1.bf16.msra.mxu0 0
      %911 = vmatprep.subr.bf16.mxu0 0
      %912 = vmatpush1.bf16.msra.mxu0 0
      %913 = vmatprep.subr.bf16.mxu0 0
      %914 = vmatpush1.bf16.msra.mxu0 0
      %915 = vmatprep.subr.bf16.mxu0 0
      %916 = vmatpush1.bf16.msra.mxu0 0
      %917 = vmatprep.subr.bf16.mxu0 0
      %918 = vmatpush1.bf16.msra.mxu0 0
      %919 = vmatprep.subr.bf16.mxu0 0
      %920 = vmatpush1.bf16.msra.mxu0 0
      %921 = vmatprep.subr.bf16.mxu0 0
      %922 = vmatpush1.bf16.msra.mxu0 0
      %923 = vmatprep.subr.bf16.mxu0 0
      %924 = vmatpush1.bf16.msra.mxu0 0
      %925 = vmatprep.mubr.bf16.mxu0 0
      %926 = vmatmul.mubr.bf16.gmra.mrb[0].mxu0 %v888
      %v927 = vpop.f32.mrb[0].mxu0
      %v928 = vadd.f32 0.0, %v927
      %v929 = vpop.f32.mrb[0].mxu0
      %v930 = vpop.f32.mrb[0].mxu0
      %v931 = vpop.f32.mrb[0].mxu0
      %932 = vdwg.mxu0
      %v933 = vadd.f32 %v880, %v928
      %934 = vst.msk [vmem:[%s873] sm:$0xff] %vm593, %v933
      %935 = vst.msk [vmem:[%s848] sm:$0xff] %vm692, %v853
      %v936 = vld [vmem:[%s358] sm:$0xf]
      %v937 = vunpack.c.l.bf16 %v936
      %v938 = vld [vmem:[%s366] sm:$0xf]
      %v939 = vld [vmem:[%s5] sm:$0x1]
      %v940 = vld [vmem:[%s6] sm:$0x1]
      %942 = vrot.lane.b32.xlu0 %v937, 112
      %v943 = vpop.permute.xlu0 %942
      %v945 = vsel %vm593, %v943, 0.0
      %946 = vadd.xlane.f32.xlu0 %v945
      %v947 = vpop.xlane.xlu0 %946
      %v948 = vmul.f32 %v947, %v597
      %v949 = vsub.f32 %v937, %v948
      %v950 = vmul.f32 %v949, %v949
      %952 = vrot.lane.b32.xlu0 %v950, 112
      %v953 = vpop.permute.xlu0 %952
      %v955 = vsel %vm593, %v953, 0.0
      %956 = vadd.xlane.f32.xlu0 %v955
      %v957 = vpop.xlane.xlu0 %956
      %v958 = vmul.f32 %v957, %v597
      %v959 = vadd.f32 %v958, 1e-06
      %v960 = vrsqrt.pop %v959
      %v961 = vmul.f32 %v949, %v960
      %v963 = vlaneseq
      %v964 = vshrl.u32 %v963, 7
      %v965 = vsub.s32 0, %v964
      %v966 = vrot.slane %v939, %v965
      %967 = vrot.lane.b32.xlu0 %v966, 16
      %v968 = vpop.permute.xlu0 %967
      %v970 = vmul.f32 %v961, %v968
      %v972 = vlaneseq
      %v973 = vshrl.u32 %v972, 7
      %v974 = vsub.s32 0, %v973
      %v975 = vrot.slane %v940, %v974
      %976 = vrot.lane.b32.xlu0 %v975, 16
      %v977 = vpop.permute.xlu0 %976
      %v979 = vadd.f32 %v970, %v977
      %v980 = vpack.c.bf16 %v979, %v979
      %s981 = scalar_lea.vmem [#allocation2], 8
      %v982 = vld [vmem:[%s981] sm:$0xf]
      %984 = vrot.lane.b32.xlu0 %v980, 112
      %v985 = vpop.permute.xlu0 %984
      %v987 = vsel %vm593, %v982, 0
      %v990 = vsel %vm593, %v985, 0
      %992 = vmatprep.subr.bf16.mxu0 0
      %993 = vmatpush1.bf16.xpose.msra.mxu0 %v990
      %994 = vmatprep.subr.bf16.mxu0 0
      %995 = vmatpush1.bf16.xpose.msra.mxu0 0
      %996 = vmatprep.subr.bf16.mxu0 0
      %997 = vmatpush1.bf16.xpose.msra.mxu0 0
      %998 = vmatprep.subr.bf16.mxu0 0
      %999 = vmatpush1.bf16.xpose.msra.mxu0 0
      %1000 = vmatprep.subr.bf16.mxu0 0
      %1001 = vmatpush1.bf16.xpose.msra.mxu0 0
      %1002 = vmatprep.subr.bf16.mxu0 0
      %1003 = vmatpush1.bf16.xpose.msra.mxu0 0
      %1004 = vmatprep.subr.bf16.mxu0 0
      %1005 = vmatpush1.bf16.xpose.msra.mxu0 0
      %1006 = vmatprep.subr.bf16.mxu0 0
      %1007 = vmatpush1.bf16.xpose.msra.mxu0 0
      %1008 = vmatprep.subr.bf16.mxu0 0
      %1009 = vmatpush1.bf16.xpose.msra.mxu0 0
      %1010 = vmatprep.subr.bf16.mxu0 0
      %1011 = vmatpush1.bf16.xpose.msra.mxu0 0
      %1012 = vmatprep.subr.bf16.mxu0 0
      %1013 = vmatpush1.bf16.xpose.msra.mxu0 0
      %1014 = vmatprep.subr.bf16.mxu0 0
      %1015 = vmatpush1.bf16.xpose.msra.mxu0 0
      %1016 = vmatprep.subr.bf16.mxu0 0
      %1017 = vmatpush1.bf16.xpose.msra.mxu0 0
      %1018 = vmatprep.subr.bf16.mxu0 0
      %1019 = vmatpush1.bf16.xpose.msra.mxu0 0
      %1020 = vmatprep.subr.bf16.mxu0 0
      %1021 = vmatpush1.bf16.xpose.msra.mxu0 0
      %1022 = vmatprep.subr.bf16.mxu0 0
      %1023 = vmatpush1.bf16.xpose.msra.mxu0 0
      %1024 = vmatprep.mubr.bf16.mxu0 0
      %1025 = vmatmul.mubr.bf16.gmra.mrb[0].mxu0 %v987
      %v1026 = vpop.f32.mrb[0].mxu0
      %v1027 = vadd.f32 0.0, %v1026
      %v1028 = vpop.f32.mrb[0].mxu0
      %v1029 = vpop.f32.mrb[0].mxu0
      %v1030 = vpop.f32.mrb[0].mxu0
      %1031 = vdwg.mxu0
      %s1032 = scalar_lea.vmem [#allocation3], 16
      %v1033 = vld [vmem:[%s1032] sm:$0xff]
      %v1034 = vsel %vm593, %v1027, -inf
      %1035 = vmax.xlane.f32.xlu0 %v1034
      %v1036 = vpop.xlane.xlu0 %1035
      %v1037 = vmax.f32 %v1033, %v1036
      %v1038 = vsub.f32 %v1033, %v1037
      %v1039 = vmul.f32 %v1038, 1.442695
      %v1040 = vpow.pop %v1039
      %1042 = vset.pattern.permute.xlu0 0
      %1043 = vperm.xlu0 %1042, %v1037
      %v1044 = vpop.permute.xlu0 %1043
      %v1046 = vsub.f32 %v1027, %v1044
      %v1047 = vmul.f32 %v1046, 1.442695
      %v1048 = vpow.pop %v1047
      %s1049 = scalar_lea.vmem [#allocation4], 16
      %v1050 = vld [vmem:[%s1049] sm:$0xff]
      %v1051 = vmul.f32 %v1040, %v1050
      %v1052 = vsel %vm593, %v1048, 0.0
      %1053 = vadd.xlane.f32.xlu0 %v1052
      %v1054 = vpop.xlane.xlu0 %1053
      %v1055 = vadd.f32 %v1051, %v1054
      %1056 = vst.msk [vmem:[%s1049] sm:$0xff] %vm692, %v1055
      %s1057 = scalar_lea.vmem [#allocation5], 16
      %v1058 = vld [vmem:[%s1057] sm:$0xff]
      %1060 = vset.pattern.permute.xlu0 0
      %1061 = vperm.xlu0 %1060, %v1040
      %v1062 = vpop.permute.xlu0 %1061
      %v1064 = vmul.f32 %v1062, %v1058
      %v1065 = vpack.c.bf16 %v1048, %v1048
      %v1067 = vunpack.c.l.b16 %v938
      %v1068 = vpack.c.b16 %v1067, %v1067
      %1069 = vrot.lane.b32.xlu0 %v1068, 112
      %v1070 = vpop.permute.xlu0 %1069
      %v1072 = vsel %vm593, %v1065, 0
      %v1075 = vsel %vm705, %v1070, 0
      %1077 = vmatprep.subr.bf16.mxu0 0
      %1078 = vmatpush1.bf16.msra.mxu0 %v1075
      %1079 = vmatprep.subr.bf16.mxu0 0
      %1080 = vmatpush1.bf16.msra.mxu0 0
      %1081 = vmatprep.subr.bf16.mxu0 0
      %1082 = vmatpush1.bf16.msra.mxu0 0
      %1083 = vmatprep.subr.bf16.mxu0 0
      %1084 = vmatpush1.bf16.msra.mxu0 0
      %1085 = vmatprep.subr.bf16.mxu0 0
      %1086 = vmatpush1.bf16.msra.mxu0 0
      %1087 = vmatprep.subr.bf16.mxu0 0
      %1088 = vmatpush1.bf16.msra.mxu0 0
      %1089 = vmatprep.subr.bf16.mxu0 0
      %1090 = vmatpush1.bf16.msra.mxu0 0
      %1091 = vmatprep.subr.bf16.mxu0 0
      %1092 = vmatpush1.bf16.msra.mxu0 0
      %1093 = vmatprep.subr.bf16.mxu0 0
      %1094 = vmatpush1.bf16.msra.mxu0 0
      %1095 = vmatprep.subr.bf16.mxu0 0
      %1096 = vmatpush1.bf16.msra.mxu0 0
      %1097 = vmatprep.subr.bf16.mxu0 0
      %1098 = vmatpush1.bf16.msra.mxu0 0
      %1099 = vmatprep.subr.bf16.mxu0 0
      %1100 = vmatpush1.bf16.msra.mxu0 0
      %1101 = vmatprep.subr.bf16.mxu0 0
      %1102 = vmatpush1.bf16.msra.mxu0 0
      %1103 = vmatprep.subr.bf16.mxu0 0
      %1104 = vmatpush1.bf16.msra.mxu0 0
      %1105 = vmatprep.subr.bf16.mxu0 0
      %1106 = vmatpush1.bf16.msra.mxu0 0
      %1107 = vmatprep.subr.bf16.mxu0 0
      %1108 = vmatpush1.bf16.msra.mxu0 0
      %1109 = vmatprep.mubr.bf16.mxu0 0
      %1110 = vmatmul.mubr.bf16.gmra.mrb[0].mxu0 %v1072
      %v1111 = vpop.f32.mrb[0].mxu0
      %v1112 = vadd.f32 0.0, %v1111
      %v1113 = vpop.f32.mrb[0].mxu0
      %v1114 = vpop.f32.mrb[0].mxu0
      %v1115 = vpop.f32.mrb[0].mxu0
      %1116 = vdwg.mxu0
      %v1117 = vadd.f32 %v1064, %v1112
      %1118 = vst.msk [vmem:[%s1057] sm:$0xff] %vm593, %v1117
      %1119 = vst.msk [vmem:[%s1032] sm:$0xff] %vm692, %v1037
      %v1120 = vld [vmem:[%s358] sm:$0xf]
      %v1121 = vunpack.c.l.bf16 %v1120
      %v1122 = vld [vmem:[%s366] sm:$0xf]
      %v1123 = vld [vmem:[%s5] sm:$0x1]
      %v1124 = vld [vmem:[%s6] sm:$0x1]
      %1126 = vrot.lane.b32.xlu0 %v1121, 104
      %v1127 = vpop.permute.xlu0 %1126
      %v1129 = vsel %vm593, %v1127, 0.0
      %1130 = vadd.xlane.f32.xlu0 %v1129
      %v1131 = vpop.xlane.xlu0 %1130
      %v1132 = vmul.f32 %v1131, %v597
      %v1133 = vsub.f32 %v1121, %v1132
      %v1134 = vmul.f32 %v1133, %v1133
      %1136 = vrot.lane.b32.xlu0 %v1134, 104
      %v1137 = vpop.permute.xlu0 %1136
      %v1139 = vsel %vm593, %v1137, 0.0
      %1140 = vadd.xlane.f32.xlu0 %v1139
      %v1141 = vpop.xlane.xlu0 %1140
      %v1142 = vmul.f32 %v1141, %v597
      %v1143 = vadd.f32 %v1142, 1e-06
      %v1144 = vrsqrt.pop %v1143
      %v1145 = vmul.f32 %v1133, %v1144
      %v1147 = vlaneseq
      %v1148 = vshrl.u32 %v1147, 7
      %v1149 = vsub.s32 0, %v1148
      %v1150 = vrot.slane %v1123, %v1149
      %1151 = vrot.lane.b32.xlu0 %v1150, 24
      %v1152 = vpop.permute.xlu0 %1151
      %v1154 = vmul.f32 %v1145, %v1152
      %v1156 = vlaneseq
      %v1157 = vshrl.u32 %v1156, 7
      %v1158 = vsub.s32 0, %v1157
      %v1159 = vrot.slane %v1124, %v1158
      %1160 = vrot.lane.b32.xlu0 %v1159, 24
      %v1161 = vpop.permute.xlu0 %1160
      %v1163 = vadd.f32 %v1154, %v1161
      %v1164 = vpack.c.bf16 %v1163, %v1163
      %s1165 = scalar_lea.vmem [#allocation2], 12
      %v1166 = vld [vmem:[%s1165] sm:$0xf]
      %1168 = vrot.lane.b32.xlu0 %v1164, 104
      %v1169 = vpop.permute.xlu0 %1168
      %v1171 = vsel %vm593, %v1166, 0
      %v1174 = vsel %vm593, %v1169, 0
      %1176 = vmatprep.subr.bf16.mxu0 0
      %1177 = vmatpush1.bf16.xpose.msra.mxu0 %v1174
      %1178 = vmatprep.subr.bf16.mxu0 0
      %1179 = vmatpush1.bf16.xpose.msra.mxu0 0
      %1180 = vmatprep.subr.bf16.mxu0 0
      %1181 = vmatpush1.bf16.xpose.msra.mxu0 0
      %1182 = vmatprep.subr.bf16.mxu0 0
      %1183 = vmatpush1.bf16.xpose.msra.mxu0 0
      %1184 = vmatprep.subr.bf16.mxu0 0
      %1185 = vmatpush1.bf16.xpose.msra.mxu0 0
      %1186 = vmatprep.subr.bf16.mxu0 0
      %1187 = vmatpush1.bf16.xpose.msra.mxu0 0
      %1188 = vmatprep.subr.bf16.mxu0 0
      %1189 = vmatpush1.bf16.xpose.msra.mxu0 0
      %1190 = vmatprep.subr.bf16.mxu0 0
      %1191 = vmatpush1.bf16.xpose.msra.mxu0 0
      %1192 = vmatprep.subr.bf16.mxu0 0
      %1193 = vmatpush1.bf16.xpose.msra.mxu0 0
      %1194 = vmatprep.subr.bf16.mxu0 0
      %1195 = vmatpush1.bf16.xpose.msra.mxu0 0
      %1196 = vmatprep.subr.bf16.mxu0 0
      %1197 = vmatpush1.bf16.xpose.msra.mxu0 0
      %1198 = vmatprep.subr.bf16.mxu0 0
      %1199 = vmatpush1.bf16.xpose.msra.mxu0 0
      %1200 = vmatprep.subr.bf16.mxu0 0
      %1201 = vmatpush1.bf16.xpose.msra.mxu0 0
      %1202 = vmatprep.subr.bf16.mxu0 0
      %1203 = vmatpush1.bf16.xpose.msra.mxu0 0
      %1204 = vmatprep.subr.bf16.mxu0 0
      %1205 = vmatpush1.bf16.xpose.msra.mxu0 0
      %1206 = vmatprep.subr.bf16.mxu0 0
      %1207 = vmatpush1.bf16.xpose.msra.mxu0 0
      %1208 = vmatprep.mubr.bf16.mxu0 0
      %1209 = vmatmul.mubr.bf16.gmra.mrb[0].mxu0 %v1171
      %v1210 = vpop.f32.mrb[0].mxu0
      %v1211 = vadd.f32 0.0, %v1210
      %v1212 = vpop.f32.mrb[0].mxu0
      %v1213 = vpop.f32.mrb[0].mxu0
      %v1214 = vpop.f32.mrb[0].mxu0
      %1215 = vdwg.mxu0
      %s1216 = scalar_lea.vmem [#allocation3], 24
      %v1217 = vld [vmem:[%s1216] sm:$0xff]
      %v1218 = vsel %vm593, %v1211, -inf
      %1219 = vmax.xlane.f32.xlu0 %v1218
      %v1220 = vpop.xlane.xlu0 %1219
      %v1221 = vmax.f32 %v1217, %v1220
      %v1222 = vsub.f32 %v1217, %v1221
      %v1223 = vmul.f32 %v1222, 1.442695
      %v1224 = vpow.pop %v1223
      %1226 = vset.pattern.permute.xlu0 0
      %1227 = vperm.xlu0 %1226, %v1221
      %v1228 = vpop.permute.xlu0 %1227
      %v1230 = vsub.f32 %v1211, %v1228
      %v1231 = vmul.f32 %v1230, 1.442695
      %v1232 = vpow.pop %v1231
      %s1233 = scalar_lea.vmem [#allocation4], 24
      %v1234 = vld [vmem:[%s1233] sm:$0xff]
      %v1235 = vmul.f32 %v1224, %v1234
      %v1236 = vsel %vm593, %v1232, 0.0
      %1237 = vadd.xlane.f32.xlu0 %v1236
      %v1238 = vpop.xlane.xlu0 %1237
      %v1239 = vadd.f32 %v1235, %v1238
      %1240 = vst.msk [vmem:[%s1233] sm:$0xff] %vm692, %v1239
      %s1241 = scalar_lea.vmem [#allocation5], 24
      %v1242 = vld [vmem:[%s1241] sm:$0xff]
      %1244 = vset.pattern.permute.xlu0 0
      %1245 = vperm.xlu0 %1244, %v1224
      %v1246 = vpop.permute.xlu0 %1245
      %v1248 = vmul.f32 %v1246, %v1242
      %v1249 = vpack.c.bf16 %v1232, %v1232
      %v1251 = vunpack.c.l.b16 %v1122
      %v1252 = vpack.c.b16 %v1251, %v1251
      %1253 = vrot.lane.b32.xlu0 %v1252, 104
      %v1254 = vpop.permute.xlu0 %1253
      %v1256 = vsel %vm593, %v1249, 0
      %v1259 = vsel %vm705, %v1254, 0
      %1261 = vmatprep.subr.bf16.mxu0 0
      %1262 = vmatpush1.bf16.msra.mxu0 %v1259
      %1263 = vmatprep.subr.bf16.mxu0 0
      %1264 = vmatpush1.bf16.msra.mxu0 0
      %1265 = vmatprep.subr.bf16.mxu0 0
      %1266 = vmatpush1.bf16.msra.mxu0 0
      %1267 = vmatprep.subr.bf16.mxu0 0
      %1268 = vmatpush1.bf16.msra.mxu0 0
      %1269 = vmatprep.subr.bf16.mxu0 0
      %1270 = vmatpush1.bf16.msra.mxu0 0
      %1271 = vmatprep.subr.bf16.mxu0 0
      %1272 = vmatpush1.bf16.msra.mxu0 0
      %1273 = vmatprep.subr.bf16.mxu0 0
      %1274 = vmatpush1.bf16.msra.mxu0 0
      %1275 = vmatprep.subr.bf16.mxu0 0
      %1276 = vmatpush1.bf16.msra.mxu0 0
      %1277 = vmatprep.subr.bf16.mxu0 0
      %1278 = vmatpush1.bf16.msra.mxu0 0
      %1279 = vmatprep.subr.bf16.mxu0 0
      %1280 = vmatpush1.bf16.msra.mxu0 0
      %1281 = vmatprep.subr.bf16.mxu0 0
      %1282 = vmatpush1.bf16.msra.mxu0 0
      %1283 = vmatprep.subr.bf16.mxu0 0
      %1284 = vmatpush1.bf16.msra.mxu0 0
      %1285 = vmatprep.subr.bf16.mxu0 0
      %1286 = vmatpush1.bf16.msra.mxu0 0
      %1287 = vmatprep.subr.bf16.mxu0 0
      %1288 = vmatpush1.bf16.msra.mxu0 0
      %1289 = vmatprep.subr.bf16.mxu0 0
      %1290 = vmatpush1.bf16.msra.mxu0 0
      %1291 = vmatprep.subr.bf16.mxu0 0
      %1292 = vmatpush1.bf16.msra.mxu0 0
      %1293 = vmatprep.mubr.bf16.mxu0 0
      %1294 = vmatmul.mubr.bf16.gmra.mrb[0].mxu0 %v1256
      %v1295 = vpop.f32.mrb[0].mxu0
      %v1296 = vadd.f32 0.0, %v1295
      %v1297 = vpop.f32.mrb[0].mxu0
      %v1298 = vpop.f32.mrb[0].mxu0
      %v1299 = vpop.f32.mrb[0].mxu0
      %1300 = vdwg.mxu0
      %v1301 = vadd.f32 %v1248, %v1296
      %1302 = vst.msk [vmem:[%s1241] sm:$0xff] %vm593, %v1301
      %1303 = vst.msk [vmem:[%s1216] sm:$0xff] %vm692, %v1221
      // Predicated region
      $region53: #{transformer.11} parent=47 // pred_check
        %p1304 = pneg %p375
      $region54: #{transformer.11} parent=47 // pred_check_branch
        %1306 = sbr.rel (%p1304) target = $region56
      $region55: #{transformer.11} parent=47 // pred_region
        %v1307 = vld [vmem:[#allocation4] sm:$0xff]
        %v1308 = vrcp.pop %v1307
        %v1309 = vld [vmem:[#allocation5] sm:$0xff]
        %1311 = vset.pattern.permute.xlu0 0
        %1312 = vperm.xlu0 %1311, %v1308
        %v1313 = vpop.permute.xlu0 %1312
        %v1315 = vmul.f32 %v1309, %v1313
        %v1316 = vpack.c.bf16 %v1315, %v1315
        %v1317 = vld [vmem:[%s865] sm:$0xff]
        %v1318 = vrcp.pop %v1317
        %v1319 = vld [vmem:[%s873] sm:$0xff]
        %1321 = vset.pattern.permute.xlu0 0
        %1322 = vperm.xlu0 %1321, %v1318
        %v1323 = vpop.permute.xlu0 %1322
        %v1325 = vmul.f32 %v1319, %v1323
        %v1326 = vpack.c.bf16 %v1325, %v1325
        %v1327 = vld [vmem:[%s1049] sm:$0xff]
        %v1328 = vrcp.pop %v1327
        %v1329 = vld [vmem:[%s1057] sm:$0xff]
        %1331 = vset.pattern.permute.xlu0 0
        %1332 = vperm.xlu0 %1331, %v1328
        %v1333 = vpop.permute.xlu0 %1332
        %v1335 = vmul.f32 %v1329, %v1333
        %v1336 = vpack.c.bf16 %v1335, %v1335
        %v1337 = vld [vmem:[%s1233] sm:$0xff]
        %v1338 = vrcp.pop %v1337
        %v1339 = vld [vmem:[%s1241] sm:$0xff]
        %1341 = vset.pattern.permute.xlu0 0
        %1342 = vperm.xlu0 %1341, %v1338
        %v1343 = vpop.permute.xlu0 %1342
        %v1345 = vmul.f32 %v1339, %v1343
        %v1346 = vpack.c.bf16 %v1345, %v1345
        %1348 = vrot.lane.b32.xlu0 %v1326, 8
        %v1349 = vpop.permute.xlu0 %1348
        %1351 = vrot.lane.b32.xlu0 %v1336, 16
        %v1352 = vpop.permute.xlu0 %1351
        %1354 = vrot.lane.b32.xlu0 %v1346, 24
        %v1355 = vpop.permute.xlu0 %1354
        %v1358 = vsel %vm593, %v1316, %v1349
        %vm1359 = vcmask 130048
        %v1361 = vsel %vm1359, %v1358, %v1352
        %vm1362 = vcmask 195584
        %v1364 = vsel %vm1362, %v1361, %v1355
        %vm1366 = vcmask 257024
        %1367 = vst.msk [vmem:[%s373] sm:$0xf] %vm1366, %v1364
      $region56: #{transformer.11} parent=47 // pred_fallthru
        _
      %p1368 = scmp.lt.s32.totalorder %s23, 1
      %s1369 = scalar_select %p1368, %s23, 1
      %p1370 = scmp.lt.s32.totalorder %s24, 0
      %s1371 = scalar_select %p1370, %s24, 0
      %s1372 = sadd.s32 %s1371, %s1369
      %s1373 = smul.addr %s1372, 4
      %s1374 = scalar_lea.vmem %s7, %s1373
      // Predicated region
      $region57: #{transformer.11} parent=47 // pred_check
        %p1375 = pneg %p225
      $region58: #{transformer.11} parent=47 // pred_check_branch
        %1377 = sbr.rel (%p1375) target = $region60
      $region59: #{transformer.11} parent=47 // pred_region
        _
      $region60: #{transformer.11} parent=47 // pred_fallthru
        _
    $region48: #{transformer.11} parent=5 // pred_fallthru
      _
    %p1378 = scmp.le.s32.totalorder 2, %s13
    // Predicated region
    $region61: #{transformer.11} parent=5 // pred_check
      %p1379 = pneg %p1378
    $region62: #{transformer.11} parent=5 // pred_check_branch
      %1381 = sbr.rel (%p1379) target = $region64
    $region63: #{transformer.11} parent=5 // pred_region
      %s1382 = ssub.s32 %s13, 2
      // Predicated region
      $region65: #{transformer.11} parent=63 // pred_check
        %p1383 = pneg %p231
      $region66: #{transformer.11} parent=63 // pred_check_branch
        %1385 = sbr.rel (%p1383) target = $region68
      $region67: #{transformer.11} parent=63 // pred_region
        %p1386 = scmp.lt.s32.totalorder %s26, 1
        %s1387 = scalar_select %p1386, %s26, 1
        %p1388 = scmp.lt.s32.totalorder %s27, 0
        %s1389 = scalar_select %p1388, %s27, 0
        %s1390 = sadd.s32 %s1389, %s1387
        %s1391 = smul.addr %s1390, 4
        %s1392 = scalar_lea.vmem %s7, %s1391
      $region68: #{transformer.11} parent=63 // pred_fallthru
        _
    $region64: #{transformer.11} parent=5 // pred_fallthru
      _
  $region6: #{transformer.11} parent=0 // loop_footer
    %s17 = sadd.s32 1, %s13
  $region7: #{transformer.11} parent=0 // loop_footer_branch
    %12 = sbr.rel target = $region3
  $region8: #{transformer.11} parent=0 // loop_exit
    _

// kernel: transformer.14
$region0: #{transformer.14}
  #allocation0 [shape = 'u32[]', space=smem, size = 0x4, offset = 0x4, fixed_abs, tag = 'smem constant byte address 0x4 - core index']
  #allocation1 [shape = 'u32[144,128]{1,0:T(1,128)}', space=vmem, size = 0x12000, scoped, tag = 'internal scratch']
  %s0 = inlined_call_operand.vmem [shape: bf16[16,128], index: 0, kind: input, shape index: {}]
  %s1 = inlined_call_operand.vmem [shape: bf16[128,32], index: 1, kind: input, shape index: {}]
  %s2 = inlined_call_operand.vmem [shape: f32[1,32], index: 2, kind: input, shape index: {}]
  %s3 = inlined_call_operand.vmem [shape: f32[16,32], index: 3, kind: input, shape index: {}]
  %s4 = inlined_call_operand.vmem [shape: f32[16,32], index: 4, kind: output, shape index: {}]
  %s5 = sld [smem:[#allocation0]]
  $region34: #{transformer.14} parent=0
    _
  %s7 = ssub.s32 1, %s5
  %s8 = scalar_select 0, %s7, %s5
  // Predicated region
  $region2: #{transformer.14} parent=0 // pred_check
    _
  $region3: #{transformer.14} parent=0 // pred_check_branch
    %10 = sbr.rel (0) target = $region5
  $region4: #{transformer.14} parent=0 // pred_region
    _
  $region5: #{transformer.14} parent=0 // pred_fallthru
    _
  // Predicated region
  $region6: #{transformer.14} parent=0 // pred_check
    _
  $region7: #{transformer.14} parent=0 // pred_check_branch
    %12 = sbr.rel (0) target = $region9
  $region8: #{transformer.14} parent=0 // pred_region
    _
  $region9: #{transformer.14} parent=0 // pred_fallthru
    _
  // Predicated region
  $region10: #{transformer.14} parent=0 // pred_check
    _
  $region11: #{transformer.14} parent=0 // pred_check_branch
    %14 = sbr.rel (0) target = $region13
  $region12: #{transformer.14} parent=0 // pred_region
    _
  $region13: #{transformer.14} parent=0 // pred_fallthru
    _
  // Predicated region
  $region14: #{transformer.14} parent=0 // pred_check
    _
  $region15: #{transformer.14} parent=0 // pred_check_branch
    %16 = sbr.rel (0) target = $region17
  $region16: #{transformer.14} parent=0 // pred_region
    _
  $region17: #{transformer.14} parent=0 // pred_fallthru
    _
  %p18 = scmp.eq.s32.totalorder 0, 0
  // Predicated region
  $region18: #{transformer.14} parent=0 // pred_check
    %p19 = pneg %p18
  $region19: #{transformer.14} parent=0 // pred_check_branch
    %21 = sbr.rel (%p19) target = $region21
  $region20: #{transformer.14} parent=0 // pred_region
    %vm22 = vcmask 261120
    %23 = vst.msk [vmem:[%s4] sm:$0xff] %vm22, 0.0
    %24 = vst.msk [vmem:[%s4 + $0x8] sm:$0xff] %vm22, 0.0
  $region21: #{transformer.14} parent=0 // pred_fallthru
    _
  %v25 = vld [vmem:[%s4] sm:$0xff]
  %v26 = vld [vmem:[%s4 + $0x8] sm:$0xff]
  %v27 = vld [vmem:[%s0] sm:$0xf]
  %v28 = vld [vmem:[%s0 + $0x4] sm:$0xf]
  %v29 = vld [vmem:[%s1] sm:$0xf]
  %v30 = vld [vmem:[%s1 + $0x4] sm:$0xf]
  %v31 = vld [vmem:[%s1 + $0x8] sm:$0xf]
  %v32 = vld [vmem:[%s1 + $0xc] sm:$0xf]
  %v33 = vld [vmem:[%s1 + $0x10] sm:$0xf]
  %v34 = vld [vmem:[%s1 + $0x14] sm:$0xf]
  %v35 = vld [vmem:[%s1 + $0x18] sm:$0xf]
  %v36 = vld [vmem:[%s1 + $0x1c] sm:$0xf]
  %v37 = vld [vmem:[%s1 + $0x20] sm:$0xf]
  %v38 = vld [vmem:[%s1 + $0x24] sm:$0xf]
  %v39 = vld [vmem:[%s1 + $0x28] sm:$0xf]
  %v40 = vld [vmem:[%s1 + $0x2c] sm:$0xf]
  %v41 = vld [vmem:[%s1 + $0x30] sm:$0xf]
  %v42 = vld [vmem:[%s1 + $0x34] sm:$0xf]
  %v43 = vld [vmem:[%s1 + $0x38] sm:$0xf]
  %v44 = vld [vmem:[%s1 + $0x3c] sm:$0xf]
  %v47 = vunpack.c.l.b16 %v27
  %v48 = vunpack.c.l.b16 %v28
  %v49 = vpack.c.b16 %v48, %v47
  %v67 = vunpack.c.l.b16 %v29
  %v68 = vunpack.c.l.b16 %v30
  %v69 = vunpack.c.l.b16 %v31
  %v70 = vunpack.c.l.b16 %v32
  %v71 = vunpack.c.l.b16 %v33
  %v72 = vunpack.c.l.b16 %v34
  %v73 = vunpack.c.l.b16 %v35
  %v74 = vunpack.c.l.b16 %v36
  %v75 = vunpack.c.l.b16 %v37
  %v76 = vunpack.c.l.b16 %v38
  %v77 = vunpack.c.l.b16 %v39
  %v78 = vunpack.c.l.b16 %v40
  %v79 = vunpack.c.l.b16 %v41
  %v80 = vunpack.c.l.b16 %v42
  %v81 = vunpack.c.l.b16 %v43
  %v82 = vunpack.c.l.b16 %v44
  %v83 = vpack.c.b16 %v68, %v67
  %v84 = vpack.c.b16 %v70, %v69
  %v85 = vpack.c.b16 %v72, %v71
  %v86 = vpack.c.b16 %v74, %v73
  %v87 = vpack.c.b16 %v76, %v75
  %v88 = vpack.c.b16 %v78, %v77
  %v89 = vpack.c.b16 %v80, %v79
  %v90 = vpack.c.b16 %v82, %v81
  %99 = vmatprep.subr.bf16.mxu0 0
  %100 = vmatpush1.bf16.msra.mxu0 %v83
  %101 = vmatprep.subr.bf16.mxu0 0
  %102 = vmatpush1.bf16.msra.mxu0 %v84
  %103 = vmatprep.subr.bf16.mxu0 0
  %104 = vmatpush1.bf16.msra.mxu0 %v85
  %105 = vmatprep.subr.bf16.mxu0 0
  %106 = vmatpush1.bf16.msra.mxu0 %v86
  %107 = vmatprep.subr.bf16.mxu0 0
  %108 = vmatpush1.bf16.msra.mxu0 %v87
  %109 = vmatprep.subr.bf16.mxu0 0
  %110 = vmatpush1.bf16.msra.mxu0 %v88
  %111 = vmatprep.subr.bf16.mxu0 0
  %112 = vmatpush1.bf16.msra.mxu0 %v89
  %113 = vmatprep.subr.bf16.mxu0 0
  %114 = vmatpush1.bf16.msra.mxu0 %v90
  %115 = vmatprep.subr.bf16.mxu0 0
  %116 = vmatpush1.bf16.msra.mxu0 0
  %117 = vmatprep.subr.bf16.mxu0 0
  %118 = vmatpush1.bf16.msra.mxu0 0
  %119 = vmatprep.subr.bf16.mxu0 0
  %120 = vmatpush1.bf16.msra.mxu0 0
  %121 = vmatprep.subr.bf16.mxu0 0
  %122 = vmatpush1.bf16.msra.mxu0 0
  %123 = vmatprep.subr.bf16.mxu0 0
  %124 = vmatpush1.bf16.msra.mxu0 0
  %125 = vmatprep.subr.bf16.mxu0 0
  %126 = vmatpush1.bf16.msra.mxu0 0
  %127 = vmatprep.subr.bf16.mxu0 0
  %128 = vmatpush1.bf16.msra.mxu0 0
  %129 = vmatprep.subr.bf16.mxu0 0
  %130 = vmatpush1.bf16.msra.mxu0 0
  %131 = vmatprep.mubr.bf16.mxu0 0
  %132 = vmatmul.mubr.bf16.gmra.mrb[0].mxu0 %v49
  %v133 = vpop.f32.mrb[0].mxu0
  %v134 = vadd.f32 0.0, %v133
  %v135 = vpop.f32.mrb[0].mxu0
  %v136 = vpop.f32.mrb[0].mxu0
  %v137 = vadd.f32 0.0, %v136
  %v138 = vpop.f32.mrb[0].mxu0
  %139 = vdwg.mxu0
  %v140 = vadd.f32 %v25, %v134
  %v141 = vadd.f32 %v26, %v137
  %vm142 = vcmask 261120
  %143 = vst.msk [vmem:[%s4] sm:$0xff] %vm142, %v140
  %144 = vst.msk [vmem:[%s4 + $0x8] sm:$0xff] %vm142, %v141
  // Predicated region
  $region22: #{transformer.14} parent=0 // pred_check
    %p145 = pneg %p18
  $region23: #{transformer.14} parent=0 // pred_check_branch
    %147 = sbr.rel (%p145) target = $region25
  $region24: #{transformer.14} parent=0 // pred_region
    %v148 = vld [vmem:[%s4] sm:$0xff]
    %v149 = vld [vmem:[%s4 + $0x8] sm:$0xff]
    %v150 = vld [vmem:[%s2] sm:$0x1]
    %v151 = vld [vmem:[%s3] sm:$0xff]
    %v152 = vld [vmem:[%s3 + $0x8] sm:$0xff]
    %v154 = vlaneseq
    %v155 = vshrl.u32 %v154, 7
    %v156 = vsub.s32 0, %v155
    %v157 = vrot.slane %v150, %v156
    %v159 = vadd.f32 %v157, %v151
    %v160 = vadd.f32 %v157, %v152
    %v161 = vadd.f32 %v148, %v159
    %v162 = vadd.f32 %v149, %v160
    %163 = vst.msk [vmem:[%s4] sm:$0xff] %vm142, %v161
    %164 = vst.msk [vmem:[%s4 + $0x8] sm:$0xff] %vm142, %v162
  $region25: #{transformer.14} parent=0 // pred_fallthru
    _
  // Predicated region
  $region26: #{transformer.14} parent=0 // pred_check
    _
  $region27: #{transformer.14} parent=0 // pred_check_branch
    %166 = sbr.rel (0) target = $region29
  $region28: #{transformer.14} parent=0 // pred_region
    _
  $region29: #{transformer.14} parent=0 // pred_fallthru
    _
  // Predicated region
  $region30: #{transformer.14} parent=0 // pred_check
    _
  $region31: #{transformer.14} parent=0 // pred_check_branch
    %168 = sbr.rel (0) target = $region33
  $region32: #{transformer.14} parent=0 // pred_region
    _
  $region33: #{transformer.14} parent=0 // pred_fallthru
    _

// kernel: transformer.15
$region0: #{transformer.15}
  #allocation0 [shape = 'u32[]', space=smem, size = 0x4, offset = 0x4, fixed_abs, tag = 'smem constant byte address 0x4 - core index']
  #allocation1 [shape = 'u32[144,128]{1,0:T(1,128)}', space=vmem, size = 0x12000, scoped, tag = 'internal scratch']
  #allocation2 [shape = 'bf16[16,32]{1,0:T(16,128)(2,1)}', space=vmem, size = 0x1000, scoped, tag = 'scratch operand']
  %s0 = inlined_call_operand.vmem [shape: f32[16,32], index: 0, kind: input, shape index: {}]
  %s1 = inlined_call_operand.vmem [shape: f32[1,32], index: 1, kind: input, shape index: {}]
  %s2 = inlined_call_operand.vmem [shape: f32[1,32], index: 2, kind: input, shape index: {}]
  %s3 = inlined_call_operand.vmem [shape: bf16[3,32,32], index: 3, kind: input, shape index: {}]
  %s4 = inlined_call_operand.vmem [shape: f32[3,1,32], index: 4, kind: input, shape index: {}]
  %s5 = inlined_call_operand.vmem [shape: bf16[3,16,32], index: 5, kind: output, shape index: {}]
  %s6 = sld [smem:[#allocation0]]
  $region57: #{transformer.15} parent=0
    _
  %s8 = ssub.s32 1, %s6
  %s9 = scalar_select 0, %s8, %s6
  loop: start=0, step=1, limit=5
  $region2: #{transformer.15} parent=0 // loop_pre_header
    _
  $region3: #{transformer.15} parent=0 // loop_header
    %s11 = sphi 0, %s15
    %p12 = scmp.ge.s32.totalorder %s11, 5
    %s18 = sphi 0, %s37
    %s19 = sphi 0, %s33
    %s20 = sphi 0, %s29
    %s21 = sphi 0, %s18
    %s22 = sphi 0, %s19
    %s23 = sphi 0, %s20
    %s24 = sphi 0, %s21
    %s25 = sphi 0, %s22
    %s26 = sphi 0, %s23
    %s40 = sphi 0, %s42
    %s43 = sphi 0, %s40
    %s44 = sphi 0, %s43
    %s60 = sphi 0, %s44
    %s64 = sphi 0, %s64
    %s66 = sphi 0, %s64
    %s67 = sphi 0, %s66
    %s81 = sphi 0, %s67
    %s85 = sphi 0, %s85
    %s87 = sphi 0, %s85
    %s88 = sphi 0, %s87
    %s102 = sphi 0, %s88
    %s110 = sphi 0, %s112
    %s113 = sphi 0, %s110
    %s114 = sphi 0, %s113
    %s130 = sphi 0, %s114
    %s138 = sphi 0, %s140
    %s141 = sphi 0, %s138
    %s142 = sphi 0, %s141
    %s158 = sphi 0, %s142
    %s168 = sphi 0, %s170
    %s171 = sphi 0, %s168
    %s172 = sphi 0, %s171
    %s188 = sphi 0, %s172
  $region4: #{transformer.15} parent=0 // loop_header_branch
    %14 = sbr.rel (%p12) target = $region8
  $region5: #{transformer.15} parent=0 // loop_body
    %s16 = ssub.s32 %s11, 1
    %s17 = ssub.s32 %s11, 2
    %s27 = sadd.s32 1, %s20
    %p28 = scmp.ge.s32.totalorder %s27, 1
    %s29 = scalar_select %p28, 0, %s27
    %s30 = sadd.s32 1, %s19
    %s31 = scalar_select %p28, %s30, %s19
    %p32 = scmp.ge.s32.totalorder %s31, 3
    %s33 = scalar_select %p32, 0, %s31
    %s34 = sadd.s32 1, %s18
    %s35 = scalar_select %p32, %s34, %s18
    %p36 = scmp.ge.s32.totalorder %s35, 1
    %s37 = scalar_select %p36, 0, %s35
    %s38 = ssub.s32 %s18, %s37
    %p39 = scmp.eq.s32.totalorder %s38, 0
    %s41 = sadd.s32 %s40, 1
    %s42 = scalar_select %p39, %s40, %s41
    %p45 = pneg %p39
    %p46 = scmp.eq.s32.totalorder %s11, 2
    %p47 = por %p45, %p46
    %p48 = scmp.ne.s32.totalorder %s40, %s43
    %p49 = scmp.eq.s32.totalorder %s11, 0
    %p50 = por %p48, %p49
    %p51 = scmp.ne.s32.totalorder %s40, %s43
    %p52 = scmp.eq.s32.totalorder %s16, 2
    %p53 = por %p51, %p52
    %p54 = scmp.ne.s32.totalorder %s43, %s44
    %p55 = scmp.eq.s32.totalorder %s16, 0
    %p56 = por %p54, %p55
    %p57 = scmp.ne.s32.totalorder %s43, %s44
    %p58 = scmp.eq.s32.totalorder %s17, 2
    %p59 = por %p57, %p58
    %p61 = scmp.ne.s32.totalorder %s44, %s60
    %p62 = scmp.eq.s32.totalorder %s17, 0
    %p63 = por %p61, %p62
    %s65 = sadd.s32 %s64, 1
    %p68 = scmp.eq.s32.totalorder %s11, 2
    %p69 = scmp.ne.s32.totalorder %s64, %s66
    %p70 = scmp.eq.s32.totalorder %s11, 0
    %p71 = por %p69, %p70
    %p72 = scmp.ne.s32.totalorder %s64, %s66
    %p73 = scmp.eq.s32.totalorder %s16, 2
    %p74 = por %p72, %p73
    %p75 = scmp.ne.s32.totalorder %s66, %s67
    %p76 = scmp.eq.s32.totalorder %s16, 0
    %p77 = por %p75, %p76
    %p78 = scmp.ne.s32.totalorder %s66, %s67
    %p79 = scmp.eq.s32.totalorder %s17, 2
    %p80 = por %p78, %p79
    %p82 = scmp.ne.s32.totalorder %s67, %s81
    %p83 = scmp.eq.s32.totalorder %s17, 0
    %p84 = por %p82, %p83
    %s86 = sadd.s32 %s85, 1
    %p89 = scmp.eq.s32.totalorder %s11, 2
    %p90 = scmp.ne.s32.totalorder %s85, %s87
    %p91 = scmp.eq.s32.totalorder %s11, 0
    %p92 = por %p90, %p91
    %p93 = scmp.ne.s32.totalorder %s85, %s87
    %p94 = scmp.eq.s32.totalorder %s16, 2
    %p95 = por %p93, %p94
    %p96 = scmp.ne.s32.totalorder %s87, %s88
    %p97 = scmp.eq.s32.totalorder %s16, 0
    %p98 = por %p96, %p97
    %p99 = scmp.ne.s32.totalorder %s87, %s88
    %p100 = scmp.eq.s32.totalorder %s17, 2
    %p101 = por %p99, %p100
    %p103 = scmp.ne.s32.totalorder %s88, %s102
    %p104 = scmp.eq.s32.totalorder %s17, 0
    %p105 = por %p103, %p104
    %s106 = ssub.s32 %s19, %s33
    %s107 = ssub.s32 %s20, %s29
    %s108 = sor.u32 %s106, %s107
    %p109 = scmp.eq.s32.totalorder %s108, 0
    %s111 = sadd.s32 %s110, 1
    %s112 = scalar_select %p109, %s110, %s111
    %p115 = pneg %p109
    %p116 = scmp.eq.s32.totalorder %s11, 2
    %p117 = por %p115, %p116
    %p118 = scmp.ne.s32.totalorder %s110, %s113
    %p119 = scmp.eq.s32.totalorder %s11, 0
    %p120 = por %p118, %p119
    %p121 = scmp.ne.s32.totalorder %s110, %s113
    %p122 = scmp.eq.s32.totalorder %s16, 2
    %p123 = por %p121, %p122
    %p124 = scmp.ne.s32.totalorder %s113, %s114
    %p125 = scmp.eq.s32.totalorder %s16, 0
    %p126 = por %p124, %p125
    %p127 = scmp.ne.s32.totalorder %s113, %s114
    %p128 = scmp.eq.s32.totalorder %s17, 2
    %p129 = por %p127, %p128
    %p131 = scmp.ne.s32.totalorder %s114, %s130
    %p132 = scmp.eq.s32.totalorder %s17, 0
    %p133 = por %p131, %p132
    %s134 = ssub.s32 %s19, %s33
    %s135 = ssub.s32 %s20, %s29
    %s136 = sor.u32 %s134, %s135
    %p137 = scmp.eq.s32.totalorder %s136, 0
    %s139 = sadd.s32 %s138, 1
    %s140 = scalar_select %p137, %s138, %s139
    %p143 = pneg %p137
    %p144 = scmp.eq.s32.totalorder %s11, 2
    %p145 = por %p143, %p144
    %p146 = scmp.ne.s32.totalorder %s138, %s141
    %p147 = scmp.eq.s32.totalorder %s11, 0
    %p148 = por %p146, %p147
    %p149 = scmp.ne.s32.totalorder %s138, %s141
    %p150 = scmp.eq.s32.totalorder %s16, 2
    %p151 = por %p149, %p150
    %p152 = scmp.ne.s32.totalorder %s141, %s142
    %p153 = scmp.eq.s32.totalorder %s16, 0
    %p154 = por %p152, %p153
    %p155 = scmp.ne.s32.totalorder %s141, %s142
    %p156 = scmp.eq.s32.totalorder %s17, 2
    %p157 = por %p155, %p156
    %p159 = scmp.ne.s32.totalorder %s142, %s158
    %p160 = scmp.eq.s32.totalorder %s17, 0
    %p161 = por %p159, %p160
    %s162 = ssub.s32 %s19, %s33
    %s163 = ssub.s32 %s18, %s37
    %s164 = sor.u32 %s162, %s163
    %s165 = ssub.s32 %s20, %s29
    %s166 = sor.u32 %s164, %s165
    %p167 = scmp.eq.s32.totalorder %s166, 0
    %s169 = sadd.s32 %s168, 1
    %s170 = scalar_select %p167, %s168, %s169
    %p173 = pneg %p167
    %p174 = scmp.eq.s32.totalorder %s11, 2
    %p175 = por %p173, %p174
    %p176 = scmp.ne.s32.totalorder %s168, %s171
    %p177 = scmp.eq.s32.totalorder %s11, 0
    %p178 = por %p176, %p177
    %p179 = scmp.ne.s32.totalorder %s168, %s171
    %p180 = scmp.eq.s32.totalorder %s16, 2
    %p181 = por %p179, %p180
    %p182 = scmp.ne.s32.totalorder %s171, %s172
    %p183 = scmp.eq.s32.totalorder %s16, 0
    %p184 = por %p182, %p183
    %p185 = scmp.ne.s32.totalorder %s171, %s172
    %p186 = scmp.eq.s32.totalorder %s17, 2
    %p187 = por %p185, %p186
    %p189 = scmp.ne.s32.totalorder %s172, %s188
    %p190 = scmp.eq.s32.totalorder %s17, 0
    %p191 = por %p189, %p190
    %p192 = scmp.le.s32.totalorder 1, %s11
    %p193 = scmp.lt.s32.totalorder %s11, 4
    %p194 = pnand %p192, %p193
    %p195 = pneg %p194
    // Predicated region
    $region9: #{transformer.15} parent=5 // pred_check
      _
    $region10: #{transformer.15} parent=5 // pred_check_branch
      %197 = sbr.rel (%p194) target = $region12
    $region11: #{transformer.15} parent=5 // pred_region
      %s198 = ssub.s32 %s11, 1
      // Predicated region
      $region13: #{transformer.15} parent=11 // pred_check
        %p199 = pneg %p56
      $region14: #{transformer.15} parent=11 // pred_check_branch
        %201 = sbr.rel (%p199) target = $region16
      $region15: #{transformer.15} parent=11 // pred_region
        %s202 = smul.u32 2, %s21
        %p203 = scmp.lt.s32.totalorder %s202, 1
        %s204 = scalar_select %p203, %s202, 1
        %s205 = smul.addr %s204, 8
        %s206 = scalar_lea.vmem %s0, %s205
        %s207 = smul.u32 2, %s21
      $region16: #{transformer.15} parent=11 // pred_fallthru
        _
      // Predicated region
      $region17: #{transformer.15} parent=11 // pred_check
        %p208 = pneg %p77
      $region18: #{transformer.15} parent=11 // pred_check_branch
        %210 = sbr.rel (%p208) target = $region20
      $region19: #{transformer.15} parent=11 // pred_region
        _
      $region20: #{transformer.15} parent=11 // pred_fallthru
        _
      // Predicated region
      $region21: #{transformer.15} parent=11 // pred_check
        %p211 = pneg %p98
      $region22: #{transformer.15} parent=11 // pred_check_branch
        %213 = sbr.rel (%p211) target = $region24
      $region23: #{transformer.15} parent=11 // pred_region
        _
      $region24: #{transformer.15} parent=11 // pred_fallthru
        _
    $region12: #{transformer.15} parent=5 // pred_fallthru
      _
    %p214 = scmp.lt.s32.totalorder %s11, 3
    // Predicated region
    $region25: #{transformer.15} parent=5 // pred_check
      %p215 = pneg %p214
    $region26: #{transformer.15} parent=5 // pred_check_branch
      %217 = sbr.rel (%p215) target = $region28
    $region27: #{transformer.15} parent=5 // pred_region
      // Predicated region
      $region29: #{transformer.15} parent=27 // pred_check
        %p218 = pneg %p120
      $region30: #{transformer.15} parent=27 // pred_check_branch
        %220 = sbr.rel (%p218) target = $region32
      $region31: #{transformer.15} parent=27 // pred_region
        %p221 = scmp.lt.s32.totalorder %s19, 2
        %s222 = scalar_select %p221, %s19, 2
        %p223 = scmp.lt.s32.totalorder %s20, 0
        %s224 = scalar_select %p223, %s20, 0
        %s225 = smul.addr %s222, 4
        %s226 = sadd.s32 %s224, %s225
        %s227 = smul.addr %s226, 4
        %s228 = scalar_lea.vmem %s3, %s227
      $region32: #{transformer.15} parent=27 // pred_fallthru
        _
      // Predicated region
      $region33: #{transformer.15} parent=27 // pred_check
        %p229 = pneg %p148
      $region34: #{transformer.15} parent=27 // pred_check_branch
        %231 = sbr.rel (%p229) target = $region36
      $region35: #{transformer.15} parent=27 // pred_region
        %p232 = scmp.lt.s32.totalorder %s19, 2
        %s233 = scalar_select %p232, %s19, 2
        %p234 = scmp.lt.s32.totalorder %s20, 0
        %s235 = scalar_select %p234, %s20, 0
        %s236 = sadd.s32 %s235, %s233
        %s237 = scalar_lea.vmem %s4, %s236
      $region36: #{transformer.15} parent=27 // pred_fallthru
        _
    $region28: #{transformer.15} parent=5 // pred_fallthru
      _
    %p238 = scmp.le.s32.totalorder 1, %s11
    %p239 = scmp.lt.s32.totalorder %s11, 4
    %p240 = pnand %p238, %p239
    %p241 = pneg %p240
    // Predicated region
    $region37: #{transformer.15} parent=5 // pred_check
      _
    $region38: #{transformer.15} parent=5 // pred_check_branch
      %243 = sbr.rel (%p240) target = $region40
    $region39: #{transformer.15} parent=5 // pred_region
      %s244 = ssub.s32 %s11, 1
      %s245 = smul.u32 2, %s21
      %p246 = scmp.lt.s32.totalorder %s245, 1
      %s247 = scalar_select %p246, %s245, 1
      %s248 = smul.addr %s247, 8
      %s249 = scalar_lea.vmem %s0, %s248
      %p250 = pneg %p56
      %p251 = pneg %p53
      %p252 = pneg %p77
      %p253 = pneg %p74
      %p254 = pneg %p98
      %p255 = pneg %p95
      %p256 = scmp.lt.s32.totalorder %s22, 2
      %s257 = scalar_select %p256, %s22, 2
      %p258 = scmp.lt.s32.totalorder %s23, 0
      %s259 = scalar_select %p258, %s23, 0
      %s260 = smul.addr %s257, 4
      %s261 = sadd.s32 %s259, %s260
      %s262 = smul.addr %s261, 4
      %s263 = scalar_lea.vmem %s3, %s262
      %p264 = pneg %p126
      %p265 = pneg %p123
      %p266 = scmp.lt.s32.totalorder %s22, 2
      %s267 = scalar_select %p266, %s22, 2
      %p268 = scmp.lt.s32.totalorder %s23, 0
      %s269 = scalar_select %p268, %s23, 0
      %s270 = sadd.s32 %s269, %s267
      %s271 = scalar_lea.vmem %s4, %s270
      %p272 = pneg %p154
      %p273 = pneg %p151
      %p274 = pneg %p184
      %p275 = pneg %p181
      %s276 = smul.u32 2, %s21
      %p277 = scmp.lt.s32.totalorder %s22, 2
      %s278 = scalar_select %p277, %s22, 2
      %p279 = scmp.lt.s32.totalorder %s276, 1
      %s280 = scalar_select %p279, %s276, 1
      %p281 = scmp.lt.s32.totalorder %s23, 0
      %s282 = scalar_select %p281, %s23, 0
      %s283 = sadd.s32 %s282, %s280
      %s284 = smul.addr %s278, 2
      %s285 = sadd.s32 %s283, %s284
      %s286 = smul.addr %s285, 4
      %s287 = scalar_lea.vmem %s5, %s286
      %s288 = smul.u32 2, %s21
      %p289 = scmp.lt.s32.totalorder %s288, 1
      %s290 = scalar_select %p289, %s288, 1
      %s291 = smul.addr %s290, 8
      %s292 = scalar_lea.vmem %s0, %s291
      %s293 = smul.u32 2, %s21
      %p294 = scmp.lt.s32.totalorder %s22, 2
      %s295 = scalar_select %p294, %s22, 2
      %p296 = scmp.lt.s32.totalorder %s23, 0
      %s297 = scalar_select %p296, %s23, 0
      %s298 = smul.addr %s295, 4
      %s299 = sadd.s32 %s297, %s298
      %s300 = smul.addr %s299, 4
      %s301 = scalar_lea.vmem %s3, %s300
      %p302 = scmp.lt.s32.totalorder %s22, 2
      %s303 = scalar_select %p302, %s22, 2
      %p304 = scmp.lt.s32.totalorder %s23, 0
      %s305 = scalar_select %p304, %s23, 0
      %s306 = sadd.s32 %s305, %s303
      %s307 = scalar_lea.vmem %s4, %s306
      %s308 = smul.u32 2, %s21
      %p309 = scmp.lt.s32.totalorder %s22, 2
      %s310 = scalar_select %p309, %s22, 2
      %p311 = scmp.lt.s32.totalorder %s308, 1
      %s312 = scalar_select %p311, %s308, 1
      %p313 = scmp.lt.s32.totalorder %s23, 0
      %s314 = scalar_select %p313, %s23, 0
      %s315 = sadd.s32 %s314, %s312
      %s316 = smul.addr %s310, 2
      %s317 = sadd.s32 %s315, %s316
      %s318 = smul.addr %s317, 4
      %s319 = scalar_lea.vmem %s5, %s318
      %s320 = smul.u32 2, %s21
      %p322 = scmp.eq.s32.totalorder %s22, 0
      %p323 = scmp.eq.s32.totalorder %s23, 0
      %p324 = pnand %p322, %p323
      %p325 = pneg %p324
      // Predicated region
      $region41: #{transformer.15} parent=39 // pred_check
        _
      $region42: #{transformer.15} parent=39 // pred_check_branch
        %327 = sbr.rel (%p324) target = $region44
      $region43: #{transformer.15} parent=39 // pred_region
        %v328 = vld [vmem:[%s292] sm:$0xff]
        %v329 = vld [vmem:[%s292 + $0x8] sm:$0xff]
        %vm330 = vcmask 261120
        %v331 = vsel %vm330, %v328, 0.0
        %332 = vadd.xlane.f32.xlu0 %v331
        %v333 = vpop.xlane.xlu0 %332
        %v334 = vsel %vm330, %v329, 0.0
        %335 = vadd.xlane.f32.xlu0 %v334
        %v336 = vpop.xlane.xlu0 %335
        %v337 = vrcp.pop 32.0
        %v338 = vmul.f32 %v333, %v337
        %v339 = vmul.f32 %v336, %v337
        %v340 = vsub.f32 %v328, %v338
        %v341 = vsub.f32 %v329, %v339
        %v342 = vmul.f32 %v340, %v340
        %v343 = vmul.f32 %v341, %v341
        %v344 = vsel %vm330, %v342, 0.0
        %345 = vadd.xlane.f32.xlu0 %v344
        %v346 = vpop.xlane.xlu0 %345
        %v347 = vsel %vm330, %v343, 0.0
        %348 = vadd.xlane.f32.xlu0 %v347
        %v349 = vpop.xlane.xlu0 %348
        %v350 = vmul.f32 %v346, %v337
        %v351 = vmul.f32 %v349, %v337
        %v352 = vadd.f32 %v350, 1e-06
        %v353 = vadd.f32 %v351, 1e-06
        %v354 = vrsqrt.pop %v352
        %v355 = vrsqrt.pop %v353
        %v356 = vmul.f32 %v340, %v354
        %v357 = vmul.f32 %v341, %v355
        %v358 = vld [vmem:[%s1] sm:$0x1]
        %v360 = vlaneseq
        %v361 = vshrl.u32 %v360, 7
        %v362 = vsub.s32 0, %v361
        %v363 = vrot.slane %v358, %v362
        %v365 = vmul.f32 %v356, %v363
        %v366 = vmul.f32 %v357, %v363
        %v367 = vld [vmem:[%s2] sm:$0x1]
        %v369 = vlaneseq
        %v370 = vshrl.u32 %v369, 7
        %v371 = vsub.s32 0, %v370
        %v372 = vrot.slane %v367, %v371
        %v374 = vadd.f32 %v365, %v372
        %v375 = vadd.f32 %v366, %v372
        %v376 = vpack.c.bf16 %v375, %v374
        %377 = vst.msk [vmem:[#allocation2] sm:$0xff] %vm330, %v376
      $region44: #{transformer.15} parent=39 // pred_fallthru
        _
      %v378 = vld [vmem:[#allocation2] sm:$0xff]
      %v379 = vld [vmem:[%s301] sm:$0xf]
      %v380 = vld [vmem:[%s301 + $0x4] sm:$0xf]
      %v381 = vld [vmem:[%s301 + $0x8] sm:$0xf]
      %v382 = vld [vmem:[%s301 + $0xc] sm:$0xf]
      %v383 = vld [vmem:[%s307] sm:$0x1]
      %v385 = vlaneseq
      %v386 = vshrl.u32 %v385, 7
      %v387 = vsub.s32 0, %v386
      %v388 = vrot.slane %v383, %v387
      %v394 = vunpack.c.l.b16 %v379
      %v395 = vunpack.c.l.b16 %v380
      %v396 = vunpack.c.l.b16 %v381
      %v397 = vunpack.c.l.b16 %v382
      %v398 = vpack.c.b16 %v395, %v394
      %v399 = vpack.c.b16 %v397, %v396
      %vm402 = vcmask 261120
      %v404 = vsel %vm402, %v378, 0
      %406 = vmatprep.subr.bf16.mxu0 0
      %407 = vmatpush1.bf16.msra.mxu0 %v398
      %408 = vmatprep.subr.bf16.mxu0 0
      %409 = vmatpush1.bf16.msra.mxu0 %v399
      %410 = vmatprep.subr.bf16.mxu0 0
      %411 = vmatpush1.bf16.msra.mxu0 0
      %412 = vmatprep.subr.bf16.mxu0 0
      %413 = vmatpush1.bf16.msra.mxu0 0
      %414 = vmatprep.subr.bf16.mxu0 0
      %415 = vmatpush1.bf16.msra.mxu0 0
      %416 = vmatprep.subr.bf16.mxu0 0
      %417 = vmatpush1.bf16.msra.mxu0 0
      %418 = vmatprep.subr.bf16.mxu0 0
      %419 = vmatpush1.bf16.msra.mxu0 0
      %420 = vmatprep.subr.bf16.mxu0 0
      %421 = vmatpush1.bf16.msra.mxu0 0
      %422 = vmatprep.subr.bf16.mxu0 0
      %423 = vmatpush1.bf16.msra.mxu0 0
      %424 = vmatprep.subr.bf16.mxu0 0
      %425 = vmatpush1.bf16.msra.mxu0 0
      %426 = vmatprep.subr.bf16.mxu0 0
      %427 = vmatpush1.bf16.msra.mxu0 0
      %428 = vmatprep.subr.bf16.mxu0 0
      %429 = vmatpush1.bf16.msra.mxu0 0
      %430 = vmatprep.subr.bf16.mxu0 0
      %431 = vmatpush1.bf16.msra.mxu0 0
      %432 = vmatprep.subr.bf16.mxu0 0
      %433 = vmatpush1.bf16.msra.mxu0 0
      %434 = vmatprep.subr.bf16.mxu0 0
      %435 = vmatpush1.bf16.msra.mxu0 0
      %436 = vmatprep.subr.bf16.mxu0 0
      %437 = vmatpush1.bf16.msra.mxu0 0
      %438 = vmatprep.mubr.bf16.mxu0 0
      %439 = vmatmul.mubr.bf16.gmra.mrb[0].mxu0 %v404
      %v440 = vpop.f32.mrb[0].mxu0
      %v441 = vadd.f32 %v388, %v440
      %v442 = vpop.f32.mrb[0].mxu0
      %v443 = vpop.f32.mrb[0].mxu0
      %v444 = vadd.f32 %v388, %v443
      %v445 = vpop.f32.mrb[0].mxu0
      %446 = vdwg.mxu0
      %v447 = vpack.c.bf16 %v444, %v441
      %v449 = vunpack.c.l.b16 %v447
      %v450 = vunpack.c.h.b16 %v447
      %v451 = vpack.c.b16 %v449, %v449
      %v452 = vpack.c.b16 %v450, %v450
      %vm455 = vcmask 257024
      %456 = vst.msk [vmem:[%s319] sm:$0xf] %vm455, %v451
      %457 = vst.msk [vmem:[%s319 + $0x4] sm:$0xf] %vm455, %v452
      %s458 = smul.u32 2, %s21
      %p459 = scmp.lt.s32.totalorder %s22, 2
      %s460 = scalar_select %p459, %s22, 2
      %p461 = scmp.lt.s32.totalorder %s458, 1
      %s462 = scalar_select %p461, %s458, 1
      %p463 = scmp.lt.s32.totalorder %s23, 0
      %s464 = scalar_select %p463, %s23, 0
      %s465 = sadd.s32 %s464, %s462
      %s466 = smul.addr %s460, 2
      %s467 = sadd.s32 %s465, %s466
      %s468 = smul.addr %s467, 4
      %s469 = scalar_lea.vmem %s5, %s468
      // Predicated region
      $region45: #{transformer.15} parent=39 // pred_check
        %p470 = pneg %p181
      $region46: #{transformer.15} parent=39 // pred_check_branch
        %472 = sbr.rel (%p470) target = $region48
      $region47: #{transformer.15} parent=39 // pred_region
        %s473 = smul.u32 2, %s21
      $region48: #{transformer.15} parent=39 // pred_fallthru
        _
    $region40: #{transformer.15} parent=5 // pred_fallthru
      _
    %p474 = scmp.le.s32.totalorder 2, %s11
    // Predicated region
    $region49: #{transformer.15} parent=5 // pred_check
      %p475 = pneg %p474
    $region50: #{transformer.15} parent=5 // pred_check_branch
      %477 = sbr.rel (%p475) target = $region52
    $region51: #{transformer.15} parent=5 // pred_region
      %s478 = ssub.s32 %s11, 2
      // Predicated region
      $region53: #{transformer.15} parent=51 // pred_check
        %p479 = pneg %p187
      $region54: #{transformer.15} parent=51 // pred_check_branch
        %481 = sbr.rel (%p479) target = $region56
      $region55: #{transformer.15} parent=51 // pred_region
        %s482 = smul.u32 2, %s24
        %p483 = scmp.lt.s32.totalorder %s25, 2
        %s484 = scalar_select %p483, %s25, 2
        %p485 = scmp.lt.s32.totalorder %s482, 1
        %s486 = scalar_select %p485, %s482, 1
        %p487 = scmp.lt.s32.totalorder %s26, 0
        %s488 = scalar_select %p487, %s26, 0
        %s489 = sadd.s32 %s488, %s486
        %s490 = smul.addr %s484, 2
        %s491 = sadd.s32 %s489, %s490
        %s492 = smul.addr %s491, 4
        %s493 = scalar_lea.vmem %s5, %s492
      $region56: #{transformer.15} parent=51 // pred_fallthru
        _
    $region52: #{transformer.15} parent=5 // pred_fallthru
      _
  $region6: #{transformer.15} parent=0 // loop_footer
    %s15 = sadd.s32 1, %s11
  $region7: #{transformer.15} parent=0 // loop_footer_branch
    %10 = sbr.rel target = $region3
  $region8: #{transformer.15} parent=0 // loop_exit
    _

// kernel: transformer.19
$region0: #{transformer.19}
  #allocation0 [shape = 'u32[]', space=smem, size = 0x4, offset = 0x4, fixed_abs, tag = 'smem constant byte address 0x4 - core index']
  #allocation1 [shape = 'u32[144,128]{1,0:T(1,128)}', space=vmem, size = 0x12000, scoped, tag = 'internal scratch']
  %s0 = inlined_call_operand.vmem [shape: bf16[16,128], index: 0, kind: input, shape index: {}]
  %s1 = inlined_call_operand.vmem [shape: bf16[128,32], index: 1, kind: input, shape index: {}]
  %s2 = inlined_call_operand.vmem [shape: f32[1,32], index: 2, kind: input, shape index: {}]
  %s3 = inlined_call_operand.vmem [shape: f32[16,32], index: 3, kind: input, shape index: {}]
  %s4 = inlined_call_operand.hbm [shape: f32[16,32], index: 4, kind: output, shape index: {}]
  %s5 = sld [smem:[#allocation0]]
  $region34: #{transformer.19} parent=0
    _
  %s7 = ssub.s32 1, %s5
  %s8 = scalar_select 0, %s7, %s5
  $region1: #{transformer.19} parent=0
    #allocation2 [shape = 'u8[8192]{0}', space=vmem, size = 0x2000, scoped, tag = 'output window, operand 0, single buffered']
    #allocation3 [shape = 's32[1]{0}', space=sflag, size = 0x4, scoped, tag = 'scoped memory for transformer.19']
    %9 = vsyncpa [#allocation3], 0
    // Predicated region
    $region2: #{transformer.19} parent=1 // pred_check
      _
    $region3: #{transformer.19} parent=1 // pred_check_branch
      %11 = sbr.rel (0) target = $region5
    $region4: #{transformer.19} parent=1 // pred_region
      _
    $region5: #{transformer.19} parent=1 // pred_fallthru
      _
    // Predicated region
    $region6: #{transformer.19} parent=1 // pred_check
      _
    $region7: #{transformer.19} parent=1 // pred_check_branch
      %13 = sbr.rel (0) target = $region9
    $region8: #{transformer.19} parent=1 // pred_region
      _
    $region9: #{transformer.19} parent=1 // pred_fallthru
      _
    // Predicated region
    $region10: #{transformer.19} parent=1 // pred_check
      _
    $region11: #{transformer.19} parent=1 // pred_check_branch
      %15 = sbr.rel (0) target = $region13
    $region12: #{transformer.19} parent=1 // pred_region
      _
    $region13: #{transformer.19} parent=1 // pred_fallthru
      _
    // Predicated region
    $region14: #{transformer.19} parent=1 // pred_check
      _
    $region15: #{transformer.19} parent=1 // pred_check_branch
      %17 = sbr.rel (0) target = $region17
    $region16: #{transformer.19} parent=1 // pred_region
      _
    $region17: #{transformer.19} parent=1 // pred_fallthru
      _
    %p19 = scmp.eq.s32.totalorder 0, 0
    // Predicated region
    $region18: #{transformer.19} parent=1 // pred_check
      %p20 = pneg %p19
    $region19: #{transformer.19} parent=1 // pred_check_branch
      %22 = sbr.rel (%p20) target = $region21
    $region20: #{transformer.19} parent=1 // pred_region
      %vm23 = vcmask 261120
      %24 = vst.msk [vmem:[#allocation2] sm:$0xff] %vm23, 0.0
      %25 = vst.msk [vmem:[#allocation2 + $0x8] sm:$0xff] %vm23, 0.0
    $region21: #{transformer.19} parent=1 // pred_fallthru
      _
    %v26 = vld [vmem:[#allocation2] sm:$0xff]
    %v27 = vld [vmem:[#allocation2 + $0x8] sm:$0xff]
    %v28 = vld [vmem:[%s0] sm:$0xf]
    %v29 = vld [vmem:[%s0 + $0x4] sm:$0xf]
    %v30 = vld [vmem:[%s1] sm:$0xf]
    %v31 = vld [vmem:[%s1 + $0x4] sm:$0xf]
    %v32 = vld [vmem:[%s1 + $0x8] sm:$0xf]
    %v33 = vld [vmem:[%s1 + $0xc] sm:$0xf]
    %v34 = vld [vmem:[%s1 + $0x10] sm:$0xf]
    %v35 = vld [vmem:[%s1 + $0x14] sm:$0xf]
    %v36 = vld [vmem:[%s1 + $0x18] sm:$0xf]
    %v37 = vld [vmem:[%s1 + $0x1c] sm:$0xf]
    %v38 = vld [vmem:[%s1 + $0x20] sm:$0xf]
    %v39 = vld [vmem:[%s1 + $0x24] sm:$0xf]
    %v40 = vld [vmem:[%s1 + $0x28] sm:$0xf]
    %v41 = vld [vmem:[%s1 + $0x2c] sm:$0xf]
    %v42 = vld [vmem:[%s1 + $0x30] sm:$0xf]
    %v43 = vld [vmem:[%s1 + $0x34] sm:$0xf]
    %v44 = vld [vmem:[%s1 + $0x38] sm:$0xf]
    %v45 = vld [vmem:[%s1 + $0x3c] sm:$0xf]
    %v48 = vunpack.c.l.b16 %v28
    %v49 = vunpack.c.l.b16 %v29
    %v50 = vpack.c.b16 %v49, %v48
    %v68 = vunpack.c.l.b16 %v30
    %v69 = vunpack.c.l.b16 %v31
    %v70 = vunpack.c.l.b16 %v32
    %v71 = vunpack.c.l.b16 %v33
    %v72 = vunpack.c.l.b16 %v34
    %v73 = vunpack.c.l.b16 %v35
    %v74 = vunpack.c.l.b16 %v36
    %v75 = vunpack.c.l.b16 %v37
    %v76 = vunpack.c.l.b16 %v38
    %v77 = vunpack.c.l.b16 %v39
    %v78 = vunpack.c.l.b16 %v40
    %v79 = vunpack.c.l.b16 %v41
    %v80 = vunpack.c.l.b16 %v42
    %v81 = vunpack.c.l.b16 %v43
    %v82 = vunpack.c.l.b16 %v44
    %v83 = vunpack.c.l.b16 %v45
    %v84 = vpack.c.b16 %v69, %v68
    %v85 = vpack.c.b16 %v71, %v70
    %v86 = vpack.c.b16 %v73, %v72
    %v87 = vpack.c.b16 %v75, %v74
    %v88 = vpack.c.b16 %v77, %v76
    %v89 = vpack.c.b16 %v79, %v78
    %v90 = vpack.c.b16 %v81, %v80
    %v91 = vpack.c.b16 %v83, %v82
    %100 = vmatprep.subr.bf16.mxu0 0
    %101 = vmatpush1.bf16.msra.mxu0 %v84
    %102 = vmatprep.subr.bf16.mxu0 0
    %103 = vmatpush1.bf16.msra.mxu0 %v85
    %104 = vmatprep.subr.bf16.mxu0 0
    %105 = vmatpush1.bf16.msra.mxu0 %v86
    %106 = vmatprep.subr.bf16.mxu0 0
    %107 = vmatpush1.bf16.msra.mxu0 %v87
    %108 = vmatprep.subr.bf16.mxu0 0
    %109 = vmatpush1.bf16.msra.mxu0 %v88
    %110 = vmatprep.subr.bf16.mxu0 0
    %111 = vmatpush1.bf16.msra.mxu0 %v89
    %112 = vmatprep.subr.bf16.mxu0 0
    %113 = vmatpush1.bf16.msra.mxu0 %v90
    %114 = vmatprep.subr.bf16.mxu0 0
    %115 = vmatpush1.bf16.msra.mxu0 %v91
    %116 = vmatprep.subr.bf16.mxu0 0
    %117 = vmatpush1.bf16.msra.mxu0 0
    %118 = vmatprep.subr.bf16.mxu0 0
    %119 = vmatpush1.bf16.msra.mxu0 0
    %120 = vmatprep.subr.bf16.mxu0 0
    %121 = vmatpush1.bf16.msra.mxu0 0
    %122 = vmatprep.subr.bf16.mxu0 0
    %123 = vmatpush1.bf16.msra.mxu0 0
    %124 = vmatprep.subr.bf16.mxu0 0
    %125 = vmatpush1.bf16.msra.mxu0 0
    %126 = vmatprep.subr.bf16.mxu0 0
    %127 = vmatpush1.bf16.msra.mxu0 0
    %128 = vmatprep.subr.bf16.mxu0 0
    %129 = vmatpush1.bf16.msra.mxu0 0
    %130 = vmatprep.subr.bf16.mxu0 0
    %131 = vmatpush1.bf16.msra.mxu0 0
    %132 = vmatprep.mubr.bf16.mxu0 0
    %133 = vmatmul.mubr.bf16.gmra.mrb[0].mxu0 %v50
    %v134 = vpop.f32.mrb[0].mxu0
    %v135 = vadd.f32 0.0, %v134
    %v136 = vpop.f32.mrb[0].mxu0
    %v137 = vpop.f32.mrb[0].mxu0
    %v138 = vadd.f32 0.0, %v137
    %v139 = vpop.f32.mrb[0].mxu0
    %140 = vdwg.mxu0
    %v141 = vadd.f32 %v26, %v135
    %v142 = vadd.f32 %v27, %v138
    %vm143 = vcmask 261120
    %144 = vst.msk [vmem:[#allocation2] sm:$0xff] %vm143, %v141
    %145 = vst.msk [vmem:[#allocation2 + $0x8] sm:$0xff] %vm143, %v142
    // Predicated region
    $region22: #{transformer.19} parent=1 // pred_check
      %p146 = pneg %p19
    $region23: #{transformer.19} parent=1 // pred_check_branch
      %148 = sbr.rel (%p146) target = $region25
    $region24: #{transformer.19} parent=1 // pred_region
      %v149 = vld [vmem:[#allocation2] sm:$0xff]
      %v150 = vld [vmem:[#allocation2 + $0x8] sm:$0xff]
      %v151 = vld [vmem:[%s2] sm:$0x1]
      %v152 = vld [vmem:[%s3] sm:$0xff]
      %v153 = vld [vmem:[%s3 + $0x8] sm:$0xff]
      %v155 = vlaneseq
      %v156 = vshrl.u32 %v155, 7
      %v157 = vsub.s32 0, %v156
      %v158 = vrot.slane %v151, %v157
      %v160 = vadd.f32 %v158, %v152
      %v161 = vadd.f32 %v158, %v153
      %v162 = vadd.f32 %v149, %v160
      %v163 = vadd.f32 %v150, %v161
      %164 = vst.msk [vmem:[#allocation2] sm:$0xff] %vm143, %v162
      %165 = vst.msk [vmem:[#allocation2 + $0x8] sm:$0xff] %vm143, %v163
    $region25: #{transformer.19} parent=1 // pred_fallthru
      _
    // Predicated region
    $region26: #{transformer.19} parent=1 // pred_check
      _
    $region27: #{transformer.19} parent=1 // pred_check_branch
      %167 = sbr.rel (0) target = $region29
    $region28: #{transformer.19} parent=1 // pred_region
      %s169 = ssub.s32 256, 256
      %170 = vsyncadd [#allocation3], %s169
      %s171 = sshll.u32 [#allocation2], 4
      %s172 = int_to_ptr.vmem [resolvable:$true] %s171
      %177 = dma.vmem_to_hbm [thread:$0]  %s172, 256, %s4, [#allocation3], 128, 128, 8
    $region29: #{transformer.19} parent=1 // pred_fallthru
      _
    // Predicated region
    $region30: #{transformer.19} parent=1 // pred_check
      _
    $region31: #{transformer.19} parent=1 // pred_check_branch
      %179 = sbr.rel (0) target = $region33
    $region32: #{transformer.19} parent=1 // pred_region
      %180 = dma.done [#allocation3], 256
    $region33: #{transformer.19} parent=1 // pred_fallthru
      _
    %181 = vsyncpa [#allocation3], 1

</llo_original>
